<compile_context>
chip_gen: v6e
topology: v6e:2x2x1
jax: 0.10.0
libtpu: 0.0.40
codegen_flags: <defaults>
</compile_context>

<pallas_src>
import math
from functools import partial

import jax
import jax.numpy as jnp
from jax.experimental import pallas as pl
from jax.experimental.pallas import tpu as pltpu

_EPS = 1e-5
_INV_SQRT2 = 1.0 / math.sqrt(2.0)
_LEAKY_SLOPE = 0.01


# --------------------------------------------------------------------------- #
# in-kernel math helpers
# --------------------------------------------------------------------------- #
def _erf(x):
    # Abramowitz & Stegun 7.1.26 minimax polynomial (|err| < 1.5e-7).
    ax = jnp.abs(x)
    t = 1.0 / (1.0 + 0.3275911 * ax)
    poly = ((((1.061405429 * t - 1.453152027) * t + 1.421413741) * t
             - 0.284496736) * t + 0.254829592) * t
    y = 1.0 - poly * jnp.exp(-ax * ax)
    return jnp.where(x >= 0.0, y, -y)


def _gelu(x):
    # exact GELU (nn.GELU() default, approximate='none')
    return 0.5 * x * (1.0 + _erf(x * _INV_SQRT2))


def _layer_norm(v, g, b):
    # nn.LayerNorm([C, H, W]): per-sample mean/var over the whole (C, P) tile, biased var.
    m = jnp.mean(v)
    var = jnp.mean((v - m) ** 2)
    return (v - m) * jax.lax.rsqrt(var + _EPS) * g + b


# --------------------------------------------------------------------------- #
# Pallas kernels
# --------------------------------------------------------------------------- #
def _down_stats_kernel(yp_ref, wd_ref, sum_ref, sq_ref):
    """BatchNorm pass 1: per-channel sum/sumsq of conv1x1(maxpool(y)) over (N, H, W)."""
    @pl.when(pl.program_id(0) == 0)
    def _():
        sum_ref[...] = jnp.zeros_like(sum_ref)
        sq_ref[...] = jnp.zeros_like(sq_ref)

    t = jnp.dot(wd_ref[...], yp_ref[...], preferred_element_type=jnp.float32)   # (C, P)
    sum_ref[...] += jnp.sum(t, axis=1, keepdims=True)
    sq_ref[...] += jnp.sum(t * t, axis=1, keepdims=True)


def _cgb_kernel(x_ref, yp_ref, wd_ref, bns_ref, bnb_ref,
                lng_ref, lnb_ref, cw_ref, cb_ref,
                hlng_ref, hlnb_ref, hwin_ref, hbin_ref,
                hmu_ref, hmv_ref, hbu_ref, hbv_ref,
                hwu_ref, hwv_ref, hbo_ref, o_ref):
    """Per-sample fused CGB: down finish + shared LN/Conv/GELU + 2x HiT + gated combine."""
    c = cw_ref.shape[0]
    cw = cw_ref[...]                         # (C, C) shared 1x1 conv weight
    cb = cb_ref[...]                         # (C, 1) shared 1x1 conv bias
    lng = lng_ref[...]                       # (C, P) shared LN affine
    lnb = lnb_ref[...]

    # --- Down_sample_conv finish: conv (bias cancelled by BN) + BatchNorm + LeakyReLU ---
    t = jnp.dot(wd_ref[...], yp_ref[...], preferred_element_type=jnp.float32)   # (C, P)
    y = t * bns_ref[...] + bnb_ref[...]
    y = jnp.where(y >= 0.0, y, _LEAKY_SLOPE * y)                 # shortcut_y   (C, P)
    x = x_ref[...]                                               # shortcut_x   (C, P)

    # --- shared LN + 1x1 Conv + exact GELU (same LN / Conv module for both branches) ---
    def conv_gelu(v):
        vn = _layer_norm(v, lng, lnb)
        return _gelu(jnp.dot(cw, vn, preferred_element_type=jnp.float32) + cb)

    xa = conv_gelu(x)
    ya = conv_gelu(y)

    # --- HiT (GWX = branch 0, GWY = branch 1), fully fused ---
    def hit(v, i):
        vn = _layer_norm(v, hlng_ref[i], hlnb_ref[i])
        h = jnp.dot(hwin_ref[i], vn, preferred_element_type=jnp.float32) + hbin_ref[i]
        h = _gelu(h)                                             # (2C, P)
        u, vv = h[:c], h[c:]
        # grid mixing as lane-dense (C,P)@(P,P) matmuls (pre-expanded linear_transpose)
        mu = jnp.dot(u, hmu_ref[i], preferred_element_type=jnp.float32) + hbu_ref[i]
        mv = jnp.dot(vv, hmv_ref[i], preferred_element_type=jnp.float32) + hbv_ref[i]
        # Linear(2C -> C) with the weight split into u / v halves (no concat)
        return (jnp.dot(hwu_ref[i], mu, preferred_element_type=jnp.float32)
                + jnp.dot(hwv_ref[i], mv, preferred_element_type=jnp.float32)
                + hbo_ref[i])

    gx = hit(xa, 0)
    gy = hit(ya, 1)

    # --- gated combine: Conv(xa*gy) + Conv(ya*gx) + sx + sy (same Conv -> one matmul) ---
    z = xa * gy + ya * gx
    o_ref[...] = (jnp.dot(cw, z, preferred_element_type=jnp.float32)
                  + 2.0 * cb + x + y)


# --------------------------------------------------------------------------- #
# kernel wrappers
# --------------------------------------------------------------------------- #
def _const_spec(shape):
    nd = len(shape)
    return pl.BlockSpec(shape, lambda n, nd=nd: (0,) * nd)


def down_stats(yp, wd):
    N, FC, P = yp.shape
    C = wd.shape[0]
    return pl.pallas_call(
        _down_stats_kernel,
        out_shape=(jax.ShapeDtypeStruct((C, 1), jnp.float32),
                   jax.ShapeDtypeStruct((C, 1), jnp.float32)),
        grid=(N,),
        in_specs=[
            pl.BlockSpec((None, FC, P), lambda n: (n, 0, 0)),
            _const_spec((C, FC)),
        ],
        out_specs=(pl.BlockSpec((C, 1), lambda n: (0, 0)),
                   pl.BlockSpec((C, 1), lambda n: (0, 0))),
        compiler_params=pltpu.CompilerParams(dimension_semantics=("arbitrary",)),
    )(yp, wd)


def cgb_fused(x, yp, bn_scale, bn_shift, p):
    N, C, P = x.shape
    FC = yp.shape[1]
    return pl.pallas_call(
        _cgb_kernel,
        out_shape=jax.ShapeDtypeStruct((N, C, P), jnp.float32),
        grid=(N,),
        in_specs=[
            pl.BlockSpec((None, C, P), lambda n: (n, 0, 0)),     # x (shortcut + branch input)
            pl.BlockSpec((None, FC, P), lambda n: (n, 0, 0)),    # pooled y
            _const_spec((C, FC)),                                # down conv weight
            _const_spec((C, 1)),                                 # folded BN scale
            _const_spec((C, 1)),                                 # folded BN shift
            _const_spec((C, P)),                                 # CGB LN gamma
            _const_spec((C, P)),                                 # CGB LN beta
            _const_spec((C, C)),                                 # shared conv weight
            _const_spec((C, 1)),                                 # shared conv bias
            _const_spec((2, C, P)),                              # HiT LN gamma
            _const_spec((2, C, P)),                              # HiT LN beta
            _const_spec((2, 2 * C, C)),                          # HiT Linear_in weight
            _const_spec((2, 2 * C, 1)),                          # HiT Linear_in bias
            _const_spec((2, P, P)),                              # HiT mix matrix (u branch)
            _const_spec((2, P, P)),                              # HiT mix matrix (v branch)
            _const_spec((2, 1, P)),                              # HiT mix bias (u)
            _const_spec((2, 1, P)),                              # HiT mix bias (v)
            _const_spec((2, C, C)),                              # HiT Linear_out (u half)
            _const_spec((2, C, C)),                              # HiT Linear_out (v half)
            _const_spec((2, C, 1)),                              # HiT Linear_out bias
        ],
        out_specs=pl.BlockSpec((None, C, P), lambda n: (n, 0, 0)),
        compiler_params=pltpu.CompilerParams(
            dimension_semantics=("parallel",),
            vmem_limit_bytes=32 * 1024 * 1024),                  # explicit headroom (v5e/v7x)
    )(x, yp, p["down_w"], bn_scale, bn_shift,
      p["ln_g"], p["ln_b"], p["conv_w"], p["conv_b"],
      p["hit_ln_g"], p["hit_ln_b"], p["hit_w_in"], p["hit_b_in"],
      p["hit_mu"], p["hit_mv"], p["hit_bu"], p["hit_bv"],
      p["hit_w_out_u"], p["hit_w_out_v"], p["hit_b_out"])


# --------------------------------------------------------------------------- #
# CGB forward
# --------------------------------------------------------------------------- #
def cgb_forward(x_nchw, y_nchw, params, grid_size):
    assert grid_size[0] == grid_size[1], "linear_transpose requires a square grid"
    N, C, H, W = x_nchw.shape
    P = H * W
    x = x_nchw.reshape(N, C, P).astype(jnp.float32)

    # MaxPool2d(2) as one fused XLA reduce (see TODO at top of file).
    y0 = y_nchw.astype(jnp.float32)
    FC = y0.shape[1]
    yp = jnp.max(y0.reshape(N, FC, H, 2, W, 2), axis=(3, 5)).reshape(N, FC, P)

    # BatchNorm2d training-mode batch stats over (N, H, W); biased variance.
    ssum, ssq = down_stats(yp, params["down_w"])
    cnt = float(N * P)
    mean = ssum / cnt
    var = jnp.maximum(ssq / cnt - mean * mean, 0.0)
    bn_scale = params["bn_g"] * jax.lax.rsqrt(var + _EPS)
    bn_shift = params["bn_b"] - mean * bn_scale

    out = cgb_fused(x, yp, bn_scale, bn_shift, params)
    return out.reshape(N, C, H, W)


# --------------------------------------------------------------------------- #
# deterministic synthetic parameters + one-time kernel-friendly preprocessing
# --------------------------------------------------------------------------- #
def init_params(key, first_c, c, feat, grid_size):
    keys = list(jax.random.split(key, 24))
    it = iter(keys)

    def nrm(shape, scale=0.1):
        return (scale * jax.random.normal(next(it), shape)).astype(jnp.float32)

    g2 = grid_size[1] * grid_size[1]
    P = feat * feat
    return dict(
        # Down_sample_conv (1x1 conv; its bias is omitted - exactly cancelled by BatchNorm)
        down_w=nrm((c, first_c)),
        bn_g=1.0 + nrm((c, 1)),
        bn_b=nrm((c, 1)),
        # CGB shared LayerNorm([C, H, W]) affine stored as (C, H*W) + shared 1x1 Conv
        ln_g=1.0 + nrm((c, P)),
        ln_b=nrm((c, P)),
        conv_w=nrm((c, c)),
        conv_b=nrm((c, 1)),
        # HiT params, GWX stacked with GWY along the leading size-2 axis (PyTorch (out, in))
        hit_ln_g=1.0 + nrm((2, c, P)),
        hit_ln_b=nrm((2, c, P)),
        hit_w_in=nrm((2, 2 * c, c)),
        hit_b_in=nrm((2, 2 * c, 1)),
        hit_w_t=nrm((2, g2, g2)),
        hit_b_t=nrm((2, g2)),
        hit_w_out=nrm((2, c, 2 * c)),
        hit_b_out=nrm((2, c, 1)),
    )


def prepare_params(params, feat, grid_size):
    """One-time (outside jit) derivation of kernel-friendly parameter forms:
       split Linear_out into u/v halves and expand the (g^2, g^2) linear_transpose weight
       into (P, P) pixel-mixing matrices acting directly on the native (C, H*W) layout."""
    H = W = feat
    g = grid_size[0]
    P = H * W
    p_idx = jnp.arange(P)
    h, w = p_idx // W, p_idx % W
    fh, fw = H // g, W // g
    gid = (h // fh) * g + (w // fw)        # u branch: coarse-grid cell id (mixed axis)
    oid = (h % fh) * fw + (w % fw)         # u branch: in-cell offset      (kept fixed)
    blk = (h // g) * (W // g) + (w // g)   # v branch: g x g block id      (kept fixed)
    off = (h % g) * g + (w % g)            # v branch: in-block offset     (mixed axis)

    def expand(w_t, b_t):
        mu = w_t[gid[None, :], gid[:, None]] * (oid[:, None] == oid[None, :]).astype(w_t.dtype)
        mv = w_t[off[None, :], off[:, None]] * (blk[:, None] == blk[None, :]).astype(w_t.dtype)
        return mu, mv, b_t[gid][None, :], b_t[off][None, :]

    mus, mvs, bus, bvs = [], [], [], []
    for i in range(2):
        mu, mv, bu, bv = expand(params["hit_w_t"][i], params["hit_b_t"][i])
        mus.append(mu); mvs.append(mv); bus.append(bu); bvs.append(bv)

    c = params["hit_w_out"].shape[1]
    out = dict(params)
    out["hit_mu"] = jnp.stack(mus)
    out["hit_mv"] = jnp.stack(mvs)
    out["hit_bu"] = jnp.stack(bus)
    out["hit_bv"] = jnp.stack(bvs)
    out["hit_w_out_u"] = params["hit_w_out"][:, :, :c]
    out["hit_w_out_v"] = params["hit_w_out"][:, :, c:]
    return out


# --------------------------------------------------------------------------- #
# pure-JAX reference (literal translation of the PyTorch module) for validation
# --------------------------------------------------------------------------- #
def _gelu_exact(x):
    return 0.5 * x * (1.0 + jax.scipy.special.erf(x * _INV_SQRT2))


def _ref_layernorm(x_nchw, g_cp, b_cp):
    N, C, H, W = x_nchw.shape
    xf = x_nchw.reshape(N, -1)
    m = xf.mean(axis=1, keepdims=True)
    v = ((xf - m) ** 2).mean(axis=1, keepdims=True)
    xn = ((xf - m) / jnp.sqrt(v + _EPS)).reshape(N, C, H, W)
    return xn * g_cp.reshape(1, C, H, W) + b_cp.reshape(1, C, H, W)


def _ref_conv1x1(x_nchw, w, b=None):
    out = jnp.einsum("oc,nchw->nohw", w, x_nchw)
    if b is not None:
        out = out + b.reshape(1, -1, 1, 1)
    return out


def _ref_hit(x_nchw, i, params, g):
    N, C, H, W = x_nchw.shape
    xn = _ref_layernorm(x_nchw, params["hit_ln_g"][i], params["hit_ln_b"][i])
    xl = jnp.transpose(xn, (0, 2, 3, 1))
    t = _gelu_exact(xl @ params["hit_w_in"][i].T + params["hit_b_in"][i].reshape(-1))
    u, v = t[..., :C], t[..., C:]
    w_t, b_t = params["hit_w_t"][i], params["hit_b_t"][i]
    fh, fw = H // g, W // g
    # u branch: mix the coarse (g x g) grid axis
    ub = u.reshape(N, g, fh, g, fw, C).transpose(0, 1, 3, 2, 4, 5).reshape(N, g * g, fh * fw, C)
    ub = jnp.swapaxes(ub, -1, -3)
    ub = ub @ w_t.T + b_t
    ub = jnp.swapaxes(ub, -1, -3)
    u2 = ub.reshape(N, g, g, fh, fw, C).transpose(0, 1, 3, 2, 4, 5).reshape(N, H, W, C)
    # v branch: mix the in-block (g x g) offset axis
    bh, bw = H // g, W // g
    vb = v.reshape(N, bh, g, bw, g, C).transpose(0, 1, 3, 2, 4, 5).reshape(N, bh * bw, g * g, C)
    vb = jnp.swapaxes(vb, -1, -2)
    vb = vb @ w_t.T + b_t
    vb = jnp.swapaxes(vb, -1, -2)
    v2 = vb.reshape(N, bh, bw, g, g, C).transpose(0, 1, 3, 2, 4, 5).reshape(N, H, W, C)
    cat = jnp.concatenate([u2, v2], axis=-1)
    out = cat @ params["hit_w_out"][i].T + params["hit_b_out"][i].reshape(-1)
    return jnp.transpose(out, (0, 3, 1, 2))


def cgb_reference(x_nchw, y_nchw, params, grid_size):
    g = grid_size[0]
    N, C, H, W = x_nchw.shape
    FC = y_nchw.shape[1]
    yp = jnp.max(y_nchw.reshape(N, FC, H, 2, W, 2), axis=(3, 5))
    t = _ref_conv1x1(yp, params["down_w"])
    m = t.mean(axis=(0, 2, 3), keepdims=True)
    v = ((t - m) ** 2).mean(axis=(0, 2, 3), keepdims=True)
    tn = (t - m) / jnp.sqrt(v + _EPS)
    tn = tn * params["bn_g"].reshape(1, C, 1, 1) + params["bn_b"].reshape(1, C, 1, 1)
    y = jnp.where(tn >= 0.0, tn, _LEAKY_SLOPE * tn)

    shortcut_x, shortcut_y = x_nchw, y

    def conv_gelu(v_):
        vn = _ref_layernorm(v_, params["ln_g"], params["ln_b"])
        return _gelu_exact(_ref_conv1x1(vn, params["conv_w"], params["conv_b"]))

    xa = conv_gelu(x_nchw)
    ya = conv_gelu(y)
    gx = _ref_hit(xa, 0, params, g)
    gy = _ref_hit(ya, 1, params, g)
    yb = _ref_conv1x1(ya * gx, params["conv_w"], params["conv_b"]) + shortcut_y
    xb = _ref_conv1x1(xa * gy, params["conv_w"], params["conv_b"]) + yb + shortcut_x
    return xb


# --------------------------------------------------------------------------- #
if __name__ == "__main__":
    key = jax.random.PRNGKey(0)
    kx, ky, kp = jax.random.split(key, 3)

    N, FIRST_C, C, F = 2, 4, 8, 16            # x: (2, 8, 16, 16), y: (2, 4, 32, 32)
    GRID = (4, 4)                             # square grid (linear_transpose requirement)

    x = jax.random.normal(kx, (N, C, F, F), dtype=jnp.float32)
    y = jax.random.normal(ky, (N, FIRST_C, 2 * F, 2 * F), dtype=jnp.float32)
    params = prepare_params(init_params(kp, FIRST_C, C, F, GRID), F, GRID)

    fwd = jax.jit(partial(cgb_forward, grid_size=GRID))
    out = jax.block_until_ready(fwd(x, y, params))
    assert out.shape == (N, C, F, F) and out.dtype == jnp.float32
    assert bool(jnp.all(jnp.isfinite(out)))

    ref = cgb_reference(x, y, params, GRID)
    err = float(jnp.max(jnp.abs(out - ref)))
    assert err < 1e-2, f"mismatch vs pure-JAX reference: max |err| = {err}"
    print("KERNEL_OK")
</pallas_src>

<mosaic_0001>
module attributes {stable_mosaic.version = 11 : i64} {
  func.func @_down_stats_kernel(%arg0: i32, %arg1: memref<1x4x256xf32, #tpu.memory_space<vmem>>, %arg2: memref<8x4xf32, #tpu.memory_space<vmem>>, %arg3: memref<8x1xf32, #tpu.memory_space<vmem>>, %arg4: memref<8x1xf32, #tpu.memory_space<vmem>>) attributes {dimension_semantics = [#tpu.dimension_semantics<arbitrary>], iteration_bounds = array<i64: 2>, scalar_prefetch = 0 : i64, scratch_operands = 0 : i64, tpu.core_type = #tpu.core_type<tc>, window_params = [{transform_indices = @transform_0, window_bounds = array<i64: 1, 4, 256>}, {pipeline_mode = #tpu.pipeline_mode<synchronous>, transform_indices = @transform_1, window_bounds = array<i64: 8, 4>}, {pipeline_mode = #tpu.pipeline_mode<synchronous>, transform_indices = @transform_2, window_bounds = array<i64: 8, 1>}, {pipeline_mode = #tpu.pipeline_mode<synchronous>, transform_indices = @transform_3, window_bounds = array<i64: 8, 1>}]} {
    %c0_i32 = arith.constant 0 : i32
    %0 = arith.cmpi eq, %arg0, %c0_i32 : i32
    %1 = arith.extui %0 : i1 to i32
    %c0_i32_0 = arith.constant 0 : i32
    %2 = arith.cmpi ne, %1, %c0_i32_0 : i32
    scf.if %2 {
      %cst_15 = arith.constant 0.000000e+00 : f32
      %18 = vector.broadcast %cst_15 : f32 to vector<8x1xf32>
      %c0_16 = arith.constant 0 : index
      %c0_17 = arith.constant 0 : index
      %19 = vector.load %arg3[%c0_16, %c0_17] : memref<8x1xf32, #tpu.memory_space<vmem>>, vector<8x1xf32>
      tpu.vector_store %arg3[%c0_16, %c0_17], %18 {strides = array<i32>} : memref<8x1xf32, #tpu.memory_space<vmem>>, vector<8x1xf32>,
      %cst_18 = arith.constant 0.000000e+00 : f32
      %20 = vector.broadcast %cst_18 : f32 to vector<8x1xf32>
      %c0_19 = arith.constant 0 : index
      %c0_20 = arith.constant 0 : index
      %21 = vector.load %arg4[%c0_19, %c0_20] : memref<8x1xf32, #tpu.memory_space<vmem>>, vector<8x1xf32>
      tpu.vector_store %arg4[%c0_19, %c0_20], %20 {strides = array<i32>} : memref<8x1xf32, #tpu.memory_space<vmem>>, vector<8x1xf32>,
    } else {
    }
    %c0 = arith.constant 0 : index
    %c0_1 = arith.constant 0 : index
    %3 = vector.load %arg2[%c0, %c0_1] : memref<8x4xf32, #tpu.memory_space<vmem>>, vector<8x4xf32>
    %c0_2 = arith.constant 0 : index
    %c0_3 = arith.constant 0 : index
    %c0_4 = arith.constant 0 : index
    %4 = vector.load %arg1[%c0_2, %c0_3, %c0_4] : memref<1x4x256xf32, #tpu.memory_space<vmem>>, vector<1x4x256xf32>
    %5 = vector.shape_cast %4 : vector<1x4x256xf32> to vector<4x256xf32>
    %cst = arith.constant dense<0.000000e+00> : vector<8x256xf32>
    %6 = tpu.matmul %3, %5, %cst {dimension_numbers = #tpu.dot_dimension_numbers<[1], [0], [0], [1], [0, 0, 1, 1], [], []>} : vector<8x4xf32>, vector<4x256xf32>, vector<8x256xf32> -> vector<8x256xf32>
    %c0_5 = arith.constant 0 : index
    %c0_6 = arith.constant 0 : index
    %7 = vector.load %arg3[%c0_5, %c0_6] : memref<8x1xf32, #tpu.memory_space<vmem>>, vector<8x1xf32>
    %cst_7 = arith.constant dense<0.000000e+00> : vector<8xf32>
    %8 = vector.multi_reduction <add>, %6, %cst_7 [1] : vector<8x256xf32> to vector<8xf32>
    %9 = vector.shape_cast %8 : vector<8xf32> to vector<8x1xf32>
    %10 = arith.addf %7, %9 : vector<8x1xf32>
    %c0_8 = arith.constant 0 : index
    %c0_9 = arith.constant 0 : index
    %11 = vector.load %arg3[%c0_8, %c0_9] : memref<8x1xf32, #tpu.memory_space<vmem>>, vector<8x1xf32>
    tpu.vector_store %arg3[%c0_8, %c0_9], %10 {strides = array<i32>} : memref<8x1xf32, #tpu.memory_space<vmem>>, vector<8x1xf32>,
    %c0_10 = arith.constant 0 : index
    %c0_11 = arith.constant 0 : index
    %12 = vector.load %arg4[%c0_10, %c0_11] : memref<8x1xf32, #tpu.memory_space<vmem>>, vector<8x1xf32>
    %13 = arith.mulf %6, %6 : vector<8x256xf32>
    %cst_12 = arith.constant dense<0.000000e+00> : vector<8xf32>
    %14 = vector.multi_reduction <add>, %13, %cst_12 [1] : vector<8x256xf32> to vector<8xf32>
    %15 = vector.shape_cast %14 : vector<8xf32> to vector<8x1xf32>
    %16 = arith.addf %12, %15 : vector<8x1xf32>
    %c0_13 = arith.constant 0 : index
    %c0_14 = arith.constant 0 : index
    %17 = vector.load %arg4[%c0_13, %c0_14] : memref<8x1xf32, #tpu.memory_space<vmem>>, vector<8x1xf32>
    tpu.vector_store %arg4[%c0_13, %c0_14], %16 {strides = array<i32>} : memref<8x1xf32, #tpu.memory_space<vmem>>, vector<8x1xf32>,
    return
  }
  func.func @transform_0(%arg0: i32) -> (i32, i32, i32) {
    %c0_i32 = arith.constant 0 : i32
    %c0_i32_0 = arith.constant 0 : i32
    %c0_i32_1 = arith.constant 0 : i32
    return %arg0, %c0_i32, %c0_i32_0 : i32, i32, i32
  }
  func.func @transform_1(%arg0: i32) -> (i32, i32) {
    %c0_i32 = arith.constant 0 : i32
    %c0_i32_0 = arith.constant 0 : i32
    %c0_i32_1 = arith.constant 0 : i32
    return %c0_i32, %c0_i32_0 : i32, i32
  }
  func.func @transform_2(%arg0: i32) -> (i32, i32) {
    %c0_i32 = arith.constant 0 : i32
    %c0_i32_0 = arith.constant 0 : i32
    %c0_i32_1 = arith.constant 0 : i32
    return %c0_i32, %c0_i32_0 : i32, i32
  }
  func.func @transform_3(%arg0: i32) -> (i32, i32) {
    %c0_i32 = arith.constant 0 : i32
    %c0_i32_0 = arith.constant 0 : i32
    %c0_i32_1 = arith.constant 0 : i32
    return %c0_i32, %c0_i32_0 : i32, i32
  }
}

module attributes {stable_mosaic.version = 11 : i64} {
  func.func @_cgb_kernel(%arg0: i32, %arg1: memref<1x8x256xf32, #tpu.memory_space<vmem>>, %arg2: memref<1x4x256xf32, #tpu.memory_space<vmem>>, %arg3: memref<8x4xf32, #tpu.memory_space<vmem>>, %arg4: memref<8x1xf32, #tpu.memory_space<vmem>>, %arg5: memref<8x1xf32, #tpu.memory_space<vmem>>, %arg6: memref<8x256xf32, #tpu.memory_space<vmem>>, %arg7: memref<8x256xf32, #tpu.memory_space<vmem>>, %arg8: memref<8x8xf32, #tpu.memory_space<vmem>>, %arg9: memref<8x1xf32, #tpu.memory_space<vmem>>, %arg10: memref<2x8x256xf32, #tpu.memory_space<vmem>>, %arg11: memref<2x8x256xf32, #tpu.memory_space<vmem>>, %arg12: memref<2x16x8xf32, #tpu.memory_space<vmem>>, %arg13: memref<2x16x1xf32, #tpu.memory_space<vmem>>, %arg14: memref<2x256x256xf32, #tpu.memory_space<vmem>>, %arg15: memref<2x256x256xf32, #tpu.memory_space<vmem>>, %arg16: memref<2x1x256xf32, #tpu.memory_space<vmem>>, %arg17: memref<2x1x256xf32, #tpu.memory_space<vmem>>, %arg18: memref<2x8x8xf32, #tpu.memory_space<vmem>>, %arg19: memref<2x8x8xf32, #tpu.memory_space<vmem>>, %arg20: memref<2x8x1xf32, #tpu.memory_space<vmem>>, %arg21: memref<1x8x256xf32, #tpu.memory_space<vmem>>) attributes {dimension_semantics = [#tpu.dimension_semantics<parallel>], iteration_bounds = array<i64: 2>, scalar_prefetch = 0 : i64, scratch_operands = 0 : i64, tpu.core_type = #tpu.core_type<tc>, window_params = [{transform_indices = @transform_0, window_bounds = array<i64: 1, 8, 256>}, {transform_indices = @transform_1, window_bounds = array<i64: 1, 4, 256>}, {pipeline_mode = #tpu.pipeline_mode<synchronous>, transform_indices = @transform_2, window_bounds = array<i64: 8, 4>}, {pipeline_mode = #tpu.pipeline_mode<synchronous>, transform_indices = @transform_3, window_bounds = array<i64: 8, 1>}, {pipeline_mode = #tpu.pipeline_mode<synchronous>, transform_indices = @transform_4, window_bounds = array<i64: 8, 1>}, {pipeline_mode = #tpu.pipeline_mode<synchronous>, transform_indices = @transform_5, window_bounds = array<i64: 8, 256>}, {pipeline_mode = #tpu.pipeline_mode<synchronous>, transform_indices = @transform_6, window_bounds = array<i64: 8, 256>}, {pipeline_mode = #tpu.pipeline_mode<synchronous>, transform_indices = @transform_7, window_bounds = array<i64: 8, 8>}, {pipeline_mode = #tpu.pipeline_mode<synchronous>, transform_indices = @transform_8, window_bounds = array<i64: 8, 1>}, {pipeline_mode = #tpu.pipeline_mode<synchronous>, transform_indices = @transform_9, window_bounds = array<i64: 2, 8, 256>}, {pipeline_mode = #tpu.pipeline_mode<synchronous>, transform_indices = @transform_10, window_bounds = array<i64: 2, 8, 256>}, {pipeline_mode = #tpu.pipeline_mode<synchronous>, transform_indices = @transform_11, window_bounds = array<i64: 2, 16, 8>}, {pipeline_mode = #tpu.pipeline_mode<synchronous>, transform_indices = @transform_12, window_bounds = array<i64: 2, 16, 1>}, {pipeline_mode = #tpu.pipeline_mode<synchronous>, transform_indices = @transform_13, window_bounds = array<i64: 2, 256, 256>}, {pipeline_mode = #tpu.pipeline_mode<synchronous>, transform_indices = @transform_14, window_bounds = array<i64: 2, 256, 256>}, {pipeline_mode = #tpu.pipeline_mode<synchronous>, transform_indices = @transform_15, window_bounds = array<i64: 2, 1, 256>}, {pipeline_mode = #tpu.pipeline_mode<synchronous>, transform_indices = @transform_16, window_bounds = array<i64: 2, 1, 256>}, {pipeline_mode = #tpu.pipeline_mode<synchronous>, transform_indices = @transform_17, window_bounds = array<i64: 2, 8, 8>}, {pipeline_mode = #tpu.pipeline_mode<synchronous>, transform_indices = @transform_18, window_bounds = array<i64: 2, 8, 8>}, {pipeline_mode = #tpu.pipeline_mode<synchronous>, transform_indices = @transform_19, window_bounds = array<i64: 2, 8, 1>}, {transform_indices = @transform_20, window_bounds = array<i64: 1, 8, 256>}]} {
    %c0 = arith.constant 0 : index
    %c0_0 = arith.constant 0 : index
    %0 = vector.load %arg8[%c0, %c0_0] : memref<8x8xf32, #tpu.memory_space<vmem>>, vector<8x8xf32>
    %c0_1 = arith.constant 0 : index
    %c0_2 = arith.constant 0 : index
    %1 = vector.load %arg9[%c0_1, %c0_2] : memref<8x1xf32, #tpu.memory_space<vmem>>, vector<8x1xf32>
    %c0_3 = arith.constant 0 : index
    %c0_4 = arith.constant 0 : index
    %2 = vector.load %arg6[%c0_3, %c0_4] : memref<8x256xf32, #tpu.memory_space<vmem>>, vector<8x256xf32>
    %c0_5 = arith.constant 0 : index
    %c0_6 = arith.constant 0 : index
    %3 = vector.load %arg7[%c0_5, %c0_6] : memref<8x256xf32, #tpu.memory_space<vmem>>, vector<8x256xf32>
    %c0_7 = arith.constant 0 : index
    %c0_8 = arith.constant 0 : index
    %4 = vector.load %arg3[%c0_7, %c0_8] : memref<8x4xf32, #tpu.memory_space<vmem>>, vector<8x4xf32>
    %c0_9 = arith.constant 0 : index
    %c0_10 = arith.constant 0 : index
    %c0_11 = arith.constant 0 : index
    %5 = vector.load %arg2[%c0_9, %c0_10, %c0_11] : memref<1x4x256xf32, #tpu.memory_space<vmem>>, vector<1x4x256xf32>
    %6 = vector.shape_cast %5 : vector<1x4x256xf32> to vector<4x256xf32>
    %cst = arith.constant dense<0.000000e+00> : vector<8x256xf32>
    %7 = tpu.matmul %4, %6, %cst {dimension_numbers = #tpu.dot_dimension_numbers<[1], [0], [0], [1], [0, 0, 1, 1], [], []>} : vector<8x4xf32>, vector<4x256xf32>, vector<8x256xf32> -> vector<8x256xf32>
    %c0_12 = arith.constant 0 : index
    %c0_13 = arith.constant 0 : index
    %8 = vector.load %arg4[%c0_12, %c0_13] : memref<8x1xf32, #tpu.memory_space<vmem>>, vector<8x1xf32>
    %9 = vector.broadcast %8 : vector<8x1xf32> to vector<8x256xf32>
    %10 = arith.mulf %7, %9 : vector<8x256xf32>
    %c0_14 = arith.constant 0 : index
    %c0_15 = arith.constant 0 : index
    %11 = vector.load %arg5[%c0_14, %c0_15] : memref<8x1xf32, #tpu.memory_space<vmem>>, vector<8x1xf32>
    %12 = vector.broadcast %11 : vector<8x1xf32> to vector<8x256xf32>
    %13 = arith.addf %10, %12 : vector<8x256xf32>
    %cst_16 = arith.constant 0.000000e+00 : f32
    %14 = vector.broadcast %cst_16 : f32 to vector<8x256xf32>
    %15 = arith.cmpf oge, %13, %14 : vector<8x256xf32>
    %cst_17 = arith.constant 0.00999999977 : f32
    %16 = vector.broadcast %cst_17 : f32 to vector<8x256xf32>
    %17 = arith.mulf %16, %13 : vector<8x256xf32>
    %18 = arith.select %15, %13, %17 : vector<8x256xi1>, vector<8x256xf32>
    %c0_18 = arith.constant 0 : index
    %c0_19 = arith.constant 0 : index
    %c0_20 = arith.constant 0 : index
    %19 = vector.load %arg1[%c0_18, %c0_19, %c0_20] : memref<1x8x256xf32, #tpu.memory_space<vmem>>, vector<1x8x256xf32>
    %20 = vector.shape_cast %19 : vector<1x8x256xf32> to vector<8x256xf32>
    %21 = vector.shape_cast %20 : vector<8x256xf32> to vector<1x8x256xf32>
    %cst_21 = arith.constant dense<0.000000e+00> : vector<1xf32>
    %22 = vector.multi_reduction <add>, %21, %cst_21 [1, 2] : vector<1x8x256xf32> to vector<1xf32>
    %23 = vector.shape_cast %22 : vector<1xf32> to vector<1x1x1xf32>
    %24 = vector.extract %23[0, 0, 0] : f32 from vector<1x1x1xf32>
    %cst_22 = arith.constant 2.048000e+03 : f32
    %25 = arith.divf %24, %cst_22 : f32
    %26 = vector.broadcast %25 : f32 to vector<8x256xf32>
    %27 = arith.subf %20, %26 : vector<8x256xf32>
    %28 = arith.mulf %27, %27 : vector<8x256xf32>
    %29 = vector.shape_cast %28 : vector<8x256xf32> to vector<1x8x256xf32>
    %cst_23 = arith.constant dense<0.000000e+00> : vector<1xf32>
    %30 = vector.multi_reduction <add>, %29, %cst_23 [1, 2] : vector<1x8x256xf32> to vector<1xf32>
    %31 = vector.shape_cast %30 : vector<1xf32> to vector<1x1x1xf32>
    %32 = vector.extract %31[0, 0, 0] : f32 from vector<1x1x1xf32>
    %cst_24 = arith.constant 2.048000e+03 : f32
    %33 = arith.divf %32, %cst_24 : f32
    %34 = vector.broadcast %25 : f32 to vector<8x256xf32>
    %35 = arith.subf %20, %34 : vector<8x256xf32>
    %cst_25 = arith.constant 9.99999974E-6 : f32
    %36 = arith.addf %33, %cst_25 : f32
    %37 = math.rsqrt %36 : f32
    %38 = vector.broadcast %37 : f32 to vector<8x256xf32>
    %39 = arith.mulf %35, %38 : vector<8x256xf32>
    %40 = arith.mulf %39, %2 : vector<8x256xf32>
    %41 = arith.addf %40, %3 : vector<8x256xf32>
    %cst_26 = arith.constant dense<0.000000e+00> : vector<8x256xf32>
    %42 = tpu.matmul %0, %41, %cst_26 {dimension_numbers = #tpu.dot_dimension_numbers<[1], [0], [0], [1], [0, 0, 1, 1], [], []>} : vector<8x8xf32>, vector<8x256xf32>, vector<8x256xf32> -> vector<8x256xf32>
    %43 = vector.broadcast %1 : vector<8x1xf32> to vector<8x256xf32>
    %44 = arith.addf %42, %43 : vector<8x256xf32>
    %cst_27 = arith.constant 5.000000e-01 : f32
    %45 = vector.broadcast %cst_27 : f32 to vector<8x256xf32>
    %46 = arith.mulf %45, %44 : vector<8x256xf32>
    %cst_28 = arith.constant 0.707106769 : f32
    %47 = vector.broadcast %cst_28 : f32 to vector<8x256xf32>
    %48 = arith.mulf %44, %47 : vector<8x256xf32>
    %49 = math.absf %48 : vector<8x256xf32>
    %cst_29 = arith.constant 0.327591091 : f32
    %50 = vector.broadcast %cst_29 : f32 to vector<8x256xf32>
    %51 = arith.mulf %50, %49 : vector<8x256xf32>
    %cst_30 = arith.constant 1.000000e+00 : f32
    %52 = vector.broadcast %cst_30 : f32 to vector<8x256xf32>
    %53 = arith.addf %52, %51 : vector<8x256xf32>
    %cst_31 = arith.constant 1.000000e+00 : f32
    %54 = vector.broadcast %cst_31 : f32 to vector<8x256xf32>
    %55 = arith.divf %54, %53 : vector<8x256xf32>
    %cst_32 = arith.constant 1.06140542 : f32
    %56 = vector.broadcast %cst_32 : f32 to vector<8x256xf32>
    %57 = arith.mulf %56, %55 : vector<8x256xf32>
    %cst_33 = arith.constant 1.45315206 : f32
    %58 = vector.broadcast %cst_33 : f32 to vector<8x256xf32>
    %59 = arith.subf %57, %58 : vector<8x256xf32>
    %60 = arith.mulf %59, %55 : vector<8x256xf32>
    %cst_34 = arith.constant 1.42141378 : f32
    %61 = vector.broadcast %cst_34 : f32 to vector<8x256xf32>
    %62 = arith.addf %60, %61 : vector<8x256xf32>
    %63 = arith.mulf %62, %55 : vector<8x256xf32>
    %cst_35 = arith.constant 0.284496725 : f32
    %64 = vector.broadcast %cst_35 : f32 to vector<8x256xf32>
    %65 = arith.subf %63, %64 : vector<8x256xf32>
    %66 = arith.mulf %65, %55 : vector<8x256xf32>
    %cst_36 = arith.constant 0.254829586 : f32
    %67 = vector.broadcast %cst_36 : f32 to vector<8x256xf32>
    %68 = arith.addf %66, %67 : vector<8x256xf32>
    %69 = arith.mulf %68, %55 : vector<8x256xf32>
    %cst_37 = arith.constant 0.000000e+00 : f32
    %70 = vector.broadcast %cst_37 : f32 to vector<8x256xf32>
    %71 = arith.subf %70, %49 : vector<8x256xf32>
    %72 = arith.mulf %71, %49 : vector<8x256xf32>
    %73 = math.exp %72 : vector<8x256xf32>
    %74 = arith.mulf %69, %73 : vector<8x256xf32>
    %cst_38 = arith.constant 1.000000e+00 : f32
    %75 = vector.broadcast %cst_38 : f32 to vector<8x256xf32>
    %76 = arith.subf %75, %74 : vector<8x256xf32>
    %cst_39 = arith.constant 0.000000e+00 : f32
    %77 = vector.broadcast %cst_39 : f32 to vector<8x256xf32>
    %78 = arith.cmpf oge, %48, %77 : vector<8x256xf32>
    %cst_40 = arith.constant 0.000000e+00 : f32
    %79 = vector.broadcast %cst_40 : f32 to vector<8x256xf32>
    %80 = arith.subf %79, %76 : vector<8x256xf32>
    %81 = arith.select %78, %76, %80 : vector<8x256xi1>, vector<8x256xf32>
    %cst_41 = arith.constant 1.000000e+00 : f32
    %82 = vector.broadcast %cst_41 : f32 to vector<8x256xf32>
    %83 = arith.addf %82, %81 : vector<8x256xf32>
    %84 = arith.mulf %46, %83 : vector<8x256xf32>
    %85 = vector.shape_cast %18 : vector<8x256xf32> to vector<1x8x256xf32>
    %cst_42 = arith.constant dense<0.000000e+00> : vector<1xf32>
    %86 = vector.multi_reduction <add>, %85, %cst_42 [1, 2] : vector<1x8x256xf32> to vector<1xf32>
    %87 = vector.shape_cast %86 : vector<1xf32> to vector<1x1x1xf32>
    %88 = vector.extract %87[0, 0, 0] : f32 from vector<1x1x1xf32>
    %cst_43 = arith.constant 2.048000e+03 : f32
    %89 = arith.divf %88, %cst_43 : f32
    %90 = vector.broadcast %89 : f32 to vector<8x256xf32>
    %91 = arith.subf %18, %90 : vector<8x256xf32>
    %92 = arith.mulf %91, %91 : vector<8x256xf32>
    %93 = vector.shape_cast %92 : vector<8x256xf32> to vector<1x8x256xf32>
    %cst_44 = arith.constant dense<0.000000e+00> : vector<1xf32>
    %94 = vector.multi_reduction <add>, %93, %cst_44 [1, 2] : vector<1x8x256xf32> to vector<1xf32>
    %95 = vector.shape_cast %94 : vector<1xf32> to vector<1x1x1xf32>
    %96 = vector.extract %95[0, 0, 0] : f32 from vector<1x1x1xf32>
    %cst_45 = arith.constant 2.048000e+03 : f32
    %97 = arith.divf %96, %cst_45 : f32
    %98 = vector.broadcast %89 : f32 to vector<8x256xf32>
    %99 = arith.subf %18, %98 : vector<8x256xf32>
    %cst_46 = arith.constant 9.99999974E-6 : f32
    %100 = arith.addf %97, %cst_46 : f32
    %101 = math.rsqrt %100 : f32
    %102 = vector.broadcast %101 : f32 to vector<8x256xf32>
    %103 = arith.mulf %99, %102 : vector<8x256xf32>
    %104 = arith.mulf %103, %2 : vector<8x256xf32>
    %105 = arith.addf %104, %3 : vector<8x256xf32>
    %cst_47 = arith.constant dense<0.000000e+00> : vector<8x256xf32>
    %106 = tpu.matmul %0, %105, %cst_47 {dimension_numbers = #tpu.dot_dimension_numbers<[1], [0], [0], [1], [0, 0, 1, 1], [], []>} : vector<8x8xf32>, vector<8x256xf32>, vector<8x256xf32> -> vector<8x256xf32>
    %107 = vector.broadcast %1 : vector<8x1xf32> to vector<8x256xf32>
    %108 = arith.addf %106, %107 : vector<8x256xf32>
    %cst_48 = arith.constant 5.000000e-01 : f32
    %109 = vector.broadcast %cst_48 : f32 to vector<8x256xf32>
    %110 = arith.mulf %109, %108 : vector<8x256xf32>
    %cst_49 = arith.constant 0.707106769 : f32
    %111 = vector.broadcast %cst_49 : f32 to vector<8x256xf32>
    %112 = arith.mulf %108, %111 : vector<8x256xf32>
    %113 = math.absf %112 : vector<8x256xf32>
    %cst_50 = arith.constant 0.327591091 : f32
    %114 = vector.broadcast %cst_50 : f32 to vector<8x256xf32>
    %115 = arith.mulf %114, %113 : vector<8x256xf32>
    %cst_51 = arith.constant 1.000000e+00 : f32
    %116 = vector.broadcast %cst_51 : f32 to vector<8x256xf32>
    %117 = arith.addf %116, %115 : vector<8x256xf32>
    %cst_52 = arith.constant 1.000000e+00 : f32
    %118 = vector.broadcast %cst_52 : f32 to vector<8x256xf32>
    %119 = arith.divf %118, %117 : vector<8x256xf32>
    %cst_53 = arith.constant 1.06140542 : f32
    %120 = vector.broadcast %cst_53 : f32 to vector<8x256xf32>
    %121 = arith.mulf %120, %119 : vector<8x256xf32>
    %cst_54 = arith.constant 1.45315206 : f32
    %122 = vector.broadcast %cst_54 : f32 to vector<8x256xf32>
    %123 = arith.subf %121, %122 : vector<8x256xf32>
    %124 = arith.mulf %123, %119 : vector<8x256xf32>
    %cst_55 = arith.constant 1.42141378 : f32
    %125 = vector.broadcast %cst_55 : f32 to vector<8x256xf32>
    %126 = arith.addf %124, %125 : vector<8x256xf32>
    %127 = arith.mulf %126, %119 : vector<8x256xf32>
    %cst_56 = arith.constant 0.284496725 : f32
    %128 = vector.broadcast %cst_56 : f32 to vector<8x256xf32>
    %129 = arith.subf %127, %128 : vector<8x256xf32>
    %130 = arith.mulf %129, %119 : vector<8x256xf32>
    %cst_57 = arith.constant 0.254829586 : f32
    %131 = vector.broadcast %cst_57 : f32 to vector<8x256xf32>
    %132 = arith.addf %130, %131 : vector<8x256xf32>
    %133 = arith.mulf %132, %119 : vector<8x256xf32>
    %cst_58 = arith.constant 0.000000e+00 : f32
    %134 = vector.broadcast %cst_58 : f32 to vector<8x256xf32>
    %135 = arith.subf %134, %113 : vector<8x256xf32>
    %136 = arith.mulf %135, %113 : vector<8x256xf32>
    %137 = math.exp %136 : vector<8x256xf32>
    %138 = arith.mulf %133, %137 : vector<8x256xf32>
    %cst_59 = arith.constant 1.000000e+00 : f32
    %139 = vector.broadcast %cst_59 : f32 to vector<8x256xf32>
    %140 = arith.subf %139, %138 : vector<8x256xf32>
    %cst_60 = arith.constant 0.000000e+00 : f32
    %141 = vector.broadcast %cst_60 : f32 to vector<8x256xf32>
    %142 = arith.cmpf oge, %112, %141 : vector<8x256xf32>
    %cst_61 = arith.constant 0.000000e+00 : f32
    %143 = vector.broadcast %cst_61 : f32 to vector<8x256xf32>
    %144 = arith.subf %143, %140 : vector<8x256xf32>
    %145 = arith.select %142, %140, %144 : vector<8x256xi1>, vector<8x256xf32>
    %cst_62 = arith.constant 1.000000e+00 : f32
    %146 = vector.broadcast %cst_62 : f32 to vector<8x256xf32>
    %147 = arith.addf %146, %145 : vector<8x256xf32>
    %148 = arith.mulf %110, %147 : vector<8x256xf32>
    %c0_63 = arith.constant 0 : index
    %c0_64 = arith.constant 0 : index
    %c0_65 = arith.constant 0 : index
    %149 = vector.load %arg10[%c0_63, %c0_64, %c0_65] : memref<2x8x256xf32, #tpu.memory_space<vmem>>, vector<1x8x256xf32>
    %150 = vector.shape_cast %149 : vector<1x8x256xf32> to vector<8x256xf32>
    %c0_66 = arith.constant 0 : index
    %c0_67 = arith.constant 0 : index
    %c0_68 = arith.constant 0 : index
    %151 = vector.load %arg11[%c0_66, %c0_67, %c0_68] : memref<2x8x256xf32, #tpu.memory_space<vmem>>, vector<1x8x256xf32>
    %152 = vector.shape_cast %151 : vector<1x8x256xf32> to vector<8x256xf32>
    %153 = vector.shape_cast %84 : vector<8x256xf32> to vector<1x8x256xf32>
    %cst_69 = arith.constant dense<0.000000e+00> : vector<1xf32>
    %154 = vector.multi_reduction <add>, %153, %cst_69 [1, 2] : vector<1x8x256xf32> to vector<1xf32>
    %155 = vector.shape_cast %154 : vector<1xf32> to vector<1x1x1xf32>
    %156 = vector.extract %155[0, 0, 0] : f32 from vector<1x1x1xf32>
    %cst_70 = arith.constant 2.048000e+03 : f32
    %157 = arith.divf %156, %cst_70 : f32
    %158 = vector.broadcast %157 : f32 to vector<8x256xf32>
    %159 = arith.subf %84, %158 : vector<8x256xf32>
    %160 = arith.mulf %159, %159 : vector<8x256xf32>
    %161 = vector.shape_cast %160 : vector<8x256xf32> to vector<1x8x256xf32>
    %cst_71 = arith.constant dense<0.000000e+00> : vector<1xf32>
    %162 = vector.multi_reduction <add>, %161, %cst_71 [1, 2] : vector<1x8x256xf32> to vector<1xf32>
    %163 = vector.shape_cast %162 : vector<1xf32> to vector<1x1x1xf32>
    %164 = vector.extract %163[0, 0, 0] : f32 from vector<1x1x1xf32>
    %cst_72 = arith.constant 2.048000e+03 : f32
    %165 = arith.divf %164, %cst_72 : f32
    %166 = vector.broadcast %157 : f32 to vector<8x256xf32>
    %167 = arith.subf %84, %166 : vector<8x256xf32>
    %cst_73 = arith.constant 9.99999974E-6 : f32
    %168 = arith.addf %165, %cst_73 : f32
    %169 = math.rsqrt %168 : f32
    %170 = vector.broadcast %169 : f32 to vector<8x256xf32>
    %171 = arith.mulf %167, %170 : vector<8x256xf32>
    %172 = arith.mulf %171, %150 : vector<8x256xf32>
    %173 = arith.addf %172, %152 : vector<8x256xf32>
    %c0_74 = arith.constant 0 : index
    %c0_75 = arith.constant 0 : index
    %c0_76 = arith.constant 0 : index
    %174 = vector.load %arg12[%c0_74, %c0_75, %c0_76] : memref<2x16x8xf32, #tpu.memory_space<vmem>>, vector<1x16x8xf32>
    %175 = vector.shape_cast %174 : vector<1x16x8xf32> to vector<16x8xf32>
    %cst_77 = arith.constant dense<0.000000e+00> : vector<16x256xf32>
    %176 = tpu.matmul %175, %173, %cst_77 {dimension_numbers = #tpu.dot_dimension_numbers<[1], [0], [0], [1], [0, 0, 1, 1], [], []>} : vector<16x8xf32>, vector<8x256xf32>, vector<16x256xf32> -> vector<16x256xf32>
    %c0_78 = arith.constant 0 : index
    %c0_79 = arith.constant 0 : index
    %c0_80 = arith.constant 0 : index
    %177 = vector.load %arg13[%c0_78, %c0_79, %c0_80] : memref<2x16x1xf32, #tpu.memory_space<vmem>>, vector<1x16x1xf32>
    %178 = vector.shape_cast %177 : vector<1x16x1xf32> to vector<16x1xf32>
    %179 = vector.broadcast %178 : vector<16x1xf32> to vector<16x256xf32>
    %180 = arith.addf %176, %179 : vector<16x256xf32>
    %cst_81 = arith.constant 5.000000e-01 : f32
    %181 = vector.broadcast %cst_81 : f32 to vector<16x256xf32>
    %182 = arith.mulf %181, %180 : vector<16x256xf32>
    %cst_82 = arith.constant 0.707106769 : f32
    %183 = vector.broadcast %cst_82 : f32 to vector<16x256xf32>
    %184 = arith.mulf %180, %183 : vector<16x256xf32>
    %185 = math.absf %184 : vector<16x256xf32>
    %cst_83 = arith.constant 0.327591091 : f32
    %186 = vector.broadcast %cst_83 : f32 to vector<16x256xf32>
    %187 = arith.mulf %186, %185 : vector<16x256xf32>
    %cst_84 = arith.constant 1.000000e+00 : f32
    %188 = vector.broadcast %cst_84 : f32 to vector<16x256xf32>
    %189 = arith.addf %188, %187 : vector<16x256xf32>
    %cst_85 = arith.constant 1.000000e+00 : f32
    %190 = vector.broadcast %cst_85 : f32 to vector<16x256xf32>
    %191 = arith.divf %190, %189 : vector<16x256xf32>
    %cst_86 = arith.constant 1.06140542 : f32
    %192 = vector.broadcast %cst_86 : f32 to vector<16x256xf32>
    %193 = arith.mulf %192, %191 : vector<16x256xf32>
    %cst_87 = arith.constant 1.45315206 : f32
    %194 = vector.broadcast %cst_87 : f32 to vector<16x256xf32>
    %195 = arith.subf %193, %194 : vector<16x256xf32>
    %196 = arith.mulf %195, %191 : vector<16x256xf32>
    %cst_88 = arith.constant 1.42141378 : f32
    %197 = vector.broadcast %cst_88 : f32 to vector<16x256xf32>
    %198 = arith.addf %196, %197 : vector<16x256xf32>
    %199 = arith.mulf %198, %191 : vector<16x256xf32>
    %cst_89 = arith.constant 0.284496725 : f32
    %200 = vector.broadcast %cst_89 : f32 to vector<16x256xf32>
    %201 = arith.subf %199, %200 : vector<16x256xf32>
    %202 = arith.mulf %201, %191 : vector<16x256xf32>
    %cst_90 = arith.constant 0.254829586 : f32
    %203 = vector.broadcast %cst_90 : f32 to vector<16x256xf32>
    %204 = arith.addf %202, %203 : vector<16x256xf32>
    %205 = arith.mulf %204, %191 : vector<16x256xf32>
    %cst_91 = arith.constant 0.000000e+00 : f32
    %206 = vector.broadcast %cst_91 : f32 to vector<16x256xf32>
    %207 = arith.subf %206, %185 : vector<16x256xf32>
    %208 = arith.mulf %207, %185 : vector<16x256xf32>
    %209 = math.exp %208 : vector<16x256xf32>
    %210 = arith.mulf %205, %209 : vector<16x256xf32>
    %cst_92 = arith.constant 1.000000e+00 : f32
    %211 = vector.broadcast %cst_92 : f32 to vector<16x256xf32>
    %212 = arith.subf %211, %210 : vector<16x256xf32>
    %cst_93 = arith.constant 0.000000e+00 : f32
    %213 = vector.broadcast %cst_93 : f32 to vector<16x256xf32>
    %214 = arith.cmpf oge, %184, %213 : vector<16x256xf32>
    %cst_94 = arith.constant 0.000000e+00 : f32
    %215 = vector.broadcast %cst_94 : f32 to vector<16x256xf32>
    %216 = arith.subf %215, %212 : vector<16x256xf32>
    %217 = arith.select %214, %212, %216 : vector<16x256xi1>, vector<16x256xf32>
    %cst_95 = arith.constant 1.000000e+00 : f32
    %218 = vector.broadcast %cst_95 : f32 to vector<16x256xf32>
    %219 = arith.addf %218, %217 : vector<16x256xf32>
    %220 = arith.mulf %182, %219 : vector<16x256xf32>
    %221 = vector.extract_strided_slice %220 {offsets = [0, 0], sizes = [8, 256], strides = [1, 1]} : vector<16x256xf32> to vector<8x256xf32>
    %222 = vector.extract_strided_slice %220 {offsets = [8, 0], sizes = [8, 256], strides = [1, 1]} : vector<16x256xf32> to vector<8x256xf32>
    %c0_96 = arith.constant 0 : index
    %c0_97 = arith.constant 0 : index
    %c0_98 = arith.constant 0 : index
    %223 = vector.load %arg14[%c0_96, %c0_97, %c0_98] : memref<2x256x256xf32, #tpu.memory_space<vmem>>, vector<1x256x256xf32>
    %224 = vector.shape_cast %223 : vector<1x256x256xf32> to vector<256x256xf32>
    %cst_99 = arith.constant dense<0.000000e+00> : vector<8x256xf32>
    %225 = tpu.matmul %221, %224, %cst_99 {dimension_numbers = #tpu.dot_dimension_numbers<[1], [0], [0], [1], [0, 0, 1, 1], [], []>} : vector<8x256xf32>, vector<256x256xf32>, vector<8x256xf32> -> vector<8x256xf32>
    %c0_100 = arith.constant 0 : index
    %c0_101 = arith.constant 0 : index
    %c0_102 = arith.constant 0 : index
    %226 = vector.load %arg16[%c0_100, %c0_101, %c0_102] : memref<2x1x256xf32, #tpu.memory_space<vmem>>, vector<1x1x256xf32>
    %227 = vector.shape_cast %226 : vector<1x1x256xf32> to vector<1x256xf32>
    %228 = vector.broadcast %227 : vector<1x256xf32> to vector<8x256xf32>
    %229 = arith.addf %225, %228 : vector<8x256xf32>
    %c0_103 = arith.constant 0 : index
    %c0_104 = arith.constant 0 : index
    %c0_105 = arith.constant 0 : index
    %230 = vector.load %arg15[%c0_103, %c0_104, %c0_105] : memref<2x256x256xf32, #tpu.memory_space<vmem>>, vector<1x256x256xf32>
    %231 = vector.shape_cast %230 : vector<1x256x256xf32> to vector<256x256xf32>
    %cst_106 = arith.constant dense<0.000000e+00> : vector<8x256xf32>
    %232 = tpu.matmul %222, %231, %cst_106 {dimension_numbers = #tpu.dot_dimension_numbers<[1], [0], [0], [1], [0, 0, 1, 1], [], []>} : vector<8x256xf32>, vector<256x256xf32>, vector<8x256xf32> -> vector<8x256xf32>
    %c0_107 = arith.constant 0 : index
    %c0_108 = arith.constant 0 : index
    %c0_109 = arith.constant 0 : index
    %233 = vector.load %arg17[%c0_107, %c0_108, %c0_109] : memref<2x1x256xf32, #tpu.memory_space<vmem>>, vector<1x1x256xf32>
    %234 = vector.shape_cast %233 : vector<1x1x256xf32> to vector<1x256xf32>
    %235 = vector.broadcast %234 : vector<1x256xf32> to vector<8x256xf32>
    %236 = arith.addf %232, %235 : vector<8x256xf32>
    %c0_110 = arith.constant 0 : index
    %c0_111 = arith.constant 0 : index
    %c0_112 = arith.constant 0 : index
    %237 = vector.load %arg18[%c0_110, %c0_111, %c0_112] : memref<2x8x8xf32, #tpu.memory_space<vmem>>, vector<1x8x8xf32>
    %238 = vector.shape_cast %237 : vector<1x8x8xf32> to vector<8x8xf32>
    %cst_113 = arith.constant dense<0.000000e+00> : vector<8x256xf32>
    %239 = tpu.matmul %238, %229, %cst_113 {dimension_numbers = #tpu.dot_dimension_numbers<[1], [0], [0], [1], [0, 0, 1, 1], [], []>} : vector<8x8xf32>, vector<8x256xf32>, vector<8x256xf32> -> vector<8x256xf32>
    %c0_114 = arith.constant 0 : index
    %c0_115 = arith.constant 0 : index
    %c0_116 = arith.constant 0 : index
    %240 = vector.load %arg19[%c0_114, %c0_115, %c0_116] : memref<2x8x8xf32, #tpu.memory_space<vmem>>, vector<1x8x8xf32>
    %241 = vector.shape_cast %240 : vector<1x8x8xf32> to vector<8x8xf32>
    %cst_117 = arith.constant dense<0.000000e+00> : vector<8x256xf32>
    %242 = tpu.matmul %241, %236, %cst_117 {dimension_numbers = #tpu.dot_dimension_numbers<[1], [0], [0], [1], [0, 0, 1, 1], [], []>} : vector<8x8xf32>, vector<8x256xf32>, vector<8x256xf32> -> vector<8x256xf32>
    %243 = arith.addf %239, %242 : vector<8x256xf32>
    %c0_118 = arith.constant 0 : index
    %c0_119 = arith.constant 0 : index
    %c0_120 = arith.constant 0 : index
    %244 = vector.load %arg20[%c0_118, %c0_119, %c0_120] : memref<2x8x1xf32, #tpu.memory_space<vmem>>, vector<1x8x1xf32>
    %245 = vector.shape_cast %244 : vector<1x8x1xf32> to vector<8x1xf32>
    %246 = vector.broadcast %245 : vector<8x1xf32> to vector<8x256xf32>
    %247 = arith.addf %243, %246 : vector<8x256xf32>
    %c1 = arith.constant 1 : index
    %c0_121 = arith.constant 0 : index
    %c0_122 = arith.constant 0 : index
    %248 = vector.load %arg10[%c1, %c0_121, %c0_122] : memref<2x8x256xf32, #tpu.memory_space<vmem>>, vector<1x8x256xf32>
    %249 = vector.shape_cast %248 : vector<1x8x256xf32> to vector<8x256xf32>
    %c1_123 = arith.constant 1 : index
    %c0_124 = arith.constant 0 : index
    %c0_125 = arith.constant 0 : index
    %250 = vector.load %arg11[%c1_123, %c0_124, %c0_125] : memref<2x8x256xf32, #tpu.memory_space<vmem>>, vector<1x8x256xf32>
    %251 = vector.shape_cast %250 : vector<1x8x256xf32> to vector<8x256xf32>
    %252 = vector.shape_cast %148 : vector<8x256xf32> to vector<1x8x256xf32>
    %cst_126 = arith.constant dense<0.000000e+00> : vector<1xf32>
    %253 = vector.multi_reduction <add>, %252, %cst_126 [1, 2] : vector<1x8x256xf32> to vector<1xf32>
    %254 = vector.shape_cast %253 : vector<1xf32> to vector<1x1x1xf32>
    %255 = vector.extract %254[0, 0, 0] : f32 from vector<1x1x1xf32>
    %cst_127 = arith.constant 2.048000e+03 : f32
    %256 = arith.divf %255, %cst_127 : f32
    %257 = vector.broadcast %256 : f32 to vector<8x256xf32>
    %258 = arith.subf %148, %257 : vector<8x256xf32>
    %259 = arith.mulf %258, %258 : vector<8x256xf32>
    %260 = vector.shape_cast %259 : vector<8x256xf32> to vector<1x8x256xf32>
    %cst_128 = arith.constant dense<0.000000e+00> : vector<1xf32>
    %261 = vector.multi_reduction <add>, %260, %cst_128 [1, 2] : vector<1x8x256xf32> to vector<1xf32>
    %262 = vector.shape_cast %261 : vector<1xf32> to vector<1x1x1xf32>
    %263 = vector.extract %262[0, 0, 0] : f32 from vector<1x1x1xf32>
    %cst_129 = arith.constant 2.048000e+03 : f32
    %264 = arith.divf %263, %cst_129 : f32
    %265 = vector.broadcast %256 : f32 to vector<8x256xf32>
    %266 = arith.subf %148, %265 : vector<8x256xf32>
    %cst_130 = arith.constant 9.99999974E-6 : f32
    %267 = arith.addf %264, %cst_130 : f32
    %268 = math.rsqrt %267 : f32
    %269 = vector.broadcast %268 : f32 to vector<8x256xf32>
    %270 = arith.mulf %266, %269 : vector<8x256xf32>
    %271 = arith.mulf %270, %249 : vector<8x256xf32>
    %272 = arith.addf %271, %251 : vector<8x256xf32>
    %c1_131 = arith.constant 1 : index
    %c0_132 = arith.constant 0 : index
    %c0_133 = arith.constant 0 : index
    %273 = vector.load %arg12[%c1_131, %c0_132, %c0_133] : memref<2x16x8xf32, #tpu.memory_space<vmem>>, vector<1x16x8xf32>
    %274 = vector.shape_cast %273 : vector<1x16x8xf32> to vector<16x8xf32>
    %cst_134 = arith.constant dense<0.000000e+00> : vector<16x256xf32>
    %275 = tpu.matmul %274, %272, %cst_134 {dimension_numbers = #tpu.dot_dimension_numbers<[1], [0], [0], [1], [0, 0, 1, 1], [], []>} : vector<16x8xf32>, vector<8x256xf32>, vector<16x256xf32> -> vector<16x256xf32>
    %c1_135 = arith.constant 1 : index
    %c0_136 = arith.constant 0 : index
    %c0_137 = arith.constant 0 : index
    %276 = vector.load %arg13[%c1_135, %c0_136, %c0_137] : memref<2x16x1xf32, #tpu.memory_space<vmem>>, vector<1x16x1xf32>
    %277 = vector.shape_cast %276 : vector<1x16x1xf32> to vector<16x1xf32>
    %278 = vector.broadcast %277 : vector<16x1xf32> to vector<16x256xf32>
    %279 = arith.addf %275, %278 : vector<16x256xf32>
    %cst_138 = arith.constant 5.000000e-01 : f32
    %280 = vector.broadcast %cst_138 : f32 to vector<16x256xf32>
    %281 = arith.mulf %280, %279 : vector<16x256xf32>
    %cst_139 = arith.constant 0.707106769 : f32
    %282 = vector.broadcast %cst_139 : f32 to vector<16x256xf32>
    %283 = arith.mulf %279, %282 : vector<16x256xf32>
    %284 = math.absf %283 : vector<16x256xf32>
    %cst_140 = arith.constant 0.327591091 : f32
    %285 = vector.broadcast %cst_140 : f32 to vector<16x256xf32>
    %286 = arith.mulf %285, %284 : vector<16x256xf32>
    %cst_141 = arith.constant 1.000000e+00 : f32
    %287 = vector.broadcast %cst_141 : f32 to vector<16x256xf32>
    %288 = arith.addf %287, %286 : vector<16x256xf32>
    %cst_142 = arith.constant 1.000000e+00 : f32
    %289 = vector.broadcast %cst_142 : f32 to vector<16x256xf32>
    %290 = arith.divf %289, %288 : vector<16x256xf32>
    %cst_143 = arith.constant 1.06140542 : f32
    %291 = vector.broadcast %cst_143 : f32 to vector<16x256xf32>
    %292 = arith.mulf %291, %290 : vector<16x256xf32>
    %cst_144 = arith.constant 1.45315206 : f32
    %293 = vector.broadcast %cst_144 : f32 to vector<16x256xf32>
    %294 = arith.subf %292, %293 : vector<16x256xf32>
    %295 = arith.mulf %294, %290 : vector<16x256xf32>
    %cst_145 = arith.constant 1.42141378 : f32
    %296 = vector.broadcast %cst_145 : f32 to vector<16x256xf32>
    %297 = arith.addf %295, %296 : vector<16x256xf32>
    %298 = arith.mulf %297, %290 : vector<16x256xf32>
    %cst_146 = arith.constant 0.284496725 : f32
    %299 = vector.broadcast %cst_146 : f32 to vector<16x256xf32>
    %300 = arith.subf %298, %299 : vector<16x256xf32>
    %301 = arith.mulf %300, %290 : vector<16x256xf32>
    %cst_147 = arith.constant 0.254829586 : f32
    %302 = vector.broadcast %cst_147 : f32 to vector<16x256xf32>
    %303 = arith.addf %301, %302 : vector<16x256xf32>
    %304 = arith.mulf %303, %290 : vector<16x256xf32>
    %cst_148 = arith.constant 0.000000e+00 : f32
    %305 = vector.broadcast %cst_148 : f32 to vector<16x256xf32>
    %306 = arith.subf %305, %284 : vector<16x256xf32>
    %307 = arith.mulf %306, %284 : vector<16x256xf32>
    %308 = math.exp %307 : vector<16x256xf32>
    %309 = arith.mulf %304, %308 : vector<16x256xf32>
    %cst_149 = arith.constant 1.000000e+00 : f32
    %310 = vector.broadcast %cst_149 : f32 to vector<16x256xf32>
    %311 = arith.subf %310, %309 : vector<16x256xf32>
    %cst_150 = arith.constant 0.000000e+00 : f32
    %312 = vector.broadcast %cst_150 : f32 to vector<16x256xf32>
    %313 = arith.cmpf oge, %283, %312 : vector<16x256xf32>
    %cst_151 = arith.constant 0.000000e+00 : f32
    %314 = vector.broadcast %cst_151 : f32 to vector<16x256xf32>
    %315 = arith.subf %314, %311 : vector<16x256xf32>
    %316 = arith.select %313, %311, %315 : vector<16x256xi1>, vector<16x256xf32>
    %cst_152 = arith.constant 1.000000e+00 : f32
    %317 = vector.broadcast %cst_152 : f32 to vector<16x256xf32>
    %318 = arith.addf %317, %316 : vector<16x256xf32>
    %319 = arith.mulf %281, %318 : vector<16x256xf32>
    %320 = vector.extract_strided_slice %319 {offsets = [0, 0], sizes = [8, 256], strides = [1, 1]} : vector<16x256xf32> to vector<8x256xf32>
    %321 = vector.extract_strided_slice %319 {offsets = [8, 0], sizes = [8, 256], strides = [1, 1]} : vector<16x256xf32> to vector<8x256xf32>
    %c1_153 = arith.constant 1 : index
    %c0_154 = arith.constant 0 : index
    %c0_155 = arith.constant 0 : index
    %322 = vector.load %arg14[%c1_153, %c0_154, %c0_155] : memref<2x256x256xf32, #tpu.memory_space<vmem>>, vector<1x256x256xf32>
    %323 = vector.shape_cast %322 : vector<1x256x256xf32> to vector<256x256xf32>
    %cst_156 = arith.constant dense<0.000000e+00> : vector<8x256xf32>
    %324 = tpu.matmul %320, %323, %cst_156 {dimension_numbers = #tpu.dot_dimension_numbers<[1], [0], [0], [1], [0, 0, 1, 1], [], []>} : vector<8x256xf32>, vector<256x256xf32>, vector<8x256xf32> -> vector<8x256xf32>
    %c1_157 = arith.constant 1 : index
    %c0_158 = arith.constant 0 : index
    %c0_159 = arith.constant 0 : index
    %325 = vector.load %arg16[%c1_157, %c0_158, %c0_159] : memref<2x1x256xf32, #tpu.memory_space<vmem>>, vector<1x1x256xf32>
    %326 = vector.shape_cast %325 : vector<1x1x256xf32> to vector<1x256xf32>
    %327 = vector.broadcast %326 : vector<1x256xf32> to vector<8x256xf32>
    %328 = arith.addf %324, %327 : vector<8x256xf32>
    %c1_160 = arith.constant 1 : index
    %c0_161 = arith.constant 0 : index
    %c0_162 = arith.constant 0 : index
    %329 = vector.load %arg15[%c1_160, %c0_161, %c0_162] : memref<2x256x256xf32, #tpu.memory_space<vmem>>, vector<1x256x256xf32>
    %330 = vector.shape_cast %329 : vector<1x256x256xf32> to vector<256x256xf32>
    %cst_163 = arith.constant dense<0.000000e+00> : vector<8x256xf32>
    %331 = tpu.matmul %321, %330, %cst_163 {dimension_numbers = #tpu.dot_dimension_numbers<[1], [0], [0], [1], [0, 0, 1, 1], [], []>} : vector<8x256xf32>, vector<256x256xf32>, vector<8x256xf32> -> vector<8x256xf32>
    %c1_164 = arith.constant 1 : index
    %c0_165 = arith.constant 0 : index
    %c0_166 = arith.constant 0 : index
    %332 = vector.load %arg17[%c1_164, %c0_165, %c0_166] : memref<2x1x256xf32, #tpu.memory_space<vmem>>, vector<1x1x256xf32>
    %333 = vector.shape_cast %332 : vector<1x1x256xf32> to vector<1x256xf32>
    %334 = vector.broadcast %333 : vector<1x256xf32> to vector<8x256xf32>
    %335 = arith.addf %331, %334 : vector<8x256xf32>
    %c1_167 = arith.constant 1 : index
    %c0_168 = arith.constant 0 : index
    %c0_169 = arith.constant 0 : index
    %336 = vector.load %arg18[%c1_167, %c0_168, %c0_169] : memref<2x8x8xf32, #tpu.memory_space<vmem>>, vector<1x8x8xf32>
    %337 = vector.shape_cast %336 : vector<1x8x8xf32> to vector<8x8xf32>
    %cst_170 = arith.constant dense<0.000000e+00> : vector<8x256xf32>
    %338 = tpu.matmul %337, %328, %cst_170 {dimension_numbers = #tpu.dot_dimension_numbers<[1], [0], [0], [1], [0, 0, 1, 1], [], []>} : vector<8x8xf32>, vector<8x256xf32>, vector<8x256xf32> -> vector<8x256xf32>
    %c1_171 = arith.constant 1 : index
    %c0_172 = arith.constant 0 : index
    %c0_173 = arith.constant 0 : index
    %339 = vector.load %arg19[%c1_171, %c0_172, %c0_173] : memref<2x8x8xf32, #tpu.memory_space<vmem>>, vector<1x8x8xf32>
    %340 = vector.shape_cast %339 : vector<1x8x8xf32> to vector<8x8xf32>
    %cst_174 = arith.constant dense<0.000000e+00> : vector<8x256xf32>
    %341 = tpu.matmul %340, %335, %cst_174 {dimension_numbers = #tpu.dot_dimension_numbers<[1], [0], [0], [1], [0, 0, 1, 1], [], []>} : vector<8x8xf32>, vector<8x256xf32>, vector<8x256xf32> -> vector<8x256xf32>
    %342 = arith.addf %338, %341 : vector<8x256xf32>
    %c1_175 = arith.constant 1 : index
    %c0_176 = arith.constant 0 : index
    %c0_177 = arith.constant 0 : index
    %343 = vector.load %arg20[%c1_175, %c0_176, %c0_177] : memref<2x8x1xf32, #tpu.memory_space<vmem>>, vector<1x8x1xf32>
    %344 = vector.shape_cast %343 : vector<1x8x1xf32> to vector<8x1xf32>
    %345 = vector.broadcast %344 : vector<8x1xf32> to vector<8x256xf32>
    %346 = arith.addf %342, %345 : vector<8x256xf32>
    %347 = arith.mulf %84, %346 : vector<8x256xf32>
    %348 = arith.mulf %148, %247 : vector<8x256xf32>
    %349 = arith.addf %347, %348 : vector<8x256xf32>
    %cst_178 = arith.constant dense<0.000000e+00> : vector<8x256xf32>
    %350 = tpu.matmul %0, %349, %cst_178 {dimension_numbers = #tpu.dot_dimension_numbers<[1], [0], [0], [1], [0, 0, 1, 1], [], []>} : vector<8x8xf32>, vector<8x256xf32>, vector<8x256xf32> -> vector<8x256xf32>
    %cst_179 = arith.constant 2.000000e+00 : f32
    %351 = vector.broadcast %cst_179 : f32 to vector<8x1xf32>
    %352 = arith.mulf %351, %1 : vector<8x1xf32>
    %353 = vector.broadcast %352 : vector<8x1xf32> to vector<8x256xf32>
    %354 = arith.addf %350, %353 : vector<8x256xf32>
    %355 = arith.addf %354, %20 : vector<8x256xf32>
    %356 = arith.addf %355, %18 : vector<8x256xf32>
    %c0_180 = arith.constant 0 : index
    %c0_181 = arith.constant 0 : index
    %c0_182 = arith.constant 0 : index
    %357 = vector.load %arg21[%c0_180, %c0_181, %c0_182] : memref<1x8x256xf32, #tpu.memory_space<vmem>>, vector<1x8x256xf32>
    %358 = vector.shape_cast %357 : vector<1x8x256xf32> to vector<8x256xf32>
    %359 = vector.shape_cast %356 : vector<8x256xf32> to vector<1x8x256xf32>
    tpu.vector_store %arg21[%c0_180, %c0_181, %c0_182], %359 {strides = array<i32>} : memref<1x8x256xf32, #tpu.memory_space<vmem>>, vector<1x8x256xf32>,
    return
  }
  func.func @transform_0(%arg0: i32) -> (i32, i32, i32) {
    %c0_i32 = arith.constant 0 : i32
    %c0_i32_0 = arith.constant 0 : i32
    %c0_i32_1 = arith.constant 0 : i32
    return %arg0, %c0_i32, %c0_i32_0 : i32, i32, i32
  }
  func.func @transform_1(%arg0: i32) -> (i32, i32, i32) {
    %c0_i32 = arith.constant 0 : i32
    %c0_i32_0 = arith.constant 0 : i32
    %c0_i32_1 = arith.constant 0 : i32
    return %arg0, %c0_i32, %c0_i32_0 : i32, i32, i32
  }
  func.func @transform_2(%arg0: i32) -> (i32, i32) {
    %c0_i32 = arith.constant 0 : i32
    %c0_i32_0 = arith.constant 0 : i32
    %c0_i32_1 = arith.constant 0 : i32
    return %c0_i32, %c0_i32_0 : i32, i32
  }
  func.func @transform_3(%arg0: i32) -> (i32, i32) {
    %c0_i32 = arith.constant 0 : i32
    %c0_i32_0 = arith.constant 0 : i32
    %c0_i32_1 = arith.constant 0 : i32
    return %c0_i32, %c0_i32_0 : i32, i32
  }
  func.func @transform_4(%arg0: i32) -> (i32, i32) {
    %c0_i32 = arith.constant 0 : i32
    %c0_i32_0 = arith.constant 0 : i32
    %c0_i32_1 = arith.constant 0 : i32
    return %c0_i32, %c0_i32_0 : i32, i32
  }
  func.func @transform_5(%arg0: i32) -> (i32, i32) {
    %c0_i32 = arith.constant 0 : i32
    %c0_i32_0 = arith.constant 0 : i32
    %c0_i32_1 = arith.constant 0 : i32
    return %c0_i32, %c0_i32_0 : i32, i32
  }
  func.func @transform_6(%arg0: i32) -> (i32, i32) {
    %c0_i32 = arith.constant 0 : i32
    %c0_i32_0 = arith.constant 0 : i32
    %c0_i32_1 = arith.constant 0 : i32
    return %c0_i32, %c0_i32_0 : i32, i32
  }
  func.func @transform_7(%arg0: i32) -> (i32, i32) {
    %c0_i32 = arith.constant 0 : i32
    %c0_i32_0 = arith.constant 0 : i32
    %c0_i32_1 = arith.constant 0 : i32
    return %c0_i32, %c0_i32_0 : i32, i32
  }
  func.func @transform_8(%arg0: i32) -> (i32, i32) {
    %c0_i32 = arith.constant 0 : i32
    %c0_i32_0 = arith.constant 0 : i32
    %c0_i32_1 = arith.constant 0 : i32
    return %c0_i32, %c0_i32_0 : i32, i32
  }
  func.func @transform_9(%arg0: i32) -> (i32, i32, i32) {
    %c0_i32 = arith.constant 0 : i32
    %c0_i32_0 = arith.constant 0 : i32
    %c0_i32_1 = arith.constant 0 : i32
    %c0_i32_2 = arith.constant 0 : i32
    return %c0_i32, %c0_i32_0, %c0_i32_1 : i32, i32, i32
  }
  func.func @transform_10(%arg0: i32) -> (i32, i32, i32) {
    %c0_i32 = arith.constant 0 : i32
    %c0_i32_0 = arith.constant 0 : i32
    %c0_i32_1 = arith.constant 0 : i32
    %c0_i32_2 = arith.constant 0 : i32
    return %c0_i32, %c0_i32_0, %c0_i32_1 : i32, i32, i32
  }
  func.func @transform_11(%arg0: i32) -> (i32, i32, i32) {
    %c0_i32 = arith.constant 0 : i32
    %c0_i32_0 = arith.constant 0 : i32
    %c0_i32_1 = arith.constant 0 : i32
    %c0_i32_2 = arith.constant 0 : i32
    return %c0_i32, %c0_i32_0, %c0_i32_1 : i32, i32, i32
  }
  func.func @transform_12(%arg0: i32) -> (i32, i32, i32) {
    %c0_i32 = arith.constant 0 : i32
    %c0_i32_0 = arith.constant 0 : i32
    %c0_i32_1 = arith.constant 0 : i32
    %c0_i32_2 = arith.constant 0 : i32
    return %c0_i32, %c0_i32_0, %c0_i32_1 : i32, i32, i32
  }
  func.func @transform_13(%arg0: i32) -> (i32, i32, i32) {
    %c0_i32 = arith.constant 0 : i32
    %c0_i32_0 = arith.constant 0 : i32
    %c0_i32_1 = arith.constant 0 : i32
    %c0_i32_2 = arith.constant 0 : i32
    return %c0_i32, %c0_i32_0, %c0_i32_1 : i32, i32, i32
  }
  func.func @transform_14(%arg0: i32) -> (i32, i32, i32) {
    %c0_i32 = arith.constant 0 : i32
    %c0_i32_0 = arith.constant 0 : i32
    %c0_i32_1 = arith.constant 0 : i32
    %c0_i32_2 = arith.constant 0 : i32
    return %c0_i32, %c0_i32_0, %c0_i32_1 : i32, i32, i32
  }
  func.func @transform_15(%arg0: i32) -> (i32, i32, i32) {
    %c0_i32 = arith.constant 0 : i32
    %c0_i32_0 = arith.constant 0 : i32
    %c0_i32_1 = arith.constant 0 : i32
    %c0_i32_2 = arith.constant 0 : i32
    return %c0_i32, %c0_i32_0, %c0_i32_1 : i32, i32, i32
  }
  func.func @transform_16(%arg0: i32) -> (i32, i32, i32) {
    %c0_i32 = arith.constant 0 : i32
    %c0_i32_0 = arith.constant 0 : i32
    %c0_i32_1 = arith.constant 0 : i32
    %c0_i32_2 = arith.constant 0 : i32
    return %c0_i32, %c0_i32_0, %c0_i32_1 : i32, i32, i32
  }
  func.func @transform_17(%arg0: i32) -> (i32, i32, i32) {
    %c0_i32 = arith.constant 0 : i32
    %c0_i32_0 = arith.constant 0 : i32
    %c0_i32_1 = arith.constant 0 : i32
    %c0_i32_2 = arith.constant 0 : i32
    return %c0_i32, %c0_i32_0, %c0_i32_1 : i32, i32, i32
  }
  func.func @transform_18(%arg0: i32) -> (i32, i32, i32) {
    %c0_i32 = arith.constant 0 : i32
    %c0_i32_0 = arith.constant 0 : i32
    %c0_i32_1 = arith.constant 0 : i32
    %c0_i32_2 = arith.constant 0 : i32
    return %c0_i32, %c0_i32_0, %c0_i32_1 : i32, i32, i32
  }
  func.func @transform_19(%arg0: i32) -> (i32, i32, i32) {
    %c0_i32 = arith.constant 0 : i32
    %c0_i32_0 = arith.constant 0 : i32
    %c0_i32_1 = arith.constant 0 : i32
    %c0_i32_2 = arith.constant 0 : i32
    return %c0_i32, %c0_i32_0, %c0_i32_1 : i32, i32, i32
  }
  func.func @transform_20(%arg0: i32) -> (i32, i32, i32) {
    %c0_i32 = arith.constant 0 : i32
    %c0_i32_0 = arith.constant 0 : i32
    %c0_i32_1 = arith.constant 0 : i32
    return %arg0, %c0_i32, %c0_i32_0 : i32, i32, i32
  }
}

</mosaic_0001>

<llo_original>
// kernel: cgb_forward.2
$region0: #{cgb_forward.2}
  #allocation0 [shape = 'u32[]', space=smem, size = 0x4, offset = 0x4, fixed_abs, tag = 'smem constant byte address 0x4 - core index']
  #allocation1 [shape = 'u32[144,128]{1,0:T(1,128)}', space=vmem, size = 0x12000, scoped, tag = 'internal scratch']
  %s0 = inlined_call_operand.vmem [shape: f32[2,4,256], index: 0, kind: input, shape index: {}]
  %s1 = inlined_call_operand.vmem [shape: f32[8,4], index: 1, kind: input, shape index: {}]
  %s2 = inlined_call_operand.vmem [shape: f32[8,1], index: 2, kind: output, shape index: {0}]
  %s3 = inlined_call_operand.vmem [shape: f32[8,1], index: 3, kind: output, shape index: {1}]
  %4 = xla_tuple %s2, %s3
  %s5 = sld [smem:[#allocation0]]
  $region53: #{cgb_forward.2} parent=0
    _
  %s7 = ssub.s32 1, %s5
  %s8 = scalar_select 0, %s7, %s5
  loop: start=0, step=1, limit=4
  $region2: #{cgb_forward.2} parent=0 // loop_pre_header
    _
  $region3: #{cgb_forward.2} parent=0 // loop_header
    %s10 = sphi 0, %s14
    %p11 = scmp.ge.s32.totalorder %s10, 4
    %s20 = sphi 0, %s22
    %s23 = sphi 0, %s20
    %s24 = sphi 0, %s23
    %s40 = sphi 0, %s24
    %s44 = sphi 0, %s44
    %s46 = sphi 0, %s44
    %s47 = sphi 0, %s46
    %s61 = sphi 0, %s47
    %s65 = sphi 0, %s65
    %s67 = sphi 0, %s65
    %s68 = sphi 0, %s67
    %s82 = sphi 0, %s68
    %s86 = sphi 0, %s86
    %s88 = sphi 0, %s86
    %s89 = sphi 0, %s88
    %s103 = sphi 0, %s89
  $region4: #{cgb_forward.2} parent=0 // loop_header_branch
    %13 = sbr.rel (%p11) target = $region8
  $region5: #{cgb_forward.2} parent=0 // loop_body
    %s15 = ssub.s32 %s10, 1
    %s16 = ssub.s32 %s10, 2
    %s17 = sadd.s32 %s10, 1
    %s18 = ssub.s32 %s10, %s17
    %p19 = scmp.eq.s32.totalorder %s18, 0
    %s21 = sadd.s32 %s20, 1
    %s22 = scalar_select %p19, %s20, %s21
    %p25 = pneg %p19
    %p26 = scmp.eq.s32.totalorder %s10, 1
    %p27 = por %p25, %p26
    %p28 = scmp.ne.s32.totalorder %s20, %s23
    %p29 = scmp.eq.s32.totalorder %s10, 0
    %p30 = por %p28, %p29
    %p31 = scmp.ne.s32.totalorder %s20, %s23
    %p32 = scmp.eq.s32.totalorder %s15, 1
    %p33 = por %p31, %p32
    %p34 = scmp.ne.s32.totalorder %s23, %s24
    %p35 = scmp.eq.s32.totalorder %s15, 0
    %p36 = por %p34, %p35
    %p37 = scmp.ne.s32.totalorder %s23, %s24
    %p38 = scmp.eq.s32.totalorder %s16, 1
    %p39 = por %p37, %p38
    %p41 = scmp.ne.s32.totalorder %s24, %s40
    %p42 = scmp.eq.s32.totalorder %s16, 0
    %p43 = por %p41, %p42
    %s45 = sadd.s32 %s44, 1
    %p48 = scmp.eq.s32.totalorder %s10, 1
    %p49 = scmp.ne.s32.totalorder %s44, %s46
    %p50 = scmp.eq.s32.totalorder %s10, 0
    %p51 = por %p49, %p50
    %p52 = scmp.ne.s32.totalorder %s44, %s46
    %p53 = scmp.eq.s32.totalorder %s15, 1
    %p54 = por %p52, %p53
    %p55 = scmp.ne.s32.totalorder %s46, %s47
    %p56 = scmp.eq.s32.totalorder %s15, 0
    %p57 = por %p55, %p56
    %p58 = scmp.ne.s32.totalorder %s46, %s47
    %p59 = scmp.eq.s32.totalorder %s16, 1
    %p60 = por %p58, %p59
    %p62 = scmp.ne.s32.totalorder %s47, %s61
    %p63 = scmp.eq.s32.totalorder %s16, 0
    %p64 = por %p62, %p63
    %s66 = sadd.s32 %s65, 1
    %p69 = scmp.eq.s32.totalorder %s10, 1
    %p70 = scmp.ne.s32.totalorder %s65, %s67
    %p71 = scmp.eq.s32.totalorder %s10, 0
    %p72 = por %p70, %p71
    %p73 = scmp.ne.s32.totalorder %s65, %s67
    %p74 = scmp.eq.s32.totalorder %s15, 1
    %p75 = por %p73, %p74
    %p76 = scmp.ne.s32.totalorder %s67, %s68
    %p77 = scmp.eq.s32.totalorder %s15, 0
    %p78 = por %p76, %p77
    %p79 = scmp.ne.s32.totalorder %s67, %s68
    %p80 = scmp.eq.s32.totalorder %s16, 1
    %p81 = por %p79, %p80
    %p83 = scmp.ne.s32.totalorder %s68, %s82
    %p84 = scmp.eq.s32.totalorder %s16, 0
    %p85 = por %p83, %p84
    %s87 = sadd.s32 %s86, 1
    %p90 = scmp.eq.s32.totalorder %s10, 1
    %p91 = scmp.ne.s32.totalorder %s86, %s88
    %p92 = scmp.eq.s32.totalorder %s10, 0
    %p93 = por %p91, %p92
    %p94 = scmp.ne.s32.totalorder %s86, %s88
    %p95 = scmp.eq.s32.totalorder %s15, 1
    %p96 = por %p94, %p95
    %p97 = scmp.ne.s32.totalorder %s88, %s89
    %p98 = scmp.eq.s32.totalorder %s15, 0
    %p99 = por %p97, %p98
    %p100 = scmp.ne.s32.totalorder %s88, %s89
    %p101 = scmp.eq.s32.totalorder %s16, 1
    %p102 = por %p100, %p101
    %p104 = scmp.ne.s32.totalorder %s89, %s103
    %p105 = scmp.eq.s32.totalorder %s16, 0
    %p106 = por %p104, %p105
    %p107 = scmp.le.s32.totalorder 1, %s10
    %p108 = scmp.lt.s32.totalorder %s10, 3
    %p109 = pnand %p107, %p108
    %p110 = pneg %p109
    // Predicated region
    $region9: #{cgb_forward.2} parent=5 // pred_check
      _
    $region10: #{cgb_forward.2} parent=5 // pred_check_branch
      %112 = sbr.rel (%p109) target = $region12
    $region11: #{cgb_forward.2} parent=5 // pred_region
      %s113 = ssub.s32 %s10, 1
      // Predicated region
      $region13: #{cgb_forward.2} parent=11 // pred_check
        %p114 = pneg %p57
      $region14: #{cgb_forward.2} parent=11 // pred_check_branch
        %116 = sbr.rel (%p114) target = $region16
      $region15: #{cgb_forward.2} parent=11 // pred_region
        _
      $region16: #{cgb_forward.2} parent=11 // pred_fallthru
        _
    $region12: #{cgb_forward.2} parent=5 // pred_fallthru
      _
    %p117 = scmp.lt.s32.totalorder %s10, 2
    // Predicated region
    $region17: #{cgb_forward.2} parent=5 // pred_check
      %p118 = pneg %p117
    $region18: #{cgb_forward.2} parent=5 // pred_check_branch
      %120 = sbr.rel (%p118) target = $region20
    $region19: #{cgb_forward.2} parent=5 // pred_region
      // Predicated region
      $region21: #{cgb_forward.2} parent=19 // pred_check
        %p121 = pneg %p30
      $region22: #{cgb_forward.2} parent=19 // pred_check_branch
        %123 = sbr.rel (%p121) target = $region24
      $region23: #{cgb_forward.2} parent=19 // pred_region
        %p124 = scmp.lt.s32.totalorder %s10, 1
        %s125 = scalar_select %p124, %s10, 1
        %s126 = smul.addr %s125, 2
        %s127 = smul.addr %s126, 4
        %s128 = scalar_lea.vmem %s0, %s127
      $region24: #{cgb_forward.2} parent=19 // pred_fallthru
        _
    $region20: #{cgb_forward.2} parent=5 // pred_fallthru
      _
    %p129 = scmp.le.s32.totalorder 1, %s10
    %p130 = scmp.lt.s32.totalorder %s10, 3
    %p131 = pnand %p129, %p130
    %p132 = pneg %p131
    // Predicated region
    $region25: #{cgb_forward.2} parent=5 // pred_check
      _
    $region26: #{cgb_forward.2} parent=5 // pred_check_branch
      %134 = sbr.rel (%p131) target = $region28
    $region27: #{cgb_forward.2} parent=5 // pred_region
      %s135 = ssub.s32 %s10, 1
      %p136 = scmp.lt.s32.totalorder %s15, 1
      %s137 = scalar_select %p136, %s15, 1
      %s138 = smul.addr %s137, 2
      %s139 = smul.addr %s138, 4
      %s140 = scalar_lea.vmem %s0, %s139
      %p141 = pneg %p36
      %p142 = pneg %p33
      %p143 = pneg %p57
      %p144 = pneg %p54
      %p145 = pneg %p78
      %p146 = pneg %p75
      %p147 = pneg %p99
      %p148 = pneg %p96
      %p149 = scmp.lt.s32.totalorder %s15, 1
      %s150 = scalar_select %p149, %s15, 1
      %s151 = smul.addr %s150, 2
      %s152 = smul.addr %s151, 4
      %s153 = scalar_lea.vmem %s0, %s152
      %p154 = scmp.eq.s32.totalorder %s15, 0
      // Predicated region
      $region29: #{cgb_forward.2} parent=27 // pred_check
        %p155 = pneg %p154
      $region30: #{cgb_forward.2} parent=27 // pred_check_branch
        %157 = sbr.rel (%p155) target = $region32
      $region31: #{cgb_forward.2} parent=27 // pred_region
        %vm158 = vcmask 7168
        %159 = vst.msk [vmem:[%s2] sm:$0xff] %vm158, 0.0
        %160 = vst.msk [vmem:[%s3] sm:$0xff] %vm158, 0.0
      $region32: #{cgb_forward.2} parent=27 // pred_fallthru
        _
      %v161 = vld [vmem:[%s1] sm:$0xff]
      %v162 = vld [vmem:[%s153] sm:$0xff]
      %v164 = vcombine.high %v162, %v162
      %vm165 = vcmask 31744
      %v167 = vsel %vm165, %v161, 0
      %vm169 = vcmask 1043456
      %v170 = vsel %vm169, %v162, 0
      %v172 = vsel %vm169, %v164, 0
      %174 = vmatprep.subr.mxu0 0.0
      %175 = vmatpush1.msra.mxu0 0.0
      %176 = vmatprep.subr.mxu0 0.0
      %177 = vmatpush1.msra.mxu0 0.0
      %178 = vmatprep.subr.mxu0 0.0
      %179 = vmatpush1.msra.mxu0 0.0
      %180 = vmatprep.subr.mxu0 0.0
      %181 = vmatpush1.msra.mxu0 0.0
      %182 = vmatprep.subr.mxu0 0.0
      %183 = vmatpush1.msra.mxu0 0.0
      %184 = vmatprep.subr.mxu0 0.0
      %185 = vmatpush1.msra.mxu0 0.0
      %186 = vmatprep.subr.mxu0 0.0
      %187 = vmatpush1.msra.mxu0 0.0
      %188 = vmatprep.subr.mxu0 0.0
      %189 = vmatpush1.msra.mxu0 0.0
      %190 = vmatprep.subr.mxu0 0.0
      %191 = vmatpush1.msra.mxu0 0.0
      %192 = vmatprep.subr.mxu0 0.0
      %193 = vmatpush1.msra.mxu0 0.0
      %194 = vmatprep.subr.mxu0 0.0
      %195 = vmatpush1.msra.mxu0 0.0
      %196 = vmatprep.subr.mxu0 0.0
      %197 = vmatpush1.msra.mxu0 0.0
      %198 = vmatprep.subr.mxu0 0.0
      %199 = vmatpush1.msra.mxu0 0.0
      %200 = vmatprep.subr.mxu0 0.0
      %201 = vmatpush1.msra.mxu0 0.0
      %202 = vmatprep.subr.mxu0 0.0
      %203 = vmatpush1.msra.mxu0 0.0
      %204 = vmatprep.subr.mxu0 %v172
      %205 = vmatpush1.msra.mxu0 %v170
      %206 = vmatprep.subr.mxu0 0.0
      %207 = vmatpush2.msra.mxu0 0.0
      %208 = vmatprep.subr.mxu0 0.0
      %209 = vmatpush2.msra.mxu0 0.0
      %210 = vmatprep.subr.mxu0 0.0
      %211 = vmatpush2.msra.mxu0 0.0
      %212 = vmatprep.subr.mxu0 0.0
      %213 = vmatpush2.msra.mxu0 0.0
      %214 = vmatprep.subr.mxu0 0.0
      %215 = vmatpush2.msra.mxu0 0.0
      %216 = vmatprep.subr.mxu0 0.0
      %217 = vmatpush2.msra.mxu0 0.0
      %218 = vmatprep.subr.mxu0 0.0
      %219 = vmatpush2.msra.mxu0 0.0
      %220 = vmatprep.subr.mxu0 0.0
      %221 = vmatpush2.msra.mxu0 0.0
      %222 = vmatprep.subr.mxu0 0.0
      %223 = vmatpush2.msra.mxu0 0.0
      %224 = vmatprep.subr.mxu0 0.0
      %225 = vmatpush2.msra.mxu0 0.0
      %226 = vmatprep.subr.mxu0 0.0
      %227 = vmatpush2.msra.mxu0 0.0
      %228 = vmatprep.subr.mxu0 0.0
      %229 = vmatpush2.msra.mxu0 0.0
      %230 = vmatprep.subr.mxu0 0.0
      %231 = vmatpush2.msra.mxu0 0.0
      %232 = vmatprep.subr.mxu0 0.0
      %233 = vmatpush2.msra.mxu0 0.0
      %234 = vmatprep.subr.mxu0 0.0
      %235 = vmatpush2.msra.mxu0 0.0
      %236 = vmatprep.subr.mxu0 0.0
      %237 = vmatpush2.msra.mxu0 0.0
      %238 = vmatprep.mubr.f32.mxu0 0.0
      %239 = vmatmul.mubr.f32.gmra.mxu0 %v167
      %v240 = vpop.f32.mrf.mxu0
      %v241 = vadd.f32 0.0, %v240
      %v242 = vpop.f32.mrf.mxu0
      %v243 = vadd.f32 0.0, %v242
      %244 = vdwg.mxu0
      %v245 = vld [vmem:[%s2] sm:$0xff]
      %v246 = vadd.f32 %v241, %v243
      %247 = vadd.xlane.f32.xlu0 %v246
      %v248 = vpop.xlane.xlu0 %247
      %v249 = vadd.f32 %v245, %v248
      %vm250 = vcmask 7168
      %251 = vst.msk [vmem:[%s2] sm:$0xff] %vm250, %v249
      %v252 = vld [vmem:[%s3] sm:$0xff]
      %v253 = vmul.f32 %v241, %v241
      %v254 = vmul.f32 %v243, %v243
      %v255 = vadd.f32 %v253, %v254
      %256 = vadd.xlane.f32.xlu0 %v255
      %v257 = vpop.xlane.xlu0 %256
      %v258 = vadd.f32 %v252, %v257
      %259 = vst.msk [vmem:[%s3] sm:$0xff] %vm250, %v258
      // Predicated region
      $region33: #{cgb_forward.2} parent=27 // pred_check
        %p260 = pneg %p75
      $region34: #{cgb_forward.2} parent=27 // pred_check_branch
        %262 = sbr.rel (%p260) target = $region36
      $region35: #{cgb_forward.2} parent=27 // pred_region
        _
      $region36: #{cgb_forward.2} parent=27 // pred_fallthru
        _
      // Predicated region
      $region37: #{cgb_forward.2} parent=27 // pred_check
        %p263 = pneg %p96
      $region38: #{cgb_forward.2} parent=27 // pred_check_branch
        %265 = sbr.rel (%p263) target = $region40
      $region39: #{cgb_forward.2} parent=27 // pred_region
        _
      $region40: #{cgb_forward.2} parent=27 // pred_fallthru
        _
      // Predicated region
      $region41: #{cgb_forward.2} parent=27 // pred_check
        %p266 = pneg %p75
      $region42: #{cgb_forward.2} parent=27 // pred_check_branch
        %268 = sbr.rel (%p266) target = $region44
      $region43: #{cgb_forward.2} parent=27 // pred_region
        _
      $region44: #{cgb_forward.2} parent=27 // pred_fallthru
        _
      // Predicated region
      $region45: #{cgb_forward.2} parent=27 // pred_check
        %p269 = pneg %p96
      $region46: #{cgb_forward.2} parent=27 // pred_check_branch
        %271 = sbr.rel (%p269) target = $region48
      $region47: #{cgb_forward.2} parent=27 // pred_region
        _
      $region48: #{cgb_forward.2} parent=27 // pred_fallthru
        _
    $region28: #{cgb_forward.2} parent=5 // pred_fallthru
      _
    %p272 = scmp.le.s32.totalorder 2, %s10
    // Predicated region
    $region49: #{cgb_forward.2} parent=5 // pred_check
      %p273 = pneg %p272
    $region50: #{cgb_forward.2} parent=5 // pred_check_branch
      %275 = sbr.rel (%p273) target = $region52
    $region51: #{cgb_forward.2} parent=5 // pred_region
      %s276 = ssub.s32 %s10, 2
    $region52: #{cgb_forward.2} parent=5 // pred_fallthru
      _
  $region6: #{cgb_forward.2} parent=0 // loop_footer
    %s14 = sadd.s32 1, %s10
  $region7: #{cgb_forward.2} parent=0 // loop_footer_branch
    %9 = sbr.rel target = $region3
  $region8: #{cgb_forward.2} parent=0 // loop_exit
    _

// kernel: cgb_forward.3
$region0: #{cgb_forward.3}
  #allocation0 [shape = 'u32[]', space=smem, size = 0x4, offset = 0x4, fixed_abs, tag = 'smem constant byte address 0x4 - core index']
  #allocation1 [shape = 'u32[144,128]{1,0:T(1,128)}', space=vmem, size = 0x12000, scoped, tag = 'internal scratch']
  %s0 = inlined_call_operand.vmem [shape: f32[2,8,256], index: 0, kind: input, shape index: {}]
  %s1 = inlined_call_operand.vmem [shape: f32[2,4,256], index: 1, kind: input, shape index: {}]
  %s2 = inlined_call_operand.vmem [shape: f32[8,4], index: 2, kind: input, shape index: {}]
  %s3 = inlined_call_operand.vmem [shape: f32[8,1], index: 3, kind: input, shape index: {}]
  %s4 = inlined_call_operand.vmem [shape: f32[8,1], index: 4, kind: input, shape index: {}]
  %s5 = inlined_call_operand.vmem [shape: f32[8,256], index: 5, kind: input, shape index: {}]
  %s6 = inlined_call_operand.vmem [shape: f32[8,256], index: 6, kind: input, shape index: {}]
  %s7 = inlined_call_operand.vmem [shape: f32[8,8], index: 7, kind: input, shape index: {}]
  %s8 = inlined_call_operand.vmem [shape: f32[8,1], index: 8, kind: input, shape index: {}]
  %s9 = inlined_call_operand.vmem [shape: f32[2,8,256], index: 9, kind: input, shape index: {}]
  %s10 = inlined_call_operand.vmem [shape: f32[2,8,256], index: 10, kind: input, shape index: {}]
  %s11 = inlined_call_operand.vmem [shape: f32[2,16,8], index: 11, kind: input, shape index: {}]
  %s12 = inlined_call_operand.vmem [shape: f32[2,16,1], index: 12, kind: input, shape index: {}]
  %s13 = inlined_call_operand.vmem [shape: f32[2,256,256], index: 13, kind: input, shape index: {}]
  %s14 = inlined_call_operand.vmem [shape: f32[2,256,256], index: 14, kind: input, shape index: {}]
  %s15 = inlined_call_operand.vmem [shape: f32[2,1,256], index: 15, kind: input, shape index: {}]
  %s16 = inlined_call_operand.vmem [shape: f32[2,1,256], index: 16, kind: input, shape index: {}]
  %s17 = inlined_call_operand.vmem [shape: f32[2,8,8], index: 17, kind: input, shape index: {}]
  %s18 = inlined_call_operand.vmem [shape: f32[2,8,8], index: 18, kind: input, shape index: {}]
  %s19 = inlined_call_operand.vmem [shape: f32[2,8,1], index: 19, kind: input, shape index: {}]
  %s20 = inlined_call_operand.vmem [shape: f32[2,8,256], index: 20, kind: output, shape index: {}]
  %s21 = sld [smem:[#allocation0]]
  $region113: #{cgb_forward.3} parent=0
    _
  %s23 = ssub.s32 1, %s21
  %s24 = scalar_select 0, %s23, %s21
  loop: start=0, step=1, limit=4
  $region2: #{cgb_forward.3} parent=0 // loop_pre_header
    _
  $region3: #{cgb_forward.3} parent=0 // loop_header
    %s26 = sphi 0, %s30
    %p27 = scmp.ge.s32.totalorder %s26, 4
    %s36 = sphi 0, %s38
    %s39 = sphi 0, %s36
    %s40 = sphi 0, %s39
    %s56 = sphi 0, %s40
    %s62 = sphi 0, %s64
    %s65 = sphi 0, %s62
    %s66 = sphi 0, %s65
    %s82 = sphi 0, %s66
    %s86 = sphi 0, %s86
    %s88 = sphi 0, %s86
    %s89 = sphi 0, %s88
    %s103 = sphi 0, %s89
    %s107 = sphi 0, %s107
    %s109 = sphi 0, %s107
    %s110 = sphi 0, %s109
    %s124 = sphi 0, %s110
    %s128 = sphi 0, %s128
    %s130 = sphi 0, %s128
    %s131 = sphi 0, %s130
    %s145 = sphi 0, %s131
    %s149 = sphi 0, %s149
    %s151 = sphi 0, %s149
    %s152 = sphi 0, %s151
    %s166 = sphi 0, %s152
    %s170 = sphi 0, %s170
    %s172 = sphi 0, %s170
    %s173 = sphi 0, %s172
    %s187 = sphi 0, %s173
    %s191 = sphi 0, %s191
    %s193 = sphi 0, %s191
    %s194 = sphi 0, %s193
    %s208 = sphi 0, %s194
    %s212 = sphi 0, %s212
    %s214 = sphi 0, %s212
    %s215 = sphi 0, %s214
    %s229 = sphi 0, %s215
    %s233 = sphi 0, %s233
    %s235 = sphi 0, %s233
    %s236 = sphi 0, %s235
    %s250 = sphi 0, %s236
    %s254 = sphi 0, %s254
    %s256 = sphi 0, %s254
    %s257 = sphi 0, %s256
    %s271 = sphi 0, %s257
    %s275 = sphi 0, %s275
    %s277 = sphi 0, %s275
    %s278 = sphi 0, %s277
    %s292 = sphi 0, %s278
    %s296 = sphi 0, %s296
    %s298 = sphi 0, %s296
    %s299 = sphi 0, %s298
    %s313 = sphi 0, %s299
    %s317 = sphi 0, %s317
    %s319 = sphi 0, %s317
    %s320 = sphi 0, %s319
    %s334 = sphi 0, %s320
    %s338 = sphi 0, %s338
    %s340 = sphi 0, %s338
    %s341 = sphi 0, %s340
    %s355 = sphi 0, %s341
    %s359 = sphi 0, %s359
    %s361 = sphi 0, %s359
    %s362 = sphi 0, %s361
    %s376 = sphi 0, %s362
    %s380 = sphi 0, %s380
    %s382 = sphi 0, %s380
    %s383 = sphi 0, %s382
    %s397 = sphi 0, %s383
    %s401 = sphi 0, %s401
    %s403 = sphi 0, %s401
    %s404 = sphi 0, %s403
    %s418 = sphi 0, %s404
    %s422 = sphi 0, %s422
    %s424 = sphi 0, %s422
    %s425 = sphi 0, %s424
    %s439 = sphi 0, %s425
    %s443 = sphi 0, %s443
    %s445 = sphi 0, %s443
    %s446 = sphi 0, %s445
    %s460 = sphi 0, %s446
    %s466 = sphi 0, %s468
    %s469 = sphi 0, %s466
    %s470 = sphi 0, %s469
    %s486 = sphi 0, %s470
  $region4: #{cgb_forward.3} parent=0 // loop_header_branch
    %29 = sbr.rel (%p27) target = $region8
  $region5: #{cgb_forward.3} parent=0 // loop_body
    %s31 = ssub.s32 %s26, 1
    %s32 = ssub.s32 %s26, 2
    %s33 = sadd.s32 %s26, 1
    %s34 = ssub.s32 %s26, %s33
    %p35 = scmp.eq.s32.totalorder %s34, 0
    %s37 = sadd.s32 %s36, 1
    %s38 = scalar_select %p35, %s36, %s37
    %p41 = pneg %p35
    %p42 = scmp.eq.s32.totalorder %s26, 1
    %p43 = por %p41, %p42
    %p44 = scmp.ne.s32.totalorder %s36, %s39
    %p45 = scmp.eq.s32.totalorder %s26, 0
    %p46 = por %p44, %p45
    %p47 = scmp.ne.s32.totalorder %s36, %s39
    %p48 = scmp.eq.s32.totalorder %s31, 1
    %p49 = por %p47, %p48
    %p50 = scmp.ne.s32.totalorder %s39, %s40
    %p51 = scmp.eq.s32.totalorder %s31, 0
    %p52 = por %p50, %p51
    %p53 = scmp.ne.s32.totalorder %s39, %s40
    %p54 = scmp.eq.s32.totalorder %s32, 1
    %p55 = por %p53, %p54
    %p57 = scmp.ne.s32.totalorder %s40, %s56
    %p58 = scmp.eq.s32.totalorder %s32, 0
    %p59 = por %p57, %p58
    %s60 = ssub.s32 %s26, %s33
    %p61 = scmp.eq.s32.totalorder %s60, 0
    %s63 = sadd.s32 %s62, 1
    %s64 = scalar_select %p61, %s62, %s63
    %p67 = pneg %p61
    %p68 = scmp.eq.s32.totalorder %s26, 1
    %p69 = por %p67, %p68
    %p70 = scmp.ne.s32.totalorder %s62, %s65
    %p71 = scmp.eq.s32.totalorder %s26, 0
    %p72 = por %p70, %p71
    %p73 = scmp.ne.s32.totalorder %s62, %s65
    %p74 = scmp.eq.s32.totalorder %s31, 1
    %p75 = por %p73, %p74
    %p76 = scmp.ne.s32.totalorder %s65, %s66
    %p77 = scmp.eq.s32.totalorder %s31, 0
    %p78 = por %p76, %p77
    %p79 = scmp.ne.s32.totalorder %s65, %s66
    %p80 = scmp.eq.s32.totalorder %s32, 1
    %p81 = por %p79, %p80
    %p83 = scmp.ne.s32.totalorder %s66, %s82
    %p84 = scmp.eq.s32.totalorder %s32, 0
    %p85 = por %p83, %p84
    %s87 = sadd.s32 %s86, 1
    %p90 = scmp.eq.s32.totalorder %s26, 1
    %p91 = scmp.ne.s32.totalorder %s86, %s88
    %p92 = scmp.eq.s32.totalorder %s26, 0
    %p93 = por %p91, %p92
    %p94 = scmp.ne.s32.totalorder %s86, %s88
    %p95 = scmp.eq.s32.totalorder %s31, 1
    %p96 = por %p94, %p95
    %p97 = scmp.ne.s32.totalorder %s88, %s89
    %p98 = scmp.eq.s32.totalorder %s31, 0
    %p99 = por %p97, %p98
    %p100 = scmp.ne.s32.totalorder %s88, %s89
    %p101 = scmp.eq.s32.totalorder %s32, 1
    %p102 = por %p100, %p101
    %p104 = scmp.ne.s32.totalorder %s89, %s103
    %p105 = scmp.eq.s32.totalorder %s32, 0
    %p106 = por %p104, %p105
    %s108 = sadd.s32 %s107, 1
    %p111 = scmp.eq.s32.totalorder %s26, 1
    %p112 = scmp.ne.s32.totalorder %s107, %s109
    %p113 = scmp.eq.s32.totalorder %s26, 0
    %p114 = por %p112, %p113
    %p115 = scmp.ne.s32.totalorder %s107, %s109
    %p116 = scmp.eq.s32.totalorder %s31, 1
    %p117 = por %p115, %p116
    %p118 = scmp.ne.s32.totalorder %s109, %s110
    %p119 = scmp.eq.s32.totalorder %s31, 0
    %p120 = por %p118, %p119
    %p121 = scmp.ne.s32.totalorder %s109, %s110
    %p122 = scmp.eq.s32.totalorder %s32, 1
    %p123 = por %p121, %p122
    %p125 = scmp.ne.s32.totalorder %s110, %s124
    %p126 = scmp.eq.s32.totalorder %s32, 0
    %p127 = por %p125, %p126
    %s129 = sadd.s32 %s128, 1
    %p132 = scmp.eq.s32.totalorder %s26, 1
    %p133 = scmp.ne.s32.totalorder %s128, %s130
    %p134 = scmp.eq.s32.totalorder %s26, 0
    %p135 = por %p133, %p134
    %p136 = scmp.ne.s32.totalorder %s128, %s130
    %p137 = scmp.eq.s32.totalorder %s31, 1
    %p138 = por %p136, %p137
    %p139 = scmp.ne.s32.totalorder %s130, %s131
    %p140 = scmp.eq.s32.totalorder %s31, 0
    %p141 = por %p139, %p140
    %p142 = scmp.ne.s32.totalorder %s130, %s131
    %p143 = scmp.eq.s32.totalorder %s32, 1
    %p144 = por %p142, %p143
    %p146 = scmp.ne.s32.totalorder %s131, %s145
    %p147 = scmp.eq.s32.totalorder %s32, 0
    %p148 = por %p146, %p147
    %s150 = sadd.s32 %s149, 1
    %p153 = scmp.eq.s32.totalorder %s26, 1
    %p154 = scmp.ne.s32.totalorder %s149, %s151
    %p155 = scmp.eq.s32.totalorder %s26, 0
    %p156 = por %p154, %p155
    %p157 = scmp.ne.s32.totalorder %s149, %s151
    %p158 = scmp.eq.s32.totalorder %s31, 1
    %p159 = por %p157, %p158
    %p160 = scmp.ne.s32.totalorder %s151, %s152
    %p161 = scmp.eq.s32.totalorder %s31, 0
    %p162 = por %p160, %p161
    %p163 = scmp.ne.s32.totalorder %s151, %s152
    %p164 = scmp.eq.s32.totalorder %s32, 1
    %p165 = por %p163, %p164
    %p167 = scmp.ne.s32.totalorder %s152, %s166
    %p168 = scmp.eq.s32.totalorder %s32, 0
    %p169 = por %p167, %p168
    %s171 = sadd.s32 %s170, 1
    %p174 = scmp.eq.s32.totalorder %s26, 1
    %p175 = scmp.ne.s32.totalorder %s170, %s172
    %p176 = scmp.eq.s32.totalorder %s26, 0
    %p177 = por %p175, %p176
    %p178 = scmp.ne.s32.totalorder %s170, %s172
    %p179 = scmp.eq.s32.totalorder %s31, 1
    %p180 = por %p178, %p179
    %p181 = scmp.ne.s32.totalorder %s172, %s173
    %p182 = scmp.eq.s32.totalorder %s31, 0
    %p183 = por %p181, %p182
    %p184 = scmp.ne.s32.totalorder %s172, %s173
    %p185 = scmp.eq.s32.totalorder %s32, 1
    %p186 = por %p184, %p185
    %p188 = scmp.ne.s32.totalorder %s173, %s187
    %p189 = scmp.eq.s32.totalorder %s32, 0
    %p190 = por %p188, %p189
    %s192 = sadd.s32 %s191, 1
    %p195 = scmp.eq.s32.totalorder %s26, 1
    %p196 = scmp.ne.s32.totalorder %s191, %s193
    %p197 = scmp.eq.s32.totalorder %s26, 0
    %p198 = por %p196, %p197
    %p199 = scmp.ne.s32.totalorder %s191, %s193
    %p200 = scmp.eq.s32.totalorder %s31, 1
    %p201 = por %p199, %p200
    %p202 = scmp.ne.s32.totalorder %s193, %s194
    %p203 = scmp.eq.s32.totalorder %s31, 0
    %p204 = por %p202, %p203
    %p205 = scmp.ne.s32.totalorder %s193, %s194
    %p206 = scmp.eq.s32.totalorder %s32, 1
    %p207 = por %p205, %p206
    %p209 = scmp.ne.s32.totalorder %s194, %s208
    %p210 = scmp.eq.s32.totalorder %s32, 0
    %p211 = por %p209, %p210
    %s213 = sadd.s32 %s212, 1
    %p216 = scmp.eq.s32.totalorder %s26, 1
    %p217 = scmp.ne.s32.totalorder %s212, %s214
    %p218 = scmp.eq.s32.totalorder %s26, 0
    %p219 = por %p217, %p218
    %p220 = scmp.ne.s32.totalorder %s212, %s214
    %p221 = scmp.eq.s32.totalorder %s31, 1
    %p222 = por %p220, %p221
    %p223 = scmp.ne.s32.totalorder %s214, %s215
    %p224 = scmp.eq.s32.totalorder %s31, 0
    %p225 = por %p223, %p224
    %p226 = scmp.ne.s32.totalorder %s214, %s215
    %p227 = scmp.eq.s32.totalorder %s32, 1
    %p228 = por %p226, %p227
    %p230 = scmp.ne.s32.totalorder %s215, %s229
    %p231 = scmp.eq.s32.totalorder %s32, 0
    %p232 = por %p230, %p231
    %s234 = sadd.s32 %s233, 1
    %p237 = scmp.eq.s32.totalorder %s26, 1
    %p238 = scmp.ne.s32.totalorder %s233, %s235
    %p239 = scmp.eq.s32.totalorder %s26, 0
    %p240 = por %p238, %p239
    %p241 = scmp.ne.s32.totalorder %s233, %s235
    %p242 = scmp.eq.s32.totalorder %s31, 1
    %p243 = por %p241, %p242
    %p244 = scmp.ne.s32.totalorder %s235, %s236
    %p245 = scmp.eq.s32.totalorder %s31, 0
    %p246 = por %p244, %p245
    %p247 = scmp.ne.s32.totalorder %s235, %s236
    %p248 = scmp.eq.s32.totalorder %s32, 1
    %p249 = por %p247, %p248
    %p251 = scmp.ne.s32.totalorder %s236, %s250
    %p252 = scmp.eq.s32.totalorder %s32, 0
    %p253 = por %p251, %p252
    %s255 = sadd.s32 %s254, 1
    %p258 = scmp.eq.s32.totalorder %s26, 1
    %p259 = scmp.ne.s32.totalorder %s254, %s256
    %p260 = scmp.eq.s32.totalorder %s26, 0
    %p261 = por %p259, %p260
    %p262 = scmp.ne.s32.totalorder %s254, %s256
    %p263 = scmp.eq.s32.totalorder %s31, 1
    %p264 = por %p262, %p263
    %p265 = scmp.ne.s32.totalorder %s256, %s257
    %p266 = scmp.eq.s32.totalorder %s31, 0
    %p267 = por %p265, %p266
    %p268 = scmp.ne.s32.totalorder %s256, %s257
    %p269 = scmp.eq.s32.totalorder %s32, 1
    %p270 = por %p268, %p269
    %p272 = scmp.ne.s32.totalorder %s257, %s271
    %p273 = scmp.eq.s32.totalorder %s32, 0
    %p274 = por %p272, %p273
    %s276 = sadd.s32 %s275, 1
    %p279 = scmp.eq.s32.totalorder %s26, 1
    %p280 = scmp.ne.s32.totalorder %s275, %s277
    %p281 = scmp.eq.s32.totalorder %s26, 0
    %p282 = por %p280, %p281
    %p283 = scmp.ne.s32.totalorder %s275, %s277
    %p284 = scmp.eq.s32.totalorder %s31, 1
    %p285 = por %p283, %p284
    %p286 = scmp.ne.s32.totalorder %s277, %s278
    %p287 = scmp.eq.s32.totalorder %s31, 0
    %p288 = por %p286, %p287
    %p289 = scmp.ne.s32.totalorder %s277, %s278
    %p290 = scmp.eq.s32.totalorder %s32, 1
    %p291 = por %p289, %p290
    %p293 = scmp.ne.s32.totalorder %s278, %s292
    %p294 = scmp.eq.s32.totalorder %s32, 0
    %p295 = por %p293, %p294
    %s297 = sadd.s32 %s296, 1
    %p300 = scmp.eq.s32.totalorder %s26, 1
    %p301 = scmp.ne.s32.totalorder %s296, %s298
    %p302 = scmp.eq.s32.totalorder %s26, 0
    %p303 = por %p301, %p302
    %p304 = scmp.ne.s32.totalorder %s296, %s298
    %p305 = scmp.eq.s32.totalorder %s31, 1
    %p306 = por %p304, %p305
    %p307 = scmp.ne.s32.totalorder %s298, %s299
    %p308 = scmp.eq.s32.totalorder %s31, 0
    %p309 = por %p307, %p308
    %p310 = scmp.ne.s32.totalorder %s298, %s299
    %p311 = scmp.eq.s32.totalorder %s32, 1
    %p312 = por %p310, %p311
    %p314 = scmp.ne.s32.totalorder %s299, %s313
    %p315 = scmp.eq.s32.totalorder %s32, 0
    %p316 = por %p314, %p315
    %s318 = sadd.s32 %s317, 1
    %p321 = scmp.eq.s32.totalorder %s26, 1
    %p322 = scmp.ne.s32.totalorder %s317, %s319
    %p323 = scmp.eq.s32.totalorder %s26, 0
    %p324 = por %p322, %p323
    %p325 = scmp.ne.s32.totalorder %s317, %s319
    %p326 = scmp.eq.s32.totalorder %s31, 1
    %p327 = por %p325, %p326
    %p328 = scmp.ne.s32.totalorder %s319, %s320
    %p329 = scmp.eq.s32.totalorder %s31, 0
    %p330 = por %p328, %p329
    %p331 = scmp.ne.s32.totalorder %s319, %s320
    %p332 = scmp.eq.s32.totalorder %s32, 1
    %p333 = por %p331, %p332
    %p335 = scmp.ne.s32.totalorder %s320, %s334
    %p336 = scmp.eq.s32.totalorder %s32, 0
    %p337 = por %p335, %p336
    %s339 = sadd.s32 %s338, 1
    %p342 = scmp.eq.s32.totalorder %s26, 1
    %p343 = scmp.ne.s32.totalorder %s338, %s340
    %p344 = scmp.eq.s32.totalorder %s26, 0
    %p345 = por %p343, %p344
    %p346 = scmp.ne.s32.totalorder %s338, %s340
    %p347 = scmp.eq.s32.totalorder %s31, 1
    %p348 = por %p346, %p347
    %p349 = scmp.ne.s32.totalorder %s340, %s341
    %p350 = scmp.eq.s32.totalorder %s31, 0
    %p351 = por %p349, %p350
    %p352 = scmp.ne.s32.totalorder %s340, %s341
    %p353 = scmp.eq.s32.totalorder %s32, 1
    %p354 = por %p352, %p353
    %p356 = scmp.ne.s32.totalorder %s341, %s355
    %p357 = scmp.eq.s32.totalorder %s32, 0
    %p358 = por %p356, %p357
    %s360 = sadd.s32 %s359, 1
    %p363 = scmp.eq.s32.totalorder %s26, 1
    %p364 = scmp.ne.s32.totalorder %s359, %s361
    %p365 = scmp.eq.s32.totalorder %s26, 0
    %p366 = por %p364, %p365
    %p367 = scmp.ne.s32.totalorder %s359, %s361
    %p368 = scmp.eq.s32.totalorder %s31, 1
    %p369 = por %p367, %p368
    %p370 = scmp.ne.s32.totalorder %s361, %s362
    %p371 = scmp.eq.s32.totalorder %s31, 0
    %p372 = por %p370, %p371
    %p373 = scmp.ne.s32.totalorder %s361, %s362
    %p374 = scmp.eq.s32.totalorder %s32, 1
    %p375 = por %p373, %p374
    %p377 = scmp.ne.s32.totalorder %s362, %s376
    %p378 = scmp.eq.s32.totalorder %s32, 0
    %p379 = por %p377, %p378
    %s381 = sadd.s32 %s380, 1
    %p384 = scmp.eq.s32.totalorder %s26, 1
    %p385 = scmp.ne.s32.totalorder %s380, %s382
    %p386 = scmp.eq.s32.totalorder %s26, 0
    %p387 = por %p385, %p386
    %p388 = scmp.ne.s32.totalorder %s380, %s382
    %p389 = scmp.eq.s32.totalorder %s31, 1
    %p390 = por %p388, %p389
    %p391 = scmp.ne.s32.totalorder %s382, %s383
    %p392 = scmp.eq.s32.totalorder %s31, 0
    %p393 = por %p391, %p392
    %p394 = scmp.ne.s32.totalorder %s382, %s383
    %p395 = scmp.eq.s32.totalorder %s32, 1
    %p396 = por %p394, %p395
    %p398 = scmp.ne.s32.totalorder %s383, %s397
    %p399 = scmp.eq.s32.totalorder %s32, 0
    %p400 = por %p398, %p399
    %s402 = sadd.s32 %s401, 1
    %p405 = scmp.eq.s32.totalorder %s26, 1
    %p406 = scmp.ne.s32.totalorder %s401, %s403
    %p407 = scmp.eq.s32.totalorder %s26, 0
    %p408 = por %p406, %p407
    %p409 = scmp.ne.s32.totalorder %s401, %s403
    %p410 = scmp.eq.s32.totalorder %s31, 1
    %p411 = por %p409, %p410
    %p412 = scmp.ne.s32.totalorder %s403, %s404
    %p413 = scmp.eq.s32.totalorder %s31, 0
    %p414 = por %p412, %p413
    %p415 = scmp.ne.s32.totalorder %s403, %s404
    %p416 = scmp.eq.s32.totalorder %s32, 1
    %p417 = por %p415, %p416
    %p419 = scmp.ne.s32.totalorder %s404, %s418
    %p420 = scmp.eq.s32.totalorder %s32, 0
    %p421 = por %p419, %p420
    %s423 = sadd.s32 %s422, 1
    %p426 = scmp.eq.s32.totalorder %s26, 1
    %p427 = scmp.ne.s32.totalorder %s422, %s424
    %p428 = scmp.eq.s32.totalorder %s26, 0
    %p429 = por %p427, %p428
    %p430 = scmp.ne.s32.totalorder %s422, %s424
    %p431 = scmp.eq.s32.totalorder %s31, 1
    %p432 = por %p430, %p431
    %p433 = scmp.ne.s32.totalorder %s424, %s425
    %p434 = scmp.eq.s32.totalorder %s31, 0
    %p435 = por %p433, %p434
    %p436 = scmp.ne.s32.totalorder %s424, %s425
    %p437 = scmp.eq.s32.totalorder %s32, 1
    %p438 = por %p436, %p437
    %p440 = scmp.ne.s32.totalorder %s425, %s439
    %p441 = scmp.eq.s32.totalorder %s32, 0
    %p442 = por %p440, %p441
    %s444 = sadd.s32 %s443, 1
    %p447 = scmp.eq.s32.totalorder %s26, 1
    %p448 = scmp.ne.s32.totalorder %s443, %s445
    %p449 = scmp.eq.s32.totalorder %s26, 0
    %p450 = por %p448, %p449
    %p451 = scmp.ne.s32.totalorder %s443, %s445
    %p452 = scmp.eq.s32.totalorder %s31, 1
    %p453 = por %p451, %p452
    %p454 = scmp.ne.s32.totalorder %s445, %s446
    %p455 = scmp.eq.s32.totalorder %s31, 0
    %p456 = por %p454, %p455
    %p457 = scmp.ne.s32.totalorder %s445, %s446
    %p458 = scmp.eq.s32.totalorder %s32, 1
    %p459 = por %p457, %p458
    %p461 = scmp.ne.s32.totalorder %s446, %s460
    %p462 = scmp.eq.s32.totalorder %s32, 0
    %p463 = por %p461, %p462
    %s464 = ssub.s32 %s26, %s33
    %p465 = scmp.eq.s32.totalorder %s464, 0
    %s467 = sadd.s32 %s466, 1
    %s468 = scalar_select %p465, %s466, %s467
    %p471 = pneg %p465
    %p472 = scmp.eq.s32.totalorder %s26, 1
    %p473 = por %p471, %p472
    %p474 = scmp.ne.s32.totalorder %s466, %s469
    %p475 = scmp.eq.s32.totalorder %s26, 0
    %p476 = por %p474, %p475
    %p477 = scmp.ne.s32.totalorder %s466, %s469
    %p478 = scmp.eq.s32.totalorder %s31, 1
    %p479 = por %p477, %p478
    %p480 = scmp.ne.s32.totalorder %s469, %s470
    %p481 = scmp.eq.s32.totalorder %s31, 0
    %p482 = por %p480, %p481
    %p483 = scmp.ne.s32.totalorder %s469, %s470
    %p484 = scmp.eq.s32.totalorder %s32, 1
    %p485 = por %p483, %p484
    %p487 = scmp.ne.s32.totalorder %s470, %s486
    %p488 = scmp.eq.s32.totalorder %s32, 0
    %p489 = por %p487, %p488
    %p490 = scmp.le.s32.totalorder 1, %s26
    %p491 = scmp.lt.s32.totalorder %s26, 3
    %p492 = pnand %p490, %p491
    %p493 = pneg %p492
    // Predicated region
    $region9: #{cgb_forward.3} parent=5 // pred_check
      _
    $region10: #{cgb_forward.3} parent=5 // pred_check_branch
      %495 = sbr.rel (%p492) target = $region12
    $region11: #{cgb_forward.3} parent=5 // pred_region
      %s496 = ssub.s32 %s26, 1
      // Predicated region
      $region13: #{cgb_forward.3} parent=11 // pred_check
        %p497 = pneg %p99
      $region14: #{cgb_forward.3} parent=11 // pred_check_branch
        %499 = sbr.rel (%p497) target = $region16
      $region15: #{cgb_forward.3} parent=11 // pred_region
        _
      $region16: #{cgb_forward.3} parent=11 // pred_fallthru
        _
      // Predicated region
      $region17: #{cgb_forward.3} parent=11 // pred_check
        %p500 = pneg %p120
      $region18: #{cgb_forward.3} parent=11 // pred_check_branch
        %502 = sbr.rel (%p500) target = $region20
      $region19: #{cgb_forward.3} parent=11 // pred_region
        _
      $region20: #{cgb_forward.3} parent=11 // pred_fallthru
        _
      // Predicated region
      $region21: #{cgb_forward.3} parent=11 // pred_check
        %p503 = pneg %p141
      $region22: #{cgb_forward.3} parent=11 // pred_check_branch
        %505 = sbr.rel (%p503) target = $region24
      $region23: #{cgb_forward.3} parent=11 // pred_region
        _
      $region24: #{cgb_forward.3} parent=11 // pred_fallthru
        _
      // Predicated region
      $region25: #{cgb_forward.3} parent=11 // pred_check
        %p506 = pneg %p162
      $region26: #{cgb_forward.3} parent=11 // pred_check_branch
        %508 = sbr.rel (%p506) target = $region28
      $region27: #{cgb_forward.3} parent=11 // pred_region
        _
      $region28: #{cgb_forward.3} parent=11 // pred_fallthru
        _
      // Predicated region
      $region29: #{cgb_forward.3} parent=11 // pred_check
        %p509 = pneg %p183
      $region30: #{cgb_forward.3} parent=11 // pred_check_branch
        %511 = sbr.rel (%p509) target = $region32
      $region31: #{cgb_forward.3} parent=11 // pred_region
        _
      $region32: #{cgb_forward.3} parent=11 // pred_fallthru
        _
      // Predicated region
      $region33: #{cgb_forward.3} parent=11 // pred_check
        %p512 = pneg %p204
      $region34: #{cgb_forward.3} parent=11 // pred_check_branch
        %514 = sbr.rel (%p512) target = $region36
      $region35: #{cgb_forward.3} parent=11 // pred_region
        _
      $region36: #{cgb_forward.3} parent=11 // pred_fallthru
        _
      // Predicated region
      $region37: #{cgb_forward.3} parent=11 // pred_check
        %p515 = pneg %p225
      $region38: #{cgb_forward.3} parent=11 // pred_check_branch
        %517 = sbr.rel (%p515) target = $region40
      $region39: #{cgb_forward.3} parent=11 // pred_region
        _
      $region40: #{cgb_forward.3} parent=11 // pred_fallthru
        _
      // Predicated region
      $region41: #{cgb_forward.3} parent=11 // pred_check
        %p518 = pneg %p246
      $region42: #{cgb_forward.3} parent=11 // pred_check_branch
        %520 = sbr.rel (%p518) target = $region44
      $region43: #{cgb_forward.3} parent=11 // pred_region
        _
      $region44: #{cgb_forward.3} parent=11 // pred_fallthru
        _
      // Predicated region
      $region45: #{cgb_forward.3} parent=11 // pred_check
        %p521 = pneg %p267
      $region46: #{cgb_forward.3} parent=11 // pred_check_branch
        %523 = sbr.rel (%p521) target = $region48
      $region47: #{cgb_forward.3} parent=11 // pred_region
        _
      $region48: #{cgb_forward.3} parent=11 // pred_fallthru
        _
      // Predicated region
      $region49: #{cgb_forward.3} parent=11 // pred_check
        %p524 = pneg %p288
      $region50: #{cgb_forward.3} parent=11 // pred_check_branch
        %526 = sbr.rel (%p524) target = $region52
      $region51: #{cgb_forward.3} parent=11 // pred_region
        _
      $region52: #{cgb_forward.3} parent=11 // pred_fallthru
        _
      // Predicated region
      $region53: #{cgb_forward.3} parent=11 // pred_check
        %p527 = pneg %p309
      $region54: #{cgb_forward.3} parent=11 // pred_check_branch
        %529 = sbr.rel (%p527) target = $region56
      $region55: #{cgb_forward.3} parent=11 // pred_region
        _
      $region56: #{cgb_forward.3} parent=11 // pred_fallthru
        _
      // Predicated region
      $region57: #{cgb_forward.3} parent=11 // pred_check
        %p530 = pneg %p330
      $region58: #{cgb_forward.3} parent=11 // pred_check_branch
        %532 = sbr.rel (%p530) target = $region60
      $region59: #{cgb_forward.3} parent=11 // pred_region
        _
      $region60: #{cgb_forward.3} parent=11 // pred_fallthru
        _
      // Predicated region
      $region61: #{cgb_forward.3} parent=11 // pred_check
        %p533 = pneg %p351
      $region62: #{cgb_forward.3} parent=11 // pred_check_branch
        %535 = sbr.rel (%p533) target = $region64
      $region63: #{cgb_forward.3} parent=11 // pred_region
        _
      $region64: #{cgb_forward.3} parent=11 // pred_fallthru
        _
      // Predicated region
      $region65: #{cgb_forward.3} parent=11 // pred_check
        %p536 = pneg %p372
      $region66: #{cgb_forward.3} parent=11 // pred_check_branch
        %538 = sbr.rel (%p536) target = $region68
      $region67: #{cgb_forward.3} parent=11 // pred_region
        _
      $region68: #{cgb_forward.3} parent=11 // pred_fallthru
        _
      // Predicated region
      $region69: #{cgb_forward.3} parent=11 // pred_check
        %p539 = pneg %p393
      $region70: #{cgb_forward.3} parent=11 // pred_check_branch
        %541 = sbr.rel (%p539) target = $region72
      $region71: #{cgb_forward.3} parent=11 // pred_region
        _
      $region72: #{cgb_forward.3} parent=11 // pred_fallthru
        _
      // Predicated region
      $region73: #{cgb_forward.3} parent=11 // pred_check
        %p542 = pneg %p414
      $region74: #{cgb_forward.3} parent=11 // pred_check_branch
        %544 = sbr.rel (%p542) target = $region76
      $region75: #{cgb_forward.3} parent=11 // pred_region
        _
      $region76: #{cgb_forward.3} parent=11 // pred_fallthru
        _
      // Predicated region
      $region77: #{cgb_forward.3} parent=11 // pred_check
        %p545 = pneg %p435
      $region78: #{cgb_forward.3} parent=11 // pred_check_branch
        %547 = sbr.rel (%p545) target = $region80
      $region79: #{cgb_forward.3} parent=11 // pred_region
        _
      $region80: #{cgb_forward.3} parent=11 // pred_fallthru
        _
      // Predicated region
      $region81: #{cgb_forward.3} parent=11 // pred_check
        %p548 = pneg %p456
      $region82: #{cgb_forward.3} parent=11 // pred_check_branch
        %550 = sbr.rel (%p548) target = $region84
      $region83: #{cgb_forward.3} parent=11 // pred_region
        _
      $region84: #{cgb_forward.3} parent=11 // pred_fallthru
        _
    $region12: #{cgb_forward.3} parent=5 // pred_fallthru
      _
    %p551 = scmp.lt.s32.totalorder %s26, 2
    // Predicated region
    $region85: #{cgb_forward.3} parent=5 // pred_check
      %p552 = pneg %p551
    $region86: #{cgb_forward.3} parent=5 // pred_check_branch
      %554 = sbr.rel (%p552) target = $region88
    $region87: #{cgb_forward.3} parent=5 // pred_region
      // Predicated region
      $region89: #{cgb_forward.3} parent=87 // pred_check
        %p555 = pneg %p46
      $region90: #{cgb_forward.3} parent=87 // pred_check_branch
        %557 = sbr.rel (%p555) target = $region92
      $region91: #{cgb_forward.3} parent=87 // pred_region
        %p558 = scmp.lt.s32.totalorder %s26, 1
        %s559 = scalar_select %p558, %s26, 1
        %s560 = smul.addr %s559, 2
        %s561 = smul.addr %s560, 8
        %s562 = scalar_lea.vmem %s0, %s561
      $region92: #{cgb_forward.3} parent=87 // pred_fallthru
        _
      // Predicated region
      $region93: #{cgb_forward.3} parent=87 // pred_check
        %p563 = pneg %p72
      $region94: #{cgb_forward.3} parent=87 // pred_check_branch
        %565 = sbr.rel (%p563) target = $region96
      $region95: #{cgb_forward.3} parent=87 // pred_region
        %p566 = scmp.lt.s32.totalorder %s26, 1
        %s567 = scalar_select %p566, %s26, 1
        %s568 = smul.addr %s567, 2
        %s569 = smul.addr %s568, 4
        %s570 = scalar_lea.vmem %s1, %s569
      $region96: #{cgb_forward.3} parent=87 // pred_fallthru
        _
    $region88: #{cgb_forward.3} parent=5 // pred_fallthru
      _
    %p571 = scmp.le.s32.totalorder 1, %s26
    %p572 = scmp.lt.s32.totalorder %s26, 3
    %p573 = pnand %p571, %p572
    %p574 = pneg %p573
    // Predicated region
    $region97: #{cgb_forward.3} parent=5 // pred_check
      _
    $region98: #{cgb_forward.3} parent=5 // pred_check_branch
      %576 = sbr.rel (%p573) target = $region100
    $region99: #{cgb_forward.3} parent=5 // pred_region
      %s577 = ssub.s32 %s26, 1
      %p578 = scmp.lt.s32.totalorder %s31, 1
      %s579 = scalar_select %p578, %s31, 1
      %s580 = smul.addr %s579, 2
      %s581 = smul.addr %s580, 8
      %s582 = scalar_lea.vmem %s0, %s581
      %p583 = pneg %p52
      %p584 = pneg %p49
      %p585 = scmp.lt.s32.totalorder %s31, 1
      %s586 = scalar_select %p585, %s31, 1
      %s587 = smul.addr %s586, 2
      %s588 = smul.addr %s587, 4
      %s589 = scalar_lea.vmem %s1, %s588
      %p590 = pneg %p78
      %p591 = pneg %p75
      %p592 = pneg %p99
      %p593 = pneg %p96
      %p594 = pneg %p120
      %p595 = pneg %p117
      %p596 = pneg %p141
      %p597 = pneg %p138
      %p598 = pneg %p162
      %p599 = pneg %p159
      %p600 = pneg %p183
      %p601 = pneg %p180
      %p602 = pneg %p204
      %p603 = pneg %p201
      %p604 = pneg %p225
      %p605 = pneg %p222
      %p606 = pneg %p246
      %p607 = pneg %p243
      %p608 = pneg %p267
      %p609 = pneg %p264
      %p610 = pneg %p288
      %p611 = pneg %p285
      %p612 = pneg %p309
      %p613 = pneg %p306
      %p614 = pneg %p330
      %p615 = pneg %p327
      %p616 = pneg %p351
      %p617 = pneg %p348
      %p618 = pneg %p372
      %p619 = pneg %p369
      %p620 = pneg %p393
      %p621 = pneg %p390
      %p622 = pneg %p414
      %p623 = pneg %p411
      %p624 = pneg %p435
      %p625 = pneg %p432
      %p626 = pneg %p456
      %p627 = pneg %p453
      %p628 = pneg %p482
      %p629 = pneg %p479
      %p630 = scmp.lt.s32.totalorder %s31, 1
      %s631 = scalar_select %p630, %s31, 1
      %s632 = smul.addr %s631, 2
      %s633 = smul.addr %s632, 8
      %s634 = scalar_lea.vmem %s20, %s633
      %p635 = scmp.lt.s32.totalorder %s31, 1
      %s636 = scalar_select %p635, %s31, 1
      %s637 = smul.addr %s636, 2
      %s638 = smul.addr %s637, 8
      %s639 = scalar_lea.vmem %s0, %s638
      %p640 = scmp.lt.s32.totalorder %s31, 1
      %s641 = scalar_select %p640, %s31, 1
      %s642 = smul.addr %s641, 2
      %s643 = smul.addr %s642, 4
      %s644 = scalar_lea.vmem %s1, %s643
      %p645 = scmp.lt.s32.totalorder %s31, 1
      %s646 = scalar_select %p645, %s31, 1
      %s647 = smul.addr %s646, 2
      %s648 = smul.addr %s647, 8
      %s649 = scalar_lea.vmem %s20, %s648
      %v650 = vld [vmem:[%s7] sm:$0xff]
      %v651 = vld [vmem:[%s8] sm:$0xff]
      %v652 = vld [vmem:[%s5] sm:$0xff]
      %v653 = vld [vmem:[%s5 + $0x8] sm:$0xff]
      %v654 = vld [vmem:[%s6] sm:$0xff]
      %v655 = vld [vmem:[%s6 + $0x8] sm:$0xff]
      %v656 = vld [vmem:[%s2] sm:$0xff]
      %v657 = vld [vmem:[%s644] sm:$0xff]
      %v659 = vcombine.high %v657, %v657
      %vm660 = vcmask 31744
      %v662 = vsel %vm660, %v656, 0
      %vm664 = vcmask 1043456
      %v665 = vsel %vm664, %v657, 0
      %v667 = vsel %vm664, %v659, 0
      %669 = vmatprep.subr.mxu0 0.0
      %670 = vmatpush1.msra.mxu0 0.0
      %671 = vmatprep.subr.mxu0 0.0
      %672 = vmatpush1.msra.mxu0 0.0
      %673 = vmatprep.subr.mxu0 0.0
      %674 = vmatpush1.msra.mxu0 0.0
      %675 = vmatprep.subr.mxu0 0.0
      %676 = vmatpush1.msra.mxu0 0.0
      %677 = vmatprep.subr.mxu0 0.0
      %678 = vmatpush1.msra.mxu0 0.0
      %679 = vmatprep.subr.mxu0 0.0
      %680 = vmatpush1.msra.mxu0 0.0
      %681 = vmatprep.subr.mxu0 0.0
      %682 = vmatpush1.msra.mxu0 0.0
      %683 = vmatprep.subr.mxu0 0.0
      %684 = vmatpush1.msra.mxu0 0.0
      %685 = vmatprep.subr.mxu0 0.0
      %686 = vmatpush1.msra.mxu0 0.0
      %687 = vmatprep.subr.mxu0 0.0
      %688 = vmatpush1.msra.mxu0 0.0
      %689 = vmatprep.subr.mxu0 0.0
      %690 = vmatpush1.msra.mxu0 0.0
      %691 = vmatprep.subr.mxu0 0.0
      %692 = vmatpush1.msra.mxu0 0.0
      %693 = vmatprep.subr.mxu0 0.0
      %694 = vmatpush1.msra.mxu0 0.0
      %695 = vmatprep.subr.mxu0 0.0
      %696 = vmatpush1.msra.mxu0 0.0
      %697 = vmatprep.subr.mxu0 0.0
      %698 = vmatpush1.msra.mxu0 0.0
      %699 = vmatprep.subr.mxu0 %v667
      %700 = vmatpush1.msra.mxu0 %v665
      %701 = vmatprep.subr.mxu0 0.0
      %702 = vmatpush2.msra.mxu0 0.0
      %703 = vmatprep.subr.mxu0 0.0
      %704 = vmatpush2.msra.mxu0 0.0
      %705 = vmatprep.subr.mxu0 0.0
      %706 = vmatpush2.msra.mxu0 0.0
      %707 = vmatprep.subr.mxu0 0.0
      %708 = vmatpush2.msra.mxu0 0.0
      %709 = vmatprep.subr.mxu0 0.0
      %710 = vmatpush2.msra.mxu0 0.0
      %711 = vmatprep.subr.mxu0 0.0
      %712 = vmatpush2.msra.mxu0 0.0
      %713 = vmatprep.subr.mxu0 0.0
      %714 = vmatpush2.msra.mxu0 0.0
      %715 = vmatprep.subr.mxu0 0.0
      %716 = vmatpush2.msra.mxu0 0.0
      %717 = vmatprep.subr.mxu0 0.0
      %718 = vmatpush2.msra.mxu0 0.0
      %719 = vmatprep.subr.mxu0 0.0
      %720 = vmatpush2.msra.mxu0 0.0
      %721 = vmatprep.subr.mxu0 0.0
      %722 = vmatpush2.msra.mxu0 0.0
      %723 = vmatprep.subr.mxu0 0.0
      %724 = vmatpush2.msra.mxu0 0.0
      %725 = vmatprep.subr.mxu0 0.0
      %726 = vmatpush2.msra.mxu0 0.0
      %727 = vmatprep.subr.mxu0 0.0
      %728 = vmatpush2.msra.mxu0 0.0
      %729 = vmatprep.subr.mxu0 0.0
      %730 = vmatpush2.msra.mxu0 0.0
      %731 = vmatprep.subr.mxu0 0.0
      %732 = vmatpush2.msra.mxu0 0.0
      %733 = vmatprep.mubr.f32.mxu0 0.0
      %734 = vmatmul.mubr.f32.gmra.mxu0 %v662
      %v735 = vpop.f32.mrf.mxu0
      %v736 = vadd.f32 0.0, %v735
      %v737 = vpop.f32.mrf.mxu0
      %v738 = vadd.f32 0.0, %v737
      %739 = vdwg.mxu0
      %v740 = vld [vmem:[%s3] sm:$0xff]
      %742 = vset.pattern.permute.xlu0 0
      %743 = vperm.xlu0 %742, %v740
      %v744 = vpop.permute.xlu0 %743
      %v746 = vmul.f32 %v736, %v744
      %v747 = vmul.f32 %v738, %v744
      %v748 = vld [vmem:[%s4] sm:$0xff]
      %750 = vset.pattern.permute.xlu0 0
      %751 = vperm.xlu0 %750, %v748
      %v752 = vpop.permute.xlu0 %751
      %v754 = vadd.f32 %v746, %v752
      %v755 = vadd.f32 %v747, %v752
      %vm756 = vcmp.ge.f32.partialorder %v754, 0.0
      %vm757 = vcmp.ge.f32.partialorder %v755, 0.0
      %v758 = vmul.f32 %v754, 0.01
      %v759 = vmul.f32 %v755, 0.01
      %v760 = vsel %vm756, %v754, %v758
      %v761 = vsel %vm757, %v755, %v759
      %v762 = vld [vmem:[%s639] sm:$0xff]
      %v763 = vld [vmem:[%s639 + $0x8] sm:$0xff]
      %v764 = vadd.f32 %v762, %v763
      %765 = vadd.xlane.f32.xlu0 %v764
      %v766 = vpop.xlane.xlu0 %765
      %v767 = vrot.slane %v766, 4
      %v768 = vadd.f32 %v766, %v767
      %v769 = vrot.slane %v768, 2
      %v770 = vadd.f32 %v768, %v769
      %v771 = vrot.slane %v770, 1
      %v772 = vadd.f32 %v770, %v771
      %s773 = vtos %v772
      %v774 = vrcp.pop 2048.0
      %s775 = vtos %v774
      %s776 = smul.f32 %s773, %s775
      %v777 = vstv %s776
      %v778 = vsub.f32 %v762, %v777
      %v779 = vsub.f32 %v763, %v777
      %v780 = vmul.f32 %v778, %v778
      %v781 = vmul.f32 %v779, %v779
      %v782 = vadd.f32 %v780, %v781
      %783 = vadd.xlane.f32.xlu0 %v782
      %v784 = vpop.xlane.xlu0 %783
      %v785 = vrot.slane %v784, 4
      %v786 = vadd.f32 %v784, %v785
      %v787 = vrot.slane %v786, 2
      %v788 = vadd.f32 %v786, %v787
      %v789 = vrot.slane %v788, 1
      %v790 = vadd.f32 %v788, %v789
      %s791 = vtos %v790
      %v792 = vrcp.pop 2048.0
      %s793 = vtos %v792
      %s794 = smul.f32 %s791, %s793
      %s795 = sadd.f32 %s794, 1e-05
      %v796 = vstv %s795
      %v797 = vrsqrt.pop %v796
      %s798 = vtos %v797
      %v799 = vstv %s798
      %v800 = vmul.f32 %v778, %v799
      %v801 = vmul.f32 %v779, %v799
      %v802 = vmul.f32 %v800, %v652
      %v803 = vmul.f32 %v801, %v653
      %v804 = vadd.f32 %v802, %v654
      %v805 = vadd.f32 %v803, %v655
      %807 = vset.pattern.permute.xlu0 0
      %808 = vperm.xlu0 %807, %v651
      %v809 = vpop.permute.xlu0 %808
      %vm811 = vcmask 64512
      %v813 = vsel %vm811, %v650, 0
      %815 = vmatprep.subr.mxu0 0.0
      %816 = vmatpush1.msra.mxu0 0.0
      %817 = vmatprep.subr.mxu0 0.0
      %818 = vmatpush1.msra.mxu0 0.0
      %819 = vmatprep.subr.mxu0 0.0
      %820 = vmatpush1.msra.mxu0 0.0
      %821 = vmatprep.subr.mxu0 0.0
      %822 = vmatpush1.msra.mxu0 0.0
      %823 = vmatprep.subr.mxu0 0.0
      %824 = vmatpush1.msra.mxu0 0.0
      %825 = vmatprep.subr.mxu0 0.0
      %826 = vmatpush1.msra.mxu0 0.0
      %827 = vmatprep.subr.mxu0 0.0
      %828 = vmatpush1.msra.mxu0 0.0
      %829 = vmatprep.subr.mxu0 0.0
      %830 = vmatpush1.msra.mxu0 0.0
      %831 = vmatprep.subr.mxu0 0.0
      %832 = vmatpush1.msra.mxu0 0.0
      %833 = vmatprep.subr.mxu0 0.0
      %834 = vmatpush1.msra.mxu0 0.0
      %835 = vmatprep.subr.mxu0 0.0
      %836 = vmatpush1.msra.mxu0 0.0
      %837 = vmatprep.subr.mxu0 0.0
      %838 = vmatpush1.msra.mxu0 0.0
      %839 = vmatprep.subr.mxu0 0.0
      %840 = vmatpush1.msra.mxu0 0.0
      %841 = vmatprep.subr.mxu0 0.0
      %842 = vmatpush1.msra.mxu0 0.0
      %843 = vmatprep.subr.mxu0 0.0
      %844 = vmatpush1.msra.mxu0 0.0
      %845 = vmatprep.subr.mxu0 %v805
      %846 = vmatpush1.msra.mxu0 %v804
      %847 = vmatprep.subr.mxu0 0.0
      %848 = vmatpush2.msra.mxu0 0.0
      %849 = vmatprep.subr.mxu0 0.0
      %850 = vmatpush2.msra.mxu0 0.0
      %851 = vmatprep.subr.mxu0 0.0
      %852 = vmatpush2.msra.mxu0 0.0
      %853 = vmatprep.subr.mxu0 0.0
      %854 = vmatpush2.msra.mxu0 0.0
      %855 = vmatprep.subr.mxu0 0.0
      %856 = vmatpush2.msra.mxu0 0.0
      %857 = vmatprep.subr.mxu0 0.0
      %858 = vmatpush2.msra.mxu0 0.0
      %859 = vmatprep.subr.mxu0 0.0
      %860 = vmatpush2.msra.mxu0 0.0
      %861 = vmatprep.subr.mxu0 0.0
      %862 = vmatpush2.msra.mxu0 0.0
      %863 = vmatprep.subr.mxu0 0.0
      %864 = vmatpush2.msra.mxu0 0.0
      %865 = vmatprep.subr.mxu0 0.0
      %866 = vmatpush2.msra.mxu0 0.0
      %867 = vmatprep.subr.mxu0 0.0
      %868 = vmatpush2.msra.mxu0 0.0
      %869 = vmatprep.subr.mxu0 0.0
      %870 = vmatpush2.msra.mxu0 0.0
      %871 = vmatprep.subr.mxu0 0.0
      %872 = vmatpush2.msra.mxu0 0.0
      %873 = vmatprep.subr.mxu0 0.0
      %874 = vmatpush2.msra.mxu0 0.0
      %875 = vmatprep.subr.mxu0 0.0
      %876 = vmatpush2.msra.mxu0 0.0
      %877 = vmatprep.subr.mxu0 0.0
      %878 = vmatpush2.msra.mxu0 0.0
      %879 = vmatprep.mubr.f32.mxu0 0.0
      %880 = vmatmul.mubr.f32.gmra.mxu0 %v813
      %v881 = vpop.f32.mrf.mxu0
      %v882 = vadd.f32 %v809, %v881
      %v883 = vpop.f32.mrf.mxu0
      %v884 = vadd.f32 %v809, %v883
      %885 = vdwg.mxu0
      %v886 = vmul.f32 %v882, 0.5
      %v887 = vmul.f32 %v884, 0.5
      %v888 = vmul.f32 %v882, 0.70710677
      %v889 = vmul.f32 %v884, 0.70710677
      %v890 = vand.u32 2147483647, %v888
      %v891 = vand.u32 2147483647, %v889
      %v892 = vmul.f32 %v890, 0.3275911
      %v893 = vmul.f32 %v891, 0.3275911
      %v894 = vadd.f32 %v892, 1.0
      %v895 = vadd.f32 %v893, 1.0
      %v896 = vrcp.pop %v894
      %v897 = vmul.f32 1.0, %v896
      %v898 = vrcp.pop %v895
      %v899 = vmul.f32 1.0, %v898
      %v900 = vmul.f32 %v897, 1.0614054
      %v901 = vmul.f32 %v899, 1.0614054
      %v902 = vsub.f32 %v900, 1.4531521
      %v903 = vsub.f32 %v901, 1.4531521
      %v904 = vmul.f32 %v902, %v897
      %v905 = vmul.f32 %v903, %v899
      %v906 = vadd.f32 %v904, 1.4214138
      %v907 = vadd.f32 %v905, 1.4214138
      %v908 = vmul.f32 %v906, %v897
      %v909 = vmul.f32 %v907, %v899
      %v910 = vsub.f32 %v908, 0.28449672
      %v911 = vsub.f32 %v909, 0.28449672
      %v912 = vmul.f32 %v910, %v897
      %v913 = vmul.f32 %v911, %v899
      %v914 = vadd.f32 %v912, 0.2548296
      %v915 = vadd.f32 %v913, 0.2548296
      %v916 = vmul.f32 %v914, %v897
      %v917 = vmul.f32 %v915, %v899
      %v918 = vsub.f32 0.0, %v890
      %v919 = vsub.f32 0.0, %v891
      %v920 = vmul.f32 %v918, %v890
      %v921 = vmul.f32 %v919, %v891
      %v922 = vmul.f32 %v920, 1.442695
      %v923 = vpow.pop %v922
      %v924 = vmul.f32 %v921, 1.442695
      %v925 = vpow.pop %v924
      %v926 = vmul.f32 %v916, %v923
      %v927 = vmul.f32 %v917, %v925
      %v928 = vsub.f32 1.0, %v926
      %v929 = vsub.f32 1.0, %v927
      %vm930 = vcmp.ge.f32.partialorder %v888, 0.0
      %vm931 = vcmp.ge.f32.partialorder %v889, 0.0
      %v932 = vsub.f32 0.0, %v928
      %v933 = vsub.f32 0.0, %v929
      %v934 = vsel %vm930, %v928, %v932
      %v935 = vsel %vm931, %v929, %v933
      %v936 = vadd.f32 %v934, 1.0
      %v937 = vadd.f32 %v935, 1.0
      %v938 = vmul.f32 %v886, %v936
      %v939 = vmul.f32 %v887, %v937
      %v940 = vadd.f32 %v760, %v761
      %941 = vadd.xlane.f32.xlu0 %v940
      %v942 = vpop.xlane.xlu0 %941
      %v943 = vrot.slane %v942, 4
      %v944 = vadd.f32 %v942, %v943
      %v945 = vrot.slane %v944, 2
      %v946 = vadd.f32 %v944, %v945
      %v947 = vrot.slane %v946, 1
      %v948 = vadd.f32 %v946, %v947
      %s949 = vtos %v948
      %v950 = vrcp.pop 2048.0
      %s951 = vtos %v950
      %s952 = smul.f32 %s949, %s951
      %v953 = vstv %s952
      %v954 = vsub.f32 %v760, %v953
      %v955 = vsub.f32 %v761, %v953
      %v956 = vmul.f32 %v954, %v954
      %v957 = vmul.f32 %v955, %v955
      %v958 = vadd.f32 %v956, %v957
      %959 = vadd.xlane.f32.xlu0 %v958
      %v960 = vpop.xlane.xlu0 %959
      %v961 = vrot.slane %v960, 4
      %v962 = vadd.f32 %v960, %v961
      %v963 = vrot.slane %v962, 2
      %v964 = vadd.f32 %v962, %v963
      %v965 = vrot.slane %v964, 1
      %v966 = vadd.f32 %v964, %v965
      %s967 = vtos %v966
      %v968 = vrcp.pop 2048.0
      %s969 = vtos %v968
      %s970 = smul.f32 %s967, %s969
      %s971 = sadd.f32 %s970, 1e-05
      %v972 = vstv %s971
      %v973 = vrsqrt.pop %v972
      %s974 = vtos %v973
      %v975 = vstv %s974
      %v976 = vmul.f32 %v954, %v975
      %v977 = vmul.f32 %v955, %v975
      %v978 = vmul.f32 %v976, %v652
      %v979 = vmul.f32 %v977, %v653
      %v980 = vadd.f32 %v978, %v654
      %v981 = vadd.f32 %v979, %v655
      %982 = vmatprep.subr.mxu0 0.0
      %983 = vmatpush1.msra.mxu0 0.0
      %984 = vmatprep.subr.mxu0 0.0
      %985 = vmatpush1.msra.mxu0 0.0
      %986 = vmatprep.subr.mxu0 0.0
      %987 = vmatpush1.msra.mxu0 0.0
      %988 = vmatprep.subr.mxu0 0.0
      %989 = vmatpush1.msra.mxu0 0.0
      %990 = vmatprep.subr.mxu0 0.0
      %991 = vmatpush1.msra.mxu0 0.0
      %992 = vmatprep.subr.mxu0 0.0
      %993 = vmatpush1.msra.mxu0 0.0
      %994 = vmatprep.subr.mxu0 0.0
      %995 = vmatpush1.msra.mxu0 0.0
      %996 = vmatprep.subr.mxu0 0.0
      %997 = vmatpush1.msra.mxu0 0.0
      %998 = vmatprep.subr.mxu0 0.0
      %999 = vmatpush1.msra.mxu0 0.0
      %1000 = vmatprep.subr.mxu0 0.0
      %1001 = vmatpush1.msra.mxu0 0.0
      %1002 = vmatprep.subr.mxu0 0.0
      %1003 = vmatpush1.msra.mxu0 0.0
      %1004 = vmatprep.subr.mxu0 0.0
      %1005 = vmatpush1.msra.mxu0 0.0
      %1006 = vmatprep.subr.mxu0 0.0
      %1007 = vmatpush1.msra.mxu0 0.0
      %1008 = vmatprep.subr.mxu0 0.0
      %1009 = vmatpush1.msra.mxu0 0.0
      %1010 = vmatprep.subr.mxu0 0.0
      %1011 = vmatpush1.msra.mxu0 0.0
      %1012 = vmatprep.subr.mxu0 %v981
      %1013 = vmatpush1.msra.mxu0 %v980
      %1014 = vmatprep.subr.mxu0 0.0
      %1015 = vmatpush2.msra.mxu0 0.0
      %1016 = vmatprep.subr.mxu0 0.0
      %1017 = vmatpush2.msra.mxu0 0.0
      %1018 = vmatprep.subr.mxu0 0.0
      %1019 = vmatpush2.msra.mxu0 0.0
      %1020 = vmatprep.subr.mxu0 0.0
      %1021 = vmatpush2.msra.mxu0 0.0
      %1022 = vmatprep.subr.mxu0 0.0
      %1023 = vmatpush2.msra.mxu0 0.0
      %1024 = vmatprep.subr.mxu0 0.0
      %1025 = vmatpush2.msra.mxu0 0.0
      %1026 = vmatprep.subr.mxu0 0.0
      %1027 = vmatpush2.msra.mxu0 0.0
      %1028 = vmatprep.subr.mxu0 0.0
      %1029 = vmatpush2.msra.mxu0 0.0
      %1030 = vmatprep.subr.mxu0 0.0
      %1031 = vmatpush2.msra.mxu0 0.0
      %1032 = vmatprep.subr.mxu0 0.0
      %1033 = vmatpush2.msra.mxu0 0.0
      %1034 = vmatprep.subr.mxu0 0.0
      %1035 = vmatpush2.msra.mxu0 0.0
      %1036 = vmatprep.subr.mxu0 0.0
      %1037 = vmatpush2.msra.mxu0 0.0
      %1038 = vmatprep.subr.mxu0 0.0
      %1039 = vmatpush2.msra.mxu0 0.0
      %1040 = vmatprep.subr.mxu0 0.0
      %1041 = vmatpush2.msra.mxu0 0.0
      %1042 = vmatprep.subr.mxu0 0.0
      %1043 = vmatpush2.msra.mxu0 0.0
      %1044 = vmatprep.subr.mxu0 0.0
      %1045 = vmatpush2.msra.mxu0 0.0
      %1046 = vmatprep.mubr.f32.mxu0 0.0
      %1047 = vmatmul.mubr.f32.gmra.mxu0 %v813
      %v1048 = vpop.f32.mrf.mxu0
      %v1049 = vadd.f32 %v809, %v1048
      %v1050 = vpop.f32.mrf.mxu0
      %v1051 = vadd.f32 %v809, %v1050
      %1052 = vdwg.mxu0
      %v1053 = vmul.f32 %v1049, 0.5
      %v1054 = vmul.f32 %v1051, 0.5
      %v1055 = vmul.f32 %v1049, 0.70710677
      %v1056 = vmul.f32 %v1051, 0.70710677
      %v1057 = vand.u32 2147483647, %v1055
      %v1058 = vand.u32 2147483647, %v1056
      %v1059 = vmul.f32 %v1057, 0.3275911
      %v1060 = vmul.f32 %v1058, 0.3275911
      %v1061 = vadd.f32 %v1059, 1.0
      %v1062 = vadd.f32 %v1060, 1.0
      %v1063 = vrcp.pop %v1061
      %v1064 = vmul.f32 1.0, %v1063
      %v1065 = vrcp.pop %v1062
      %v1066 = vmul.f32 1.0, %v1065
      %v1067 = vmul.f32 %v1064, 1.0614054
      %v1068 = vmul.f32 %v1066, 1.0614054
      %v1069 = vsub.f32 %v1067, 1.4531521
      %v1070 = vsub.f32 %v1068, 1.4531521
      %v1071 = vmul.f32 %v1069, %v1064
      %v1072 = vmul.f32 %v1070, %v1066
      %v1073 = vadd.f32 %v1071, 1.4214138
      %v1074 = vadd.f32 %v1072, 1.4214138
      %v1075 = vmul.f32 %v1073, %v1064
      %v1076 = vmul.f32 %v1074, %v1066
      %v1077 = vsub.f32 %v1075, 0.28449672
      %v1078 = vsub.f32 %v1076, 0.28449672
      %v1079 = vmul.f32 %v1077, %v1064
      %v1080 = vmul.f32 %v1078, %v1066
      %v1081 = vadd.f32 %v1079, 0.2548296
      %v1082 = vadd.f32 %v1080, 0.2548296
      %v1083 = vmul.f32 %v1081, %v1064
      %v1084 = vmul.f32 %v1082, %v1066
      %v1085 = vsub.f32 0.0, %v1057
      %v1086 = vsub.f32 0.0, %v1058
      %v1087 = vmul.f32 %v1085, %v1057
      %v1088 = vmul.f32 %v1086, %v1058
      %v1089 = vmul.f32 %v1087, 1.442695
      %v1090 = vpow.pop %v1089
      %v1091 = vmul.f32 %v1088, 1.442695
      %v1092 = vpow.pop %v1091
      %v1093 = vmul.f32 %v1083, %v1090
      %v1094 = vmul.f32 %v1084, %v1092
      %v1095 = vsub.f32 1.0, %v1093
      %v1096 = vsub.f32 1.0, %v1094
      %vm1097 = vcmp.ge.f32.partialorder %v1055, 0.0
      %vm1098 = vcmp.ge.f32.partialorder %v1056, 0.0
      %v1099 = vsub.f32 0.0, %v1095
      %v1100 = vsub.f32 0.0, %v1096
      %v1101 = vsel %vm1097, %v1095, %v1099
      %v1102 = vsel %vm1098, %v1096, %v1100
      %v1103 = vadd.f32 %v1101, 1.0
      %v1104 = vadd.f32 %v1102, 1.0
      %v1105 = vmul.f32 %v1053, %v1103
      %v1106 = vmul.f32 %v1054, %v1104
      %v1107 = vld [vmem:[%s9] sm:$0xff]
      %v1108 = vld [vmem:[%s9 + $0x8] sm:$0xff]
      %v1109 = vld [vmem:[%s10] sm:$0xff]
      %v1110 = vld [vmem:[%s10 + $0x8] sm:$0xff]
      %v1111 = vadd.f32 %v938, %v939
      %1112 = vadd.xlane.f32.xlu0 %v1111
      %v1113 = vpop.xlane.xlu0 %1112
      %v1114 = vrot.slane %v1113, 4
      %v1115 = vadd.f32 %v1113, %v1114
      %v1116 = vrot.slane %v1115, 2
      %v1117 = vadd.f32 %v1115, %v1116
      %v1118 = vrot.slane %v1117, 1
      %v1119 = vadd.f32 %v1117, %v1118
      %s1120 = vtos %v1119
      %v1121 = vrcp.pop 2048.0
      %s1122 = vtos %v1121
      %s1123 = smul.f32 %s1120, %s1122
      %v1124 = vstv %s1123
      %v1125 = vsub.f32 %v938, %v1124
      %v1126 = vsub.f32 %v939, %v1124
      %v1127 = vmul.f32 %v1125, %v1125
      %v1128 = vmul.f32 %v1126, %v1126
      %v1129 = vadd.f32 %v1127, %v1128
      %1130 = vadd.xlane.f32.xlu0 %v1129
      %v1131 = vpop.xlane.xlu0 %1130
      %v1132 = vrot.slane %v1131, 4
      %v1133 = vadd.f32 %v1131, %v1132
      %v1134 = vrot.slane %v1133, 2
      %v1135 = vadd.f32 %v1133, %v1134
      %v1136 = vrot.slane %v1135, 1
      %v1137 = vadd.f32 %v1135, %v1136
      %s1138 = vtos %v1137
      %v1139 = vrcp.pop 2048.0
      %s1140 = vtos %v1139
      %s1141 = smul.f32 %s1138, %s1140
      %s1142 = sadd.f32 %s1141, 1e-05
      %v1143 = vstv %s1142
      %v1144 = vrsqrt.pop %v1143
      %s1145 = vtos %v1144
      %v1146 = vstv %s1145
      %v1147 = vmul.f32 %v1125, %v1146
      %v1148 = vmul.f32 %v1126, %v1146
      %v1149 = vmul.f32 %v1147, %v1107
      %v1150 = vmul.f32 %v1148, %v1108
      %v1151 = vadd.f32 %v1149, %v1109
      %v1152 = vadd.f32 %v1150, %v1110
      %v1153 = vld [vmem:[%s11] sm:$0xff]
      %v1154 = vld [vmem:[%s11 + $0x8] sm:$0xff]
      %v1155 = vld [vmem:[%s12] sm:$0xff]
      %v1156 = vld [vmem:[%s12 + $0x8] sm:$0xff]
      %1158 = vset.pattern.permute.xlu0 0
      %1159 = vperm.xlu0 %1158, %v1155
      %v1160 = vpop.permute.xlu0 %1159
      %1163 = vset.pattern.permute.xlu0 0
      %1164 = vperm.xlu0 %1163, %v1156
      %v1165 = vpop.permute.xlu0 %1164
      %v1168 = vsel %vm811, %v1153, 0
      %v1171 = vsel %vm811, %v1154, 0
      %1173 = vmatprep.subr.mxu0 0.0
      %1174 = vmatpush1.msra.mxu0 0.0
      %1175 = vmatprep.subr.mxu0 0.0
      %1176 = vmatpush1.msra.mxu0 0.0
      %1177 = vmatprep.subr.mxu0 0.0
      %1178 = vmatpush1.msra.mxu0 0.0
      %1179 = vmatprep.subr.mxu0 0.0
      %1180 = vmatpush1.msra.mxu0 0.0
      %1181 = vmatprep.subr.mxu0 0.0
      %1182 = vmatpush1.msra.mxu0 0.0
      %1183 = vmatprep.subr.mxu0 0.0
      %1184 = vmatpush1.msra.mxu0 0.0
      %1185 = vmatprep.subr.mxu0 0.0
      %1186 = vmatpush1.msra.mxu0 0.0
      %1187 = vmatprep.subr.mxu0 0.0
      %1188 = vmatpush1.msra.mxu0 0.0
      %1189 = vmatprep.subr.mxu0 0.0
      %1190 = vmatpush1.msra.mxu0 0.0
      %1191 = vmatprep.subr.mxu0 0.0
      %1192 = vmatpush1.msra.mxu0 0.0
      %1193 = vmatprep.subr.mxu0 0.0
      %1194 = vmatpush1.msra.mxu0 0.0
      %1195 = vmatprep.subr.mxu0 0.0
      %1196 = vmatpush1.msra.mxu0 0.0
      %1197 = vmatprep.subr.mxu0 0.0
      %1198 = vmatpush1.msra.mxu0 0.0
      %1199 = vmatprep.subr.mxu0 0.0
      %1200 = vmatpush1.msra.mxu0 0.0
      %1201 = vmatprep.subr.mxu0 0.0
      %1202 = vmatpush1.msra.mxu0 0.0
      %1203 = vmatprep.subr.mxu0 %v1152
      %1204 = vmatpush1.msra.mxu0 %v1151
      %1205 = vmatprep.subr.mxu0 0.0
      %1206 = vmatpush2.msra.mxu0 0.0
      %1207 = vmatprep.subr.mxu0 0.0
      %1208 = vmatpush2.msra.mxu0 0.0
      %1209 = vmatprep.subr.mxu0 0.0
      %1210 = vmatpush2.msra.mxu0 0.0
      %1211 = vmatprep.subr.mxu0 0.0
      %1212 = vmatpush2.msra.mxu0 0.0
      %1213 = vmatprep.subr.mxu0 0.0
      %1214 = vmatpush2.msra.mxu0 0.0
      %1215 = vmatprep.subr.mxu0 0.0
      %1216 = vmatpush2.msra.mxu0 0.0
      %1217 = vmatprep.subr.mxu0 0.0
      %1218 = vmatpush2.msra.mxu0 0.0
      %1219 = vmatprep.subr.mxu0 0.0
      %1220 = vmatpush2.msra.mxu0 0.0
      %1221 = vmatprep.subr.mxu0 0.0
      %1222 = vmatpush2.msra.mxu0 0.0
      %1223 = vmatprep.subr.mxu0 0.0
      %1224 = vmatpush2.msra.mxu0 0.0
      %1225 = vmatprep.subr.mxu0 0.0
      %1226 = vmatpush2.msra.mxu0 0.0
      %1227 = vmatprep.subr.mxu0 0.0
      %1228 = vmatpush2.msra.mxu0 0.0
      %1229 = vmatprep.subr.mxu0 0.0
      %1230 = vmatpush2.msra.mxu0 0.0
      %1231 = vmatprep.subr.mxu0 0.0
      %1232 = vmatpush2.msra.mxu0 0.0
      %1233 = vmatprep.subr.mxu0 0.0
      %1234 = vmatpush2.msra.mxu0 0.0
      %1235 = vmatprep.subr.mxu0 0.0
      %1236 = vmatpush2.msra.mxu0 0.0
      %1237 = vmatprep.mubr.f32.mxu0 0.0
      %1238 = vmatmul.mubr.f32.gmra.mxu0 %v1168
      %v1239 = vpop.f32.mrf.mxu0
      %v1240 = vadd.f32 %v1160, %v1239
      %v1241 = vpop.f32.mrf.mxu0
      %v1242 = vadd.f32 %v1160, %v1241
      %1243 = vmatprep.mubr.f32.mxu0 0.0
      %1244 = vmatmul.mubr.f32.gmra.mxu0 %v1171
      %v1245 = vpop.f32.mrf.mxu0
      %v1246 = vadd.f32 %v1165, %v1245
      %v1247 = vpop.f32.mrf.mxu0
      %v1248 = vadd.f32 %v1165, %v1247
      %1249 = vdwg.mxu0
      %v1250 = vmul.f32 %v1240, 0.5
      %v1251 = vmul.f32 %v1242, 0.5
      %v1252 = vmul.f32 %v1246, 0.5
      %v1253 = vmul.f32 %v1248, 0.5
      %v1254 = vmul.f32 %v1240, 0.70710677
      %v1255 = vmul.f32 %v1242, 0.70710677
      %v1256 = vmul.f32 %v1246, 0.70710677
      %v1257 = vmul.f32 %v1248, 0.70710677
      %v1258 = vand.u32 2147483647, %v1254
      %v1259 = vand.u32 2147483647, %v1255
      %v1260 = vand.u32 2147483647, %v1256
      %v1261 = vand.u32 2147483647, %v1257
      %v1262 = vmul.f32 %v1258, 0.3275911
      %v1263 = vmul.f32 %v1259, 0.3275911
      %v1264 = vmul.f32 %v1260, 0.3275911
      %v1265 = vmul.f32 %v1261, 0.3275911
      %v1266 = vadd.f32 %v1262, 1.0
      %v1267 = vadd.f32 %v1263, 1.0
      %v1268 = vadd.f32 %v1264, 1.0
      %v1269 = vadd.f32 %v1265, 1.0
      %v1270 = vrcp.pop %v1266
      %v1271 = vmul.f32 1.0, %v1270
      %v1272 = vrcp.pop %v1267
      %v1273 = vmul.f32 1.0, %v1272
      %v1274 = vrcp.pop %v1268
      %v1275 = vmul.f32 1.0, %v1274
      %v1276 = vrcp.pop %v1269
      %v1277 = vmul.f32 1.0, %v1276
      %v1278 = vmul.f32 %v1271, 1.0614054
      %v1279 = vmul.f32 %v1273, 1.0614054
      %v1280 = vmul.f32 %v1275, 1.0614054
      %v1281 = vmul.f32 %v1277, 1.0614054
      %v1282 = vsub.f32 %v1278, 1.4531521
      %v1283 = vsub.f32 %v1279, 1.4531521
      %v1284 = vsub.f32 %v1280, 1.4531521
      %v1285 = vsub.f32 %v1281, 1.4531521
      %v1286 = vmul.f32 %v1282, %v1271
      %v1287 = vmul.f32 %v1283, %v1273
      %v1288 = vmul.f32 %v1284, %v1275
      %v1289 = vmul.f32 %v1285, %v1277
      %v1290 = vadd.f32 %v1286, 1.4214138
      %v1291 = vadd.f32 %v1287, 1.4214138
      %v1292 = vadd.f32 %v1288, 1.4214138
      %v1293 = vadd.f32 %v1289, 1.4214138
      %v1294 = vmul.f32 %v1290, %v1271
      %v1295 = vmul.f32 %v1291, %v1273
      %v1296 = vmul.f32 %v1292, %v1275
      %v1297 = vmul.f32 %v1293, %v1277
      %v1298 = vsub.f32 %v1294, 0.28449672
      %v1299 = vsub.f32 %v1295, 0.28449672
      %v1300 = vsub.f32 %v1296, 0.28449672
      %v1301 = vsub.f32 %v1297, 0.28449672
      %v1302 = vmul.f32 %v1298, %v1271
      %v1303 = vmul.f32 %v1299, %v1273
      %v1304 = vmul.f32 %v1300, %v1275
      %v1305 = vmul.f32 %v1301, %v1277
      %v1306 = vadd.f32 %v1302, 0.2548296
      %v1307 = vadd.f32 %v1303, 0.2548296
      %v1308 = vadd.f32 %v1304, 0.2548296
      %v1309 = vadd.f32 %v1305, 0.2548296
      %v1310 = vmul.f32 %v1306, %v1271
      %v1311 = vmul.f32 %v1307, %v1273
      %v1312 = vmul.f32 %v1308, %v1275
      %v1313 = vmul.f32 %v1309, %v1277
      %v1314 = vsub.f32 0.0, %v1258
      %v1315 = vsub.f32 0.0, %v1259
      %v1316 = vsub.f32 0.0, %v1260
      %v1317 = vsub.f32 0.0, %v1261
      %v1318 = vmul.f32 %v1314, %v1258
      %v1319 = vmul.f32 %v1315, %v1259
      %v1320 = vmul.f32 %v1316, %v1260
      %v1321 = vmul.f32 %v1317, %v1261
      %v1322 = vmul.f32 %v1318, 1.442695
      %v1323 = vpow.pop %v1322
      %v1324 = vmul.f32 %v1319, 1.442695
      %v1325 = vpow.pop %v1324
      %v1326 = vmul.f32 %v1320, 1.442695
      %v1327 = vpow.pop %v1326
      %v1328 = vmul.f32 %v1321, 1.442695
      %v1329 = vpow.pop %v1328
      %v1330 = vmul.f32 %v1310, %v1323
      %v1331 = vmul.f32 %v1311, %v1325
      %v1332 = vmul.f32 %v1312, %v1327
      %v1333 = vmul.f32 %v1313, %v1329
      %v1334 = vsub.f32 1.0, %v1330
      %v1335 = vsub.f32 1.0, %v1331
      %v1336 = vsub.f32 1.0, %v1332
      %v1337 = vsub.f32 1.0, %v1333
      %vm1338 = vcmp.ge.f32.partialorder %v1254, 0.0
      %vm1339 = vcmp.ge.f32.partialorder %v1255, 0.0
      %vm1340 = vcmp.ge.f32.partialorder %v1256, 0.0
      %vm1341 = vcmp.ge.f32.partialorder %v1257, 0.0
      %v1342 = vsub.f32 0.0, %v1334
      %v1343 = vsub.f32 0.0, %v1335
      %v1344 = vsub.f32 0.0, %v1336
      %v1345 = vsub.f32 0.0, %v1337
      %v1346 = vsel %vm1338, %v1334, %v1342
      %v1347 = vsel %vm1339, %v1335, %v1343
      %v1348 = vsel %vm1340, %v1336, %v1344
      %v1349 = vsel %vm1341, %v1337, %v1345
      %v1350 = vadd.f32 %v1346, 1.0
      %v1351 = vadd.f32 %v1347, 1.0
      %v1352 = vadd.f32 %v1348, 1.0
      %v1353 = vadd.f32 %v1349, 1.0
      %v1354 = vmul.f32 %v1250, %v1350
      %v1355 = vmul.f32 %v1251, %v1351
      %v1356 = vmul.f32 %v1252, %v1352
      %v1357 = vmul.f32 %v1253, %v1353
      %v1358 = vld [vmem:[%s13] sm:$0xff]
      %v1359 = vld [vmem:[%s13 + $0x8] sm:$0xff]
      %v1360 = vld [vmem:[%s13 + $0x10] sm:$0xff]
      %v1361 = vld [vmem:[%s13 + $0x18] sm:$0xff]
      %v1362 = vld [vmem:[%s13 + $0x20] sm:$0xff]
      %v1363 = vld [vmem:[%s13 + $0x28] sm:$0xff]
      %v1364 = vld [vmem:[%s13 + $0x30] sm:$0xff]
      %v1365 = vld [vmem:[%s13 + $0x38] sm:$0xff]
      %v1366 = vld [vmem:[%s13 + $0x40] sm:$0xff]
      %v1367 = vld [vmem:[%s13 + $0x48] sm:$0xff]
      %v1368 = vld [vmem:[%s13 + $0x50] sm:$0xff]
      %v1369 = vld [vmem:[%s13 + $0x58] sm:$0xff]
      %v1370 = vld [vmem:[%s13 + $0x60] sm:$0xff]
      %v1371 = vld [vmem:[%s13 + $0x68] sm:$0xff]
      %v1372 = vld [vmem:[%s13 + $0x70] sm:$0xff]
      %v1373 = vld [vmem:[%s13 + $0x78] sm:$0xff]
      %v1374 = vld [vmem:[%s13 + $0x80] sm:$0xff]
      %v1375 = vld [vmem:[%s13 + $0x88] sm:$0xff]
      %v1376 = vld [vmem:[%s13 + $0x90] sm:$0xff]
      %v1377 = vld [vmem:[%s13 + $0x98] sm:$0xff]
      %v1378 = vld [vmem:[%s13 + $0xa0] sm:$0xff]
      %v1379 = vld [vmem:[%s13 + $0xa8] sm:$0xff]
      %v1380 = vld [vmem:[%s13 + $0xb0] sm:$0xff]
      %v1381 = vld [vmem:[%s13 + $0xb8] sm:$0xff]
      %v1382 = vld [vmem:[%s13 + $0xc0] sm:$0xff]
      %v1383 = vld [vmem:[%s13 + $0xc8] sm:$0xff]
      %v1384 = vld [vmem:[%s13 + $0xd0] sm:$0xff]
      %v1385 = vld [vmem:[%s13 + $0xd8] sm:$0xff]
      %v1386 = vld [vmem:[%s13 + $0xe0] sm:$0xff]
      %v1387 = vld [vmem:[%s13 + $0xe8] sm:$0xff]
      %v1388 = vld [vmem:[%s13 + $0xf0] sm:$0xff]
      %v1389 = vld [vmem:[%s13 + $0xf8] sm:$0xff]
      %v1390 = vld [vmem:[%s13 + $0x100] sm:$0xff]
      %v1391 = vld [vmem:[%s13 + $0x108] sm:$0xff]
      %v1392 = vld [vmem:[%s13 + $0x110] sm:$0xff]
      %v1393 = vld [vmem:[%s13 + $0x118] sm:$0xff]
      %v1394 = vld [vmem:[%s13 + $0x120] sm:$0xff]
      %v1395 = vld [vmem:[%s13 + $0x128] sm:$0xff]
      %v1396 = vld [vmem:[%s13 + $0x130] sm:$0xff]
      %v1397 = vld [vmem:[%s13 + $0x138] sm:$0xff]
      %v1398 = vld [vmem:[%s13 + $0x140] sm:$0xff]
      %v1399 = vld [vmem:[%s13 + $0x148] sm:$0xff]
      %v1400 = vld [vmem:[%s13 + $0x150] sm:$0xff]
      %v1401 = vld [vmem:[%s13 + $0x158] sm:$0xff]
      %v1402 = vld [vmem:[%s13 + $0x160] sm:$0xff]
      %v1403 = vld [vmem:[%s13 + $0x168] sm:$0xff]
      %v1404 = vld [vmem:[%s13 + $0x170] sm:$0xff]
      %v1405 = vld [vmem:[%s13 + $0x178] sm:$0xff]
      %v1406 = vld [vmem:[%s13 + $0x180] sm:$0xff]
      %v1407 = vld [vmem:[%s13 + $0x188] sm:$0xff]
      %v1408 = vld [vmem:[%s13 + $0x190] sm:$0xff]
      %v1409 = vld [vmem:[%s13 + $0x198] sm:$0xff]
      %v1410 = vld [vmem:[%s13 + $0x1a0] sm:$0xff]
      %v1411 = vld [vmem:[%s13 + $0x1a8] sm:$0xff]
      %v1412 = vld [vmem:[%s13 + $0x1b0] sm:$0xff]
      %v1413 = vld [vmem:[%s13 + $0x1b8] sm:$0xff]
      %v1414 = vld [vmem:[%s13 + $0x1c0] sm:$0xff]
      %v1415 = vld [vmem:[%s13 + $0x1c8] sm:$0xff]
      %v1416 = vld [vmem:[%s13 + $0x1d0] sm:$0xff]
      %v1417 = vld [vmem:[%s13 + $0x1d8] sm:$0xff]
      %v1418 = vld [vmem:[%s13 + $0x1e0] sm:$0xff]
      %v1419 = vld [vmem:[%s13 + $0x1e8] sm:$0xff]
      %v1420 = vld [vmem:[%s13 + $0x1f0] sm:$0xff]
      %v1421 = vld [vmem:[%s13 + $0x1f8] sm:$0xff]
      %v1422 = vld [vmem:[%s15] sm:$0x3]
      %v1424 = vlaneseq
      %v1425 = vshrl.u32 %v1424, 7
      %v1426 = vsub.s32 0, %v1425
      %v1427 = vrot.slane %v1422, %v1426
      %v1428 = vlaneseq
      %v1429 = vshrl.u32 %v1428, 7
      %v1430 = vsub.s32 1, %v1429
      %v1431 = vrot.slane %v1422, %v1430
      %1434 = vmatprep.subr.mxu0 %v1389
      %1435 = vmatpush1.msra.mxu0 %v1388
      %1436 = vmatprep.subr.mxu0 %v1387
      %1437 = vmatpush1.msra.mxu0 %v1386
      %1438 = vmatprep.subr.mxu0 %v1385
      %1439 = vmatpush1.msra.mxu0 %v1384
      %1440 = vmatprep.subr.mxu0 %v1383
      %1441 = vmatpush1.msra.mxu0 %v1382
      %1442 = vmatprep.subr.mxu0 %v1381
      %1443 = vmatpush1.msra.mxu0 %v1380
      %1444 = vmatprep.subr.mxu0 %v1379
      %1445 = vmatpush1.msra.mxu0 %v1378
      %1446 = vmatprep.subr.mxu0 %v1377
      %1447 = vmatpush1.msra.mxu0 %v1376
      %1448 = vmatprep.subr.mxu0 %v1375
      %1449 = vmatpush1.msra.mxu0 %v1374
      %1450 = vmatprep.subr.mxu0 %v1373
      %1451 = vmatpush1.msra.mxu0 %v1372
      %1452 = vmatprep.subr.mxu0 %v1371
      %1453 = vmatpush1.msra.mxu0 %v1370
      %1454 = vmatprep.subr.mxu0 %v1369
      %1455 = vmatpush1.msra.mxu0 %v1368
      %1456 = vmatprep.subr.mxu0 %v1367
      %1457 = vmatpush1.msra.mxu0 %v1366
      %1458 = vmatprep.subr.mxu0 %v1365
      %1459 = vmatpush1.msra.mxu0 %v1364
      %1460 = vmatprep.subr.mxu0 %v1363
      %1461 = vmatpush1.msra.mxu0 %v1362
      %1462 = vmatprep.subr.mxu0 %v1361
      %1463 = vmatpush1.msra.mxu0 %v1360
      %1464 = vmatprep.subr.mxu0 %v1359
      %1465 = vmatpush1.msra.mxu0 %v1358
      %1466 = vmatprep.subr.mxu0 %v1421
      %1467 = vmatpush2.msra.mxu0 %v1420
      %1468 = vmatprep.subr.mxu0 %v1419
      %1469 = vmatpush2.msra.mxu0 %v1418
      %1470 = vmatprep.subr.mxu0 %v1417
      %1471 = vmatpush2.msra.mxu0 %v1416
      %1472 = vmatprep.subr.mxu0 %v1415
      %1473 = vmatpush2.msra.mxu0 %v1414
      %1474 = vmatprep.subr.mxu0 %v1413
      %1475 = vmatpush2.msra.mxu0 %v1412
      %1476 = vmatprep.subr.mxu0 %v1411
      %1477 = vmatpush2.msra.mxu0 %v1410
      %1478 = vmatprep.subr.mxu0 %v1409
      %1479 = vmatpush2.msra.mxu0 %v1408
      %1480 = vmatprep.subr.mxu0 %v1407
      %1481 = vmatpush2.msra.mxu0 %v1406
      %1482 = vmatprep.subr.mxu0 %v1405
      %1483 = vmatpush2.msra.mxu0 %v1404
      %1484 = vmatprep.subr.mxu0 %v1403
      %1485 = vmatpush2.msra.mxu0 %v1402
      %1486 = vmatprep.subr.mxu0 %v1401
      %1487 = vmatpush2.msra.mxu0 %v1400
      %1488 = vmatprep.subr.mxu0 %v1399
      %1489 = vmatpush2.msra.mxu0 %v1398
      %1490 = vmatprep.subr.mxu0 %v1397
      %1491 = vmatpush2.msra.mxu0 %v1396
      %1492 = vmatprep.subr.mxu0 %v1395
      %1493 = vmatpush2.msra.mxu0 %v1394
      %1494 = vmatprep.subr.mxu0 %v1393
      %1495 = vmatpush2.msra.mxu0 %v1392
      %1496 = vmatprep.subr.mxu0 %v1391
      %1497 = vmatpush2.msra.mxu0 %v1390
      %1498 = vmatprep.mubr.f32.mxu0 %v1355
      %1499 = vmatmul.mubr.f32.gmra.mxu0 %v1354
      %v1500 = vpop.f32.mrf.mxu0
      %v1501 = vadd.f32 %v1427, %v1500
      %v1502 = vpop.f32.mrf.mxu0
      %v1503 = vadd.f32 %v1431, %v1502
      %1504 = vdwg.mxu0
      %v1505 = vld [vmem:[%s14] sm:$0xff]
      %v1506 = vld [vmem:[%s14 + $0x8] sm:$0xff]
      %v1507 = vld [vmem:[%s14 + $0x10] sm:$0xff]
      %v1508 = vld [vmem:[%s14 + $0x18] sm:$0xff]
      %v1509 = vld [vmem:[%s14 + $0x20] sm:$0xff]
      %v1510 = vld [vmem:[%s14 + $0x28] sm:$0xff]
      %v1511 = vld [vmem:[%s14 + $0x30] sm:$0xff]
      %v1512 = vld [vmem:[%s14 + $0x38] sm:$0xff]
      %v1513 = vld [vmem:[%s14 + $0x40] sm:$0xff]
      %v1514 = vld [vmem:[%s14 + $0x48] sm:$0xff]
      %v1515 = vld [vmem:[%s14 + $0x50] sm:$0xff]
      %v1516 = vld [vmem:[%s14 + $0x58] sm:$0xff]
      %v1517 = vld [vmem:[%s14 + $0x60] sm:$0xff]
      %v1518 = vld [vmem:[%s14 + $0x68] sm:$0xff]
      %v1519 = vld [vmem:[%s14 + $0x70] sm:$0xff]
      %v1520 = vld [vmem:[%s14 + $0x78] sm:$0xff]
      %v1521 = vld [vmem:[%s14 + $0x80] sm:$0xff]
      %v1522 = vld [vmem:[%s14 + $0x88] sm:$0xff]
      %v1523 = vld [vmem:[%s14 + $0x90] sm:$0xff]
      %v1524 = vld [vmem:[%s14 + $0x98] sm:$0xff]
      %v1525 = vld [vmem:[%s14 + $0xa0] sm:$0xff]
      %v1526 = vld [vmem:[%s14 + $0xa8] sm:$0xff]
      %v1527 = vld [vmem:[%s14 + $0xb0] sm:$0xff]
      %v1528 = vld [vmem:[%s14 + $0xb8] sm:$0xff]
      %v1529 = vld [vmem:[%s14 + $0xc0] sm:$0xff]
      %v1530 = vld [vmem:[%s14 + $0xc8] sm:$0xff]
      %v1531 = vld [vmem:[%s14 + $0xd0] sm:$0xff]
      %v1532 = vld [vmem:[%s14 + $0xd8] sm:$0xff]
      %v1533 = vld [vmem:[%s14 + $0xe0] sm:$0xff]
      %v1534 = vld [vmem:[%s14 + $0xe8] sm:$0xff]
      %v1535 = vld [vmem:[%s14 + $0xf0] sm:$0xff]
      %v1536 = vld [vmem:[%s14 + $0xf8] sm:$0xff]
      %v1537 = vld [vmem:[%s14 + $0x100] sm:$0xff]
      %v1538 = vld [vmem:[%s14 + $0x108] sm:$0xff]
      %v1539 = vld [vmem:[%s14 + $0x110] sm:$0xff]
      %v1540 = vld [vmem:[%s14 + $0x118] sm:$0xff]
      %v1541 = vld [vmem:[%s14 + $0x120] sm:$0xff]
      %v1542 = vld [vmem:[%s14 + $0x128] sm:$0xff]
      %v1543 = vld [vmem:[%s14 + $0x130] sm:$0xff]
      %v1544 = vld [vmem:[%s14 + $0x138] sm:$0xff]
      %v1545 = vld [vmem:[%s14 + $0x140] sm:$0xff]
      %v1546 = vld [vmem:[%s14 + $0x148] sm:$0xff]
      %v1547 = vld [vmem:[%s14 + $0x150] sm:$0xff]
      %v1548 = vld [vmem:[%s14 + $0x158] sm:$0xff]
      %v1549 = vld [vmem:[%s14 + $0x160] sm:$0xff]
      %v1550 = vld [vmem:[%s14 + $0x168] sm:$0xff]
      %v1551 = vld [vmem:[%s14 + $0x170] sm:$0xff]
      %v1552 = vld [vmem:[%s14 + $0x178] sm:$0xff]
      %v1553 = vld [vmem:[%s14 + $0x180] sm:$0xff]
      %v1554 = vld [vmem:[%s14 + $0x188] sm:$0xff]
      %v1555 = vld [vmem:[%s14 + $0x190] sm:$0xff]
      %v1556 = vld [vmem:[%s14 + $0x198] sm:$0xff]
      %v1557 = vld [vmem:[%s14 + $0x1a0] sm:$0xff]
      %v1558 = vld [vmem:[%s14 + $0x1a8] sm:$0xff]
      %v1559 = vld [vmem:[%s14 + $0x1b0] sm:$0xff]
      %v1560 = vld [vmem:[%s14 + $0x1b8] sm:$0xff]
      %v1561 = vld [vmem:[%s14 + $0x1c0] sm:$0xff]
      %v1562 = vld [vmem:[%s14 + $0x1c8] sm:$0xff]
      %v1563 = vld [vmem:[%s14 + $0x1d0] sm:$0xff]
      %v1564 = vld [vmem:[%s14 + $0x1d8] sm:$0xff]
      %v1565 = vld [vmem:[%s14 + $0x1e0] sm:$0xff]
      %v1566 = vld [vmem:[%s14 + $0x1e8] sm:$0xff]
      %v1567 = vld [vmem:[%s14 + $0x1f0] sm:$0xff]
      %v1568 = vld [vmem:[%s14 + $0x1f8] sm:$0xff]
      %v1569 = vld [vmem:[%s16] sm:$0x3]
      %v1571 = vlaneseq
      %v1572 = vshrl.u32 %v1571, 7
      %v1573 = vsub.s32 0, %v1572
      %v1574 = vrot.slane %v1569, %v1573
      %v1575 = vlaneseq
      %v1576 = vshrl.u32 %v1575, 7
      %v1577 = vsub.s32 1, %v1576
      %v1578 = vrot.slane %v1569, %v1577
      %1581 = vmatprep.subr.mxu0 %v1536
      %1582 = vmatpush1.msra.mxu0 %v1535
      %1583 = vmatprep.subr.mxu0 %v1534
      %1584 = vmatpush1.msra.mxu0 %v1533
      %1585 = vmatprep.subr.mxu0 %v1532
      %1586 = vmatpush1.msra.mxu0 %v1531
      %1587 = vmatprep.subr.mxu0 %v1530
      %1588 = vmatpush1.msra.mxu0 %v1529
      %1589 = vmatprep.subr.mxu0 %v1528
      %1590 = vmatpush1.msra.mxu0 %v1527
      %1591 = vmatprep.subr.mxu0 %v1526
      %1592 = vmatpush1.msra.mxu0 %v1525
      %1593 = vmatprep.subr.mxu0 %v1524
      %1594 = vmatpush1.msra.mxu0 %v1523
      %1595 = vmatprep.subr.mxu0 %v1522
      %1596 = vmatpush1.msra.mxu0 %v1521
      %1597 = vmatprep.subr.mxu0 %v1520
      %1598 = vmatpush1.msra.mxu0 %v1519
      %1599 = vmatprep.subr.mxu0 %v1518
      %1600 = vmatpush1.msra.mxu0 %v1517
      %1601 = vmatprep.subr.mxu0 %v1516
      %1602 = vmatpush1.msra.mxu0 %v1515
      %1603 = vmatprep.subr.mxu0 %v1514
      %1604 = vmatpush1.msra.mxu0 %v1513
      %1605 = vmatprep.subr.mxu0 %v1512
      %1606 = vmatpush1.msra.mxu0 %v1511
      %1607 = vmatprep.subr.mxu0 %v1510
      %1608 = vmatpush1.msra.mxu0 %v1509
      %1609 = vmatprep.subr.mxu0 %v1508
      %1610 = vmatpush1.msra.mxu0 %v1507
      %1611 = vmatprep.subr.mxu0 %v1506
      %1612 = vmatpush1.msra.mxu0 %v1505
      %1613 = vmatprep.subr.mxu0 %v1568
      %1614 = vmatpush2.msra.mxu0 %v1567
      %1615 = vmatprep.subr.mxu0 %v1566
      %1616 = vmatpush2.msra.mxu0 %v1565
      %1617 = vmatprep.subr.mxu0 %v1564
      %1618 = vmatpush2.msra.mxu0 %v1563
      %1619 = vmatprep.subr.mxu0 %v1562
      %1620 = vmatpush2.msra.mxu0 %v1561
      %1621 = vmatprep.subr.mxu0 %v1560
      %1622 = vmatpush2.msra.mxu0 %v1559
      %1623 = vmatprep.subr.mxu0 %v1558
      %1624 = vmatpush2.msra.mxu0 %v1557
      %1625 = vmatprep.subr.mxu0 %v1556
      %1626 = vmatpush2.msra.mxu0 %v1555
      %1627 = vmatprep.subr.mxu0 %v1554
      %1628 = vmatpush2.msra.mxu0 %v1553
      %1629 = vmatprep.subr.mxu0 %v1552
      %1630 = vmatpush2.msra.mxu0 %v1551
      %1631 = vmatprep.subr.mxu0 %v1550
      %1632 = vmatpush2.msra.mxu0 %v1549
      %1633 = vmatprep.subr.mxu0 %v1548
      %1634 = vmatpush2.msra.mxu0 %v1547
      %1635 = vmatprep.subr.mxu0 %v1546
      %1636 = vmatpush2.msra.mxu0 %v1545
      %1637 = vmatprep.subr.mxu0 %v1544
      %1638 = vmatpush2.msra.mxu0 %v1543
      %1639 = vmatprep.subr.mxu0 %v1542
      %1640 = vmatpush2.msra.mxu0 %v1541
      %1641 = vmatprep.subr.mxu0 %v1540
      %1642 = vmatpush2.msra.mxu0 %v1539
      %1643 = vmatprep.subr.mxu0 %v1538
      %1644 = vmatpush2.msra.mxu0 %v1537
      %1645 = vmatprep.mubr.f32.mxu0 %v1357
      %1646 = vmatmul.mubr.f32.gmra.mxu0 %v1356
      %v1647 = vpop.f32.mrf.mxu0
      %v1648 = vadd.f32 %v1574, %v1647
      %v1649 = vpop.f32.mrf.mxu0
      %v1650 = vadd.f32 %v1578, %v1649
      %1651 = vdwg.mxu0
      %v1652 = vld [vmem:[%s17] sm:$0xff]
      %v1653 = vld [vmem:[%s18] sm:$0xff]
      %v1655 = vsel %vm811, %v1653, 0
      %1657 = vmatprep.subr.mxu0 0.0
      %1658 = vmatpush1.msra.mxu0 0.0
      %1659 = vmatprep.subr.mxu0 0.0
      %1660 = vmatpush1.msra.mxu0 0.0
      %1661 = vmatprep.subr.mxu0 0.0
      %1662 = vmatpush1.msra.mxu0 0.0
      %1663 = vmatprep.subr.mxu0 0.0
      %1664 = vmatpush1.msra.mxu0 0.0
      %1665 = vmatprep.subr.mxu0 0.0
      %1666 = vmatpush1.msra.mxu0 0.0
      %1667 = vmatprep.subr.mxu0 0.0
      %1668 = vmatpush1.msra.mxu0 0.0
      %1669 = vmatprep.subr.mxu0 0.0
      %1670 = vmatpush1.msra.mxu0 0.0
      %1671 = vmatprep.subr.mxu0 0.0
      %1672 = vmatpush1.msra.mxu0 0.0
      %1673 = vmatprep.subr.mxu0 0.0
      %1674 = vmatpush1.msra.mxu0 0.0
      %1675 = vmatprep.subr.mxu0 0.0
      %1676 = vmatpush1.msra.mxu0 0.0
      %1677 = vmatprep.subr.mxu0 0.0
      %1678 = vmatpush1.msra.mxu0 0.0
      %1679 = vmatprep.subr.mxu0 0.0
      %1680 = vmatpush1.msra.mxu0 0.0
      %1681 = vmatprep.subr.mxu0 0.0
      %1682 = vmatpush1.msra.mxu0 0.0
      %1683 = vmatprep.subr.mxu0 0.0
      %1684 = vmatpush1.msra.mxu0 0.0
      %1685 = vmatprep.subr.mxu0 0.0
      %1686 = vmatpush1.msra.mxu0 0.0
      %1687 = vmatprep.subr.mxu0 %v1650
      %1688 = vmatpush1.msra.mxu0 %v1648
      %1689 = vmatprep.subr.mxu0 0.0
      %1690 = vmatpush2.msra.mxu0 0.0
      %1691 = vmatprep.subr.mxu0 0.0
      %1692 = vmatpush2.msra.mxu0 0.0
      %1693 = vmatprep.subr.mxu0 0.0
      %1694 = vmatpush2.msra.mxu0 0.0
      %1695 = vmatprep.subr.mxu0 0.0
      %1696 = vmatpush2.msra.mxu0 0.0
      %1697 = vmatprep.subr.mxu0 0.0
      %1698 = vmatpush2.msra.mxu0 0.0
      %1699 = vmatprep.subr.mxu0 0.0
      %1700 = vmatpush2.msra.mxu0 0.0
      %1701 = vmatprep.subr.mxu0 0.0
      %1702 = vmatpush2.msra.mxu0 0.0
      %1703 = vmatprep.subr.mxu0 0.0
      %1704 = vmatpush2.msra.mxu0 0.0
      %1705 = vmatprep.subr.mxu0 0.0
      %1706 = vmatpush2.msra.mxu0 0.0
      %1707 = vmatprep.subr.mxu0 0.0
      %1708 = vmatpush2.msra.mxu0 0.0
      %1709 = vmatprep.subr.mxu0 0.0
      %1710 = vmatpush2.msra.mxu0 0.0
      %1711 = vmatprep.subr.mxu0 0.0
      %1712 = vmatpush2.msra.mxu0 0.0
      %1713 = vmatprep.subr.mxu0 0.0
      %1714 = vmatpush2.msra.mxu0 0.0
      %1715 = vmatprep.subr.mxu0 0.0
      %1716 = vmatpush2.msra.mxu0 0.0
      %1717 = vmatprep.subr.mxu0 0.0
      %1718 = vmatpush2.msra.mxu0 0.0
      %1719 = vmatprep.subr.mxu0 0.0
      %1720 = vmatpush2.msra.mxu0 0.0
      %1721 = vmatprep.mubr.f32.mxu0 0.0
      %1722 = vmatmul.mubr.f32.gmra.mxu0 %v1655
      %v1723 = vpop.f32.mrf.mxu0
      %v1724 = vadd.f32 0.0, %v1723
      %v1725 = vpop.f32.mrf.mxu0
      %v1726 = vadd.f32 0.0, %v1725
      %1727 = vdwg.mxu0
      %v1729 = vsel %vm811, %v1652, 0
      %1731 = vmatprep.subr.mxu0 0.0
      %1732 = vmatpush1.msra.mxu0 0.0
      %1733 = vmatprep.subr.mxu0 0.0
      %1734 = vmatpush1.msra.mxu0 0.0
      %1735 = vmatprep.subr.mxu0 0.0
      %1736 = vmatpush1.msra.mxu0 0.0
      %1737 = vmatprep.subr.mxu0 0.0
      %1738 = vmatpush1.msra.mxu0 0.0
      %1739 = vmatprep.subr.mxu0 0.0
      %1740 = vmatpush1.msra.mxu0 0.0
      %1741 = vmatprep.subr.mxu0 0.0
      %1742 = vmatpush1.msra.mxu0 0.0
      %1743 = vmatprep.subr.mxu0 0.0
      %1744 = vmatpush1.msra.mxu0 0.0
      %1745 = vmatprep.subr.mxu0 0.0
      %1746 = vmatpush1.msra.mxu0 0.0
      %1747 = vmatprep.subr.mxu0 0.0
      %1748 = vmatpush1.msra.mxu0 0.0
      %1749 = vmatprep.subr.mxu0 0.0
      %1750 = vmatpush1.msra.mxu0 0.0
      %1751 = vmatprep.subr.mxu0 0.0
      %1752 = vmatpush1.msra.mxu0 0.0
      %1753 = vmatprep.subr.mxu0 0.0
      %1754 = vmatpush1.msra.mxu0 0.0
      %1755 = vmatprep.subr.mxu0 0.0
      %1756 = vmatpush1.msra.mxu0 0.0
      %1757 = vmatprep.subr.mxu0 0.0
      %1758 = vmatpush1.msra.mxu0 0.0
      %1759 = vmatprep.subr.mxu0 0.0
      %1760 = vmatpush1.msra.mxu0 0.0
      %1761 = vmatprep.subr.mxu0 %v1503
      %1762 = vmatpush1.msra.mxu0 %v1501
      %1763 = vmatprep.subr.mxu0 0.0
      %1764 = vmatpush2.msra.mxu0 0.0
      %1765 = vmatprep.subr.mxu0 0.0
      %1766 = vmatpush2.msra.mxu0 0.0
      %1767 = vmatprep.subr.mxu0 0.0
      %1768 = vmatpush2.msra.mxu0 0.0
      %1769 = vmatprep.subr.mxu0 0.0
      %1770 = vmatpush2.msra.mxu0 0.0
      %1771 = vmatprep.subr.mxu0 0.0
      %1772 = vmatpush2.msra.mxu0 0.0
      %1773 = vmatprep.subr.mxu0 0.0
      %1774 = vmatpush2.msra.mxu0 0.0
      %1775 = vmatprep.subr.mxu0 0.0
      %1776 = vmatpush2.msra.mxu0 0.0
      %1777 = vmatprep.subr.mxu0 0.0
      %1778 = vmatpush2.msra.mxu0 0.0
      %1779 = vmatprep.subr.mxu0 0.0
      %1780 = vmatpush2.msra.mxu0 0.0
      %1781 = vmatprep.subr.mxu0 0.0
      %1782 = vmatpush2.msra.mxu0 0.0
      %1783 = vmatprep.subr.mxu0 0.0
      %1784 = vmatpush2.msra.mxu0 0.0
      %1785 = vmatprep.subr.mxu0 0.0
      %1786 = vmatpush2.msra.mxu0 0.0
      %1787 = vmatprep.subr.mxu0 0.0
      %1788 = vmatpush2.msra.mxu0 0.0
      %1789 = vmatprep.subr.mxu0 0.0
      %1790 = vmatpush2.msra.mxu0 0.0
      %1791 = vmatprep.subr.mxu0 0.0
      %1792 = vmatpush2.msra.mxu0 0.0
      %1793 = vmatprep.subr.mxu0 0.0
      %1794 = vmatpush2.msra.mxu0 0.0
      %1795 = vmatprep.mubr.f32.mxu0 0.0
      %1796 = vmatmul.mubr.f32.gmra.mxu0 %v1729
      %v1797 = vpop.f32.mrf.mxu0
      %v1798 = vadd.f32 %v1724, %v1797
      %v1799 = vpop.f32.mrf.mxu0
      %v1800 = vadd.f32 %v1726, %v1799
      %1801 = vdwg.mxu0
      %v1802 = vld [vmem:[%s19] sm:$0xff]
      %1804 = vset.pattern.permute.xlu0 0
      %1805 = vperm.xlu0 %1804, %v1802
      %v1806 = vpop.permute.xlu0 %1805
      %v1808 = vadd.f32 %v1798, %v1806
      %v1809 = vadd.f32 %v1800, %v1806
      %s1810 = scalar_lea.vmem %s9, 16
      %v1811 = vld [vmem:[%s1810] sm:$0xff]
      %v1812 = vld [vmem:[%s1810 + $0x8] sm:$0xff]
      %s1813 = scalar_lea.vmem %s10, 16
      %v1814 = vld [vmem:[%s1813] sm:$0xff]
      %v1815 = vld [vmem:[%s1813 + $0x8] sm:$0xff]
      %v1816 = vadd.f32 %v1105, %v1106
      %1817 = vadd.xlane.f32.xlu0 %v1816
      %v1818 = vpop.xlane.xlu0 %1817
      %v1819 = vrot.slane %v1818, 4
      %v1820 = vadd.f32 %v1818, %v1819
      %v1821 = vrot.slane %v1820, 2
      %v1822 = vadd.f32 %v1820, %v1821
      %v1823 = vrot.slane %v1822, 1
      %v1824 = vadd.f32 %v1822, %v1823
      %s1825 = vtos %v1824
      %v1826 = vrcp.pop 2048.0
      %s1827 = vtos %v1826
      %s1828 = smul.f32 %s1825, %s1827
      %v1829 = vstv %s1828
      %v1830 = vsub.f32 %v1105, %v1829
      %v1831 = vsub.f32 %v1106, %v1829
      %v1832 = vmul.f32 %v1830, %v1830
      %v1833 = vmul.f32 %v1831, %v1831
      %v1834 = vadd.f32 %v1832, %v1833
      %1835 = vadd.xlane.f32.xlu0 %v1834
      %v1836 = vpop.xlane.xlu0 %1835
      %v1837 = vrot.slane %v1836, 4
      %v1838 = vadd.f32 %v1836, %v1837
      %v1839 = vrot.slane %v1838, 2
      %v1840 = vadd.f32 %v1838, %v1839
      %v1841 = vrot.slane %v1840, 1
      %v1842 = vadd.f32 %v1840, %v1841
      %s1843 = vtos %v1842
      %v1844 = vrcp.pop 2048.0
      %s1845 = vtos %v1844
      %s1846 = smul.f32 %s1843, %s1845
      %s1847 = sadd.f32 %s1846, 1e-05
      %v1848 = vstv %s1847
      %v1849 = vrsqrt.pop %v1848
      %s1850 = vtos %v1849
      %v1851 = vstv %s1850
      %v1852 = vmul.f32 %v1830, %v1851
      %v1853 = vmul.f32 %v1831, %v1851
      %v1854 = vmul.f32 %v1852, %v1811
      %v1855 = vmul.f32 %v1853, %v1812
      %v1856 = vadd.f32 %v1854, %v1814
      %v1857 = vadd.f32 %v1855, %v1815
      %s1858 = scalar_lea.vmem %s11, 16
      %v1859 = vld [vmem:[%s1858] sm:$0xff]
      %v1860 = vld [vmem:[%s1858 + $0x8] sm:$0xff]
      %s1861 = scalar_lea.vmem %s12, 16
      %v1862 = vld [vmem:[%s1861] sm:$0xff]
      %v1863 = vld [vmem:[%s1861 + $0x8] sm:$0xff]
      %1865 = vset.pattern.permute.xlu0 0
      %1866 = vperm.xlu0 %1865, %v1862
      %v1867 = vpop.permute.xlu0 %1866
      %1870 = vset.pattern.permute.xlu0 0
      %1871 = vperm.xlu0 %1870, %v1863
      %v1872 = vpop.permute.xlu0 %1871
      %v1875 = vsel %vm811, %v1859, 0
      %v1878 = vsel %vm811, %v1860, 0
      %1880 = vmatprep.subr.mxu0 0.0
      %1881 = vmatpush1.msra.mxu0 0.0
      %1882 = vmatprep.subr.mxu0 0.0
      %1883 = vmatpush1.msra.mxu0 0.0
      %1884 = vmatprep.subr.mxu0 0.0
      %1885 = vmatpush1.msra.mxu0 0.0
      %1886 = vmatprep.subr.mxu0 0.0
      %1887 = vmatpush1.msra.mxu0 0.0
      %1888 = vmatprep.subr.mxu0 0.0
      %1889 = vmatpush1.msra.mxu0 0.0
      %1890 = vmatprep.subr.mxu0 0.0
      %1891 = vmatpush1.msra.mxu0 0.0
      %1892 = vmatprep.subr.mxu0 0.0
      %1893 = vmatpush1.msra.mxu0 0.0
      %1894 = vmatprep.subr.mxu0 0.0
      %1895 = vmatpush1.msra.mxu0 0.0
      %1896 = vmatprep.subr.mxu0 0.0
      %1897 = vmatpush1.msra.mxu0 0.0
      %1898 = vmatprep.subr.mxu0 0.0
      %1899 = vmatpush1.msra.mxu0 0.0
      %1900 = vmatprep.subr.mxu0 0.0
      %1901 = vmatpush1.msra.mxu0 0.0
      %1902 = vmatprep.subr.mxu0 0.0
      %1903 = vmatpush1.msra.mxu0 0.0
      %1904 = vmatprep.subr.mxu0 0.0
      %1905 = vmatpush1.msra.mxu0 0.0
      %1906 = vmatprep.subr.mxu0 0.0
      %1907 = vmatpush1.msra.mxu0 0.0
      %1908 = vmatprep.subr.mxu0 0.0
      %1909 = vmatpush1.msra.mxu0 0.0
      %1910 = vmatprep.subr.mxu0 %v1857
      %1911 = vmatpush1.msra.mxu0 %v1856
      %1912 = vmatprep.subr.mxu0 0.0
      %1913 = vmatpush2.msra.mxu0 0.0
      %1914 = vmatprep.subr.mxu0 0.0
      %1915 = vmatpush2.msra.mxu0 0.0
      %1916 = vmatprep.subr.mxu0 0.0
      %1917 = vmatpush2.msra.mxu0 0.0
      %1918 = vmatprep.subr.mxu0 0.0
      %1919 = vmatpush2.msra.mxu0 0.0
      %1920 = vmatprep.subr.mxu0 0.0
      %1921 = vmatpush2.msra.mxu0 0.0
      %1922 = vmatprep.subr.mxu0 0.0
      %1923 = vmatpush2.msra.mxu0 0.0
      %1924 = vmatprep.subr.mxu0 0.0
      %1925 = vmatpush2.msra.mxu0 0.0
      %1926 = vmatprep.subr.mxu0 0.0
      %1927 = vmatpush2.msra.mxu0 0.0
      %1928 = vmatprep.subr.mxu0 0.0
      %1929 = vmatpush2.msra.mxu0 0.0
      %1930 = vmatprep.subr.mxu0 0.0
      %1931 = vmatpush2.msra.mxu0 0.0
      %1932 = vmatprep.subr.mxu0 0.0
      %1933 = vmatpush2.msra.mxu0 0.0
      %1934 = vmatprep.subr.mxu0 0.0
      %1935 = vmatpush2.msra.mxu0 0.0
      %1936 = vmatprep.subr.mxu0 0.0
      %1937 = vmatpush2.msra.mxu0 0.0
      %1938 = vmatprep.subr.mxu0 0.0
      %1939 = vmatpush2.msra.mxu0 0.0
      %1940 = vmatprep.subr.mxu0 0.0
      %1941 = vmatpush2.msra.mxu0 0.0
      %1942 = vmatprep.subr.mxu0 0.0
      %1943 = vmatpush2.msra.mxu0 0.0
      %1944 = vmatprep.mubr.f32.mxu0 0.0
      %1945 = vmatmul.mubr.f32.gmra.mxu0 %v1875
      %v1946 = vpop.f32.mrf.mxu0
      %v1947 = vadd.f32 %v1867, %v1946
      %v1948 = vpop.f32.mrf.mxu0
      %v1949 = vadd.f32 %v1867, %v1948
      %1950 = vmatprep.mubr.f32.mxu0 0.0
      %1951 = vmatmul.mubr.f32.gmra.mxu0 %v1878
      %v1952 = vpop.f32.mrf.mxu0
      %v1953 = vadd.f32 %v1872, %v1952
      %v1954 = vpop.f32.mrf.mxu0
      %v1955 = vadd.f32 %v1872, %v1954
      %1956 = vdwg.mxu0
      %v1957 = vmul.f32 %v1947, 0.5
      %v1958 = vmul.f32 %v1949, 0.5
      %v1959 = vmul.f32 %v1953, 0.5
      %v1960 = vmul.f32 %v1955, 0.5
      %v1961 = vmul.f32 %v1947, 0.70710677
      %v1962 = vmul.f32 %v1949, 0.70710677
      %v1963 = vmul.f32 %v1953, 0.70710677
      %v1964 = vmul.f32 %v1955, 0.70710677
      %v1965 = vand.u32 2147483647, %v1961
      %v1966 = vand.u32 2147483647, %v1962
      %v1967 = vand.u32 2147483647, %v1963
      %v1968 = vand.u32 2147483647, %v1964
      %v1969 = vmul.f32 %v1965, 0.3275911
      %v1970 = vmul.f32 %v1966, 0.3275911
      %v1971 = vmul.f32 %v1967, 0.3275911
      %v1972 = vmul.f32 %v1968, 0.3275911
      %v1973 = vadd.f32 %v1969, 1.0
      %v1974 = vadd.f32 %v1970, 1.0
      %v1975 = vadd.f32 %v1971, 1.0
      %v1976 = vadd.f32 %v1972, 1.0
      %v1977 = vrcp.pop %v1973
      %v1978 = vmul.f32 1.0, %v1977
      %v1979 = vrcp.pop %v1974
      %v1980 = vmul.f32 1.0, %v1979
      %v1981 = vrcp.pop %v1975
      %v1982 = vmul.f32 1.0, %v1981
      %v1983 = vrcp.pop %v1976
      %v1984 = vmul.f32 1.0, %v1983
      %v1985 = vmul.f32 %v1978, 1.0614054
      %v1986 = vmul.f32 %v1980, 1.0614054
      %v1987 = vmul.f32 %v1982, 1.0614054
      %v1988 = vmul.f32 %v1984, 1.0614054
      %v1989 = vsub.f32 %v1985, 1.4531521
      %v1990 = vsub.f32 %v1986, 1.4531521
      %v1991 = vsub.f32 %v1987, 1.4531521
      %v1992 = vsub.f32 %v1988, 1.4531521
      %v1993 = vmul.f32 %v1989, %v1978
      %v1994 = vmul.f32 %v1990, %v1980
      %v1995 = vmul.f32 %v1991, %v1982
      %v1996 = vmul.f32 %v1992, %v1984
      %v1997 = vadd.f32 %v1993, 1.4214138
      %v1998 = vadd.f32 %v1994, 1.4214138
      %v1999 = vadd.f32 %v1995, 1.4214138
      %v2000 = vadd.f32 %v1996, 1.4214138
      %v2001 = vmul.f32 %v1997, %v1978
      %v2002 = vmul.f32 %v1998, %v1980
      %v2003 = vmul.f32 %v1999, %v1982
      %v2004 = vmul.f32 %v2000, %v1984
      %v2005 = vsub.f32 %v2001, 0.28449672
      %v2006 = vsub.f32 %v2002, 0.28449672
      %v2007 = vsub.f32 %v2003, 0.28449672
      %v2008 = vsub.f32 %v2004, 0.28449672
      %v2009 = vmul.f32 %v2005, %v1978
      %v2010 = vmul.f32 %v2006, %v1980
      %v2011 = vmul.f32 %v2007, %v1982
      %v2012 = vmul.f32 %v2008, %v1984
      %v2013 = vadd.f32 %v2009, 0.2548296
      %v2014 = vadd.f32 %v2010, 0.2548296
      %v2015 = vadd.f32 %v2011, 0.2548296
      %v2016 = vadd.f32 %v2012, 0.2548296
      %v2017 = vmul.f32 %v2013, %v1978
      %v2018 = vmul.f32 %v2014, %v1980
      %v2019 = vmul.f32 %v2015, %v1982
      %v2020 = vmul.f32 %v2016, %v1984
      %v2021 = vsub.f32 0.0, %v1965
      %v2022 = vsub.f32 0.0, %v1966
      %v2023 = vsub.f32 0.0, %v1967
      %v2024 = vsub.f32 0.0, %v1968
      %v2025 = vmul.f32 %v2021, %v1965
      %v2026 = vmul.f32 %v2022, %v1966
      %v2027 = vmul.f32 %v2023, %v1967
      %v2028 = vmul.f32 %v2024, %v1968
      %v2029 = vmul.f32 %v2025, 1.442695
      %v2030 = vpow.pop %v2029
      %v2031 = vmul.f32 %v2026, 1.442695
      %v2032 = vpow.pop %v2031
      %v2033 = vmul.f32 %v2027, 1.442695
      %v2034 = vpow.pop %v2033
      %v2035 = vmul.f32 %v2028, 1.442695
      %v2036 = vpow.pop %v2035
      %v2037 = vmul.f32 %v2017, %v2030
      %v2038 = vmul.f32 %v2018, %v2032
      %v2039 = vmul.f32 %v2019, %v2034
      %v2040 = vmul.f32 %v2020, %v2036
      %v2041 = vsub.f32 1.0, %v2037
      %v2042 = vsub.f32 1.0, %v2038
      %v2043 = vsub.f32 1.0, %v2039
      %v2044 = vsub.f32 1.0, %v2040
      %vm2045 = vcmp.ge.f32.partialorder %v1961, 0.0
      %vm2046 = vcmp.ge.f32.partialorder %v1962, 0.0
      %vm2047 = vcmp.ge.f32.partialorder %v1963, 0.0
      %vm2048 = vcmp.ge.f32.partialorder %v1964, 0.0
      %v2049 = vsub.f32 0.0, %v2041
      %v2050 = vsub.f32 0.0, %v2042
      %v2051 = vsub.f32 0.0, %v2043
      %v2052 = vsub.f32 0.0, %v2044
      %v2053 = vsel %vm2045, %v2041, %v2049
      %v2054 = vsel %vm2046, %v2042, %v2050
      %v2055 = vsel %vm2047, %v2043, %v2051
      %v2056 = vsel %vm2048, %v2044, %v2052
      %v2057 = vadd.f32 %v2053, 1.0
      %v2058 = vadd.f32 %v2054, 1.0
      %v2059 = vadd.f32 %v2055, 1.0
      %v2060 = vadd.f32 %v2056, 1.0
      %v2061 = vmul.f32 %v1957, %v2057
      %v2062 = vmul.f32 %v1958, %v2058
      %v2063 = vmul.f32 %v1959, %v2059
      %v2064 = vmul.f32 %v1960, %v2060
      %s2065 = scalar_lea.vmem %s13, 512
      %v2066 = vld [vmem:[%s2065] sm:$0xff]
      %v2067 = vld [vmem:[%s2065 + $0x8] sm:$0xff]
      %v2068 = vld [vmem:[%s2065 + $0x10] sm:$0xff]
      %v2069 = vld [vmem:[%s2065 + $0x18] sm:$0xff]
      %v2070 = vld [vmem:[%s2065 + $0x20] sm:$0xff]
      %v2071 = vld [vmem:[%s2065 + $0x28] sm:$0xff]
      %v2072 = vld [vmem:[%s2065 + $0x30] sm:$0xff]
      %v2073 = vld [vmem:[%s2065 + $0x38] sm:$0xff]
      %v2074 = vld [vmem:[%s2065 + $0x40] sm:$0xff]
      %v2075 = vld [vmem:[%s2065 + $0x48] sm:$0xff]
      %v2076 = vld [vmem:[%s2065 + $0x50] sm:$0xff]
      %v2077 = vld [vmem:[%s2065 + $0x58] sm:$0xff]
      %v2078 = vld [vmem:[%s2065 + $0x60] sm:$0xff]
      %v2079 = vld [vmem:[%s2065 + $0x68] sm:$0xff]
      %v2080 = vld [vmem:[%s2065 + $0x70] sm:$0xff]
      %v2081 = vld [vmem:[%s2065 + $0x78] sm:$0xff]
      %v2082 = vld [vmem:[%s2065 + $0x80] sm:$0xff]
      %v2083 = vld [vmem:[%s2065 + $0x88] sm:$0xff]
      %v2084 = vld [vmem:[%s2065 + $0x90] sm:$0xff]
      %v2085 = vld [vmem:[%s2065 + $0x98] sm:$0xff]
      %v2086 = vld [vmem:[%s2065 + $0xa0] sm:$0xff]
      %v2087 = vld [vmem:[%s2065 + $0xa8] sm:$0xff]
      %v2088 = vld [vmem:[%s2065 + $0xb0] sm:$0xff]
      %v2089 = vld [vmem:[%s2065 + $0xb8] sm:$0xff]
      %v2090 = vld [vmem:[%s2065 + $0xc0] sm:$0xff]
      %v2091 = vld [vmem:[%s2065 + $0xc8] sm:$0xff]
      %v2092 = vld [vmem:[%s2065 + $0xd0] sm:$0xff]
      %v2093 = vld [vmem:[%s2065 + $0xd8] sm:$0xff]
      %v2094 = vld [vmem:[%s2065 + $0xe0] sm:$0xff]
      %v2095 = vld [vmem:[%s2065 + $0xe8] sm:$0xff]
      %v2096 = vld [vmem:[%s2065 + $0xf0] sm:$0xff]
      %v2097 = vld [vmem:[%s2065 + $0xf8] sm:$0xff]
      %v2098 = vld [vmem:[%s2065 + $0x100] sm:$0xff]
      %v2099 = vld [vmem:[%s2065 + $0x108] sm:$0xff]
      %v2100 = vld [vmem:[%s2065 + $0x110] sm:$0xff]
      %v2101 = vld [vmem:[%s2065 + $0x118] sm:$0xff]
      %v2102 = vld [vmem:[%s2065 + $0x120] sm:$0xff]
      %v2103 = vld [vmem:[%s2065 + $0x128] sm:$0xff]
      %v2104 = vld [vmem:[%s2065 + $0x130] sm:$0xff]
      %v2105 = vld [vmem:[%s2065 + $0x138] sm:$0xff]
      %v2106 = vld [vmem:[%s2065 + $0x140] sm:$0xff]
      %v2107 = vld [vmem:[%s2065 + $0x148] sm:$0xff]
      %v2108 = vld [vmem:[%s2065 + $0x150] sm:$0xff]
      %v2109 = vld [vmem:[%s2065 + $0x158] sm:$0xff]
      %v2110 = vld [vmem:[%s2065 + $0x160] sm:$0xff]
      %v2111 = vld [vmem:[%s2065 + $0x168] sm:$0xff]
      %v2112 = vld [vmem:[%s2065 + $0x170] sm:$0xff]
      %v2113 = vld [vmem:[%s2065 + $0x178] sm:$0xff]
      %v2114 = vld [vmem:[%s2065 + $0x180] sm:$0xff]
      %v2115 = vld [vmem:[%s2065 + $0x188] sm:$0xff]
      %v2116 = vld [vmem:[%s2065 + $0x190] sm:$0xff]
      %v2117 = vld [vmem:[%s2065 + $0x198] sm:$0xff]
      %v2118 = vld [vmem:[%s2065 + $0x1a0] sm:$0xff]
      %v2119 = vld [vmem:[%s2065 + $0x1a8] sm:$0xff]
      %v2120 = vld [vmem:[%s2065 + $0x1b0] sm:$0xff]
      %v2121 = vld [vmem:[%s2065 + $0x1b8] sm:$0xff]
      %v2122 = vld [vmem:[%s2065 + $0x1c0] sm:$0xff]
      %v2123 = vld [vmem:[%s2065 + $0x1c8] sm:$0xff]
      %v2124 = vld [vmem:[%s2065 + $0x1d0] sm:$0xff]
      %v2125 = vld [vmem:[%s2065 + $0x1d8] sm:$0xff]
      %v2126 = vld [vmem:[%s2065 + $0x1e0] sm:$0xff]
      %v2127 = vld [vmem:[%s2065 + $0x1e8] sm:$0xff]
      %v2128 = vld [vmem:[%s2065 + $0x1f0] sm:$0xff]
      %v2129 = vld [vmem:[%s2065 + $0x1f8] sm:$0xff]
      %s2130 = scalar_lea.vmem %s15, 2
      %v2131 = vld [vmem:[%s2130] sm:$0x3]
      %v2133 = vlaneseq
      %v2134 = vshrl.u32 %v2133, 7
      %v2135 = vsub.s32 0, %v2134
      %v2136 = vrot.slane %v2131, %v2135
      %v2137 = vlaneseq
      %v2138 = vshrl.u32 %v2137, 7
      %v2139 = vsub.s32 1, %v2138
      %v2140 = vrot.slane %v2131, %v2139
      %2143 = vmatprep.subr.mxu0 %v2097
      %2144 = vmatpush1.msra.mxu0 %v2096
      %2145 = vmatprep.subr.mxu0 %v2095
      %2146 = vmatpush1.msra.mxu0 %v2094
      %2147 = vmatprep.subr.mxu0 %v2093
      %2148 = vmatpush1.msra.mxu0 %v2092
      %2149 = vmatprep.subr.mxu0 %v2091
      %2150 = vmatpush1.msra.mxu0 %v2090
      %2151 = vmatprep.subr.mxu0 %v2089
      %2152 = vmatpush1.msra.mxu0 %v2088
      %2153 = vmatprep.subr.mxu0 %v2087
      %2154 = vmatpush1.msra.mxu0 %v2086
      %2155 = vmatprep.subr.mxu0 %v2085
      %2156 = vmatpush1.msra.mxu0 %v2084
      %2157 = vmatprep.subr.mxu0 %v2083
      %2158 = vmatpush1.msra.mxu0 %v2082
      %2159 = vmatprep.subr.mxu0 %v2081
      %2160 = vmatpush1.msra.mxu0 %v2080
      %2161 = vmatprep.subr.mxu0 %v2079
      %2162 = vmatpush1.msra.mxu0 %v2078
      %2163 = vmatprep.subr.mxu0 %v2077
      %2164 = vmatpush1.msra.mxu0 %v2076
      %2165 = vmatprep.subr.mxu0 %v2075
      %2166 = vmatpush1.msra.mxu0 %v2074
      %2167 = vmatprep.subr.mxu0 %v2073
      %2168 = vmatpush1.msra.mxu0 %v2072
      %2169 = vmatprep.subr.mxu0 %v2071
      %2170 = vmatpush1.msra.mxu0 %v2070
      %2171 = vmatprep.subr.mxu0 %v2069
      %2172 = vmatpush1.msra.mxu0 %v2068
      %2173 = vmatprep.subr.mxu0 %v2067
      %2174 = vmatpush1.msra.mxu0 %v2066
      %2175 = vmatprep.subr.mxu0 %v2129
      %2176 = vmatpush2.msra.mxu0 %v2128
      %2177 = vmatprep.subr.mxu0 %v2127
      %2178 = vmatpush2.msra.mxu0 %v2126
      %2179 = vmatprep.subr.mxu0 %v2125
      %2180 = vmatpush2.msra.mxu0 %v2124
      %2181 = vmatprep.subr.mxu0 %v2123
      %2182 = vmatpush2.msra.mxu0 %v2122
      %2183 = vmatprep.subr.mxu0 %v2121
      %2184 = vmatpush2.msra.mxu0 %v2120
      %2185 = vmatprep.subr.mxu0 %v2119
      %2186 = vmatpush2.msra.mxu0 %v2118
      %2187 = vmatprep.subr.mxu0 %v2117
      %2188 = vmatpush2.msra.mxu0 %v2116
      %2189 = vmatprep.subr.mxu0 %v2115
      %2190 = vmatpush2.msra.mxu0 %v2114
      %2191 = vmatprep.subr.mxu0 %v2113
      %2192 = vmatpush2.msra.mxu0 %v2112
      %2193 = vmatprep.subr.mxu0 %v2111
      %2194 = vmatpush2.msra.mxu0 %v2110
      %2195 = vmatprep.subr.mxu0 %v2109
      %2196 = vmatpush2.msra.mxu0 %v2108
      %2197 = vmatprep.subr.mxu0 %v2107
      %2198 = vmatpush2.msra.mxu0 %v2106
      %2199 = vmatprep.subr.mxu0 %v2105
      %2200 = vmatpush2.msra.mxu0 %v2104
      %2201 = vmatprep.subr.mxu0 %v2103
      %2202 = vmatpush2.msra.mxu0 %v2102
      %2203 = vmatprep.subr.mxu0 %v2101
      %2204 = vmatpush2.msra.mxu0 %v2100
      %2205 = vmatprep.subr.mxu0 %v2099
      %2206 = vmatpush2.msra.mxu0 %v2098
      %2207 = vmatprep.mubr.f32.mxu0 %v2062
      %2208 = vmatmul.mubr.f32.gmra.mxu0 %v2061
      %v2209 = vpop.f32.mrf.mxu0
      %v2210 = vadd.f32 %v2136, %v2209
      %v2211 = vpop.f32.mrf.mxu0
      %v2212 = vadd.f32 %v2140, %v2211
      %2213 = vdwg.mxu0
      %s2214 = scalar_lea.vmem %s14, 512
      %v2215 = vld [vmem:[%s2214] sm:$0xff]
      %v2216 = vld [vmem:[%s2214 + $0x8] sm:$0xff]
      %v2217 = vld [vmem:[%s2214 + $0x10] sm:$0xff]
      %v2218 = vld [vmem:[%s2214 + $0x18] sm:$0xff]
      %v2219 = vld [vmem:[%s2214 + $0x20] sm:$0xff]
      %v2220 = vld [vmem:[%s2214 + $0x28] sm:$0xff]
      %v2221 = vld [vmem:[%s2214 + $0x30] sm:$0xff]
      %v2222 = vld [vmem:[%s2214 + $0x38] sm:$0xff]
      %v2223 = vld [vmem:[%s2214 + $0x40] sm:$0xff]
      %v2224 = vld [vmem:[%s2214 + $0x48] sm:$0xff]
      %v2225 = vld [vmem:[%s2214 + $0x50] sm:$0xff]
      %v2226 = vld [vmem:[%s2214 + $0x58] sm:$0xff]
      %v2227 = vld [vmem:[%s2214 + $0x60] sm:$0xff]
      %v2228 = vld [vmem:[%s2214 + $0x68] sm:$0xff]
      %v2229 = vld [vmem:[%s2214 + $0x70] sm:$0xff]
      %v2230 = vld [vmem:[%s2214 + $0x78] sm:$0xff]
      %v2231 = vld [vmem:[%s2214 + $0x80] sm:$0xff]
      %v2232 = vld [vmem:[%s2214 + $0x88] sm:$0xff]
      %v2233 = vld [vmem:[%s2214 + $0x90] sm:$0xff]
      %v2234 = vld [vmem:[%s2214 + $0x98] sm:$0xff]
      %v2235 = vld [vmem:[%s2214 + $0xa0] sm:$0xff]
      %v2236 = vld [vmem:[%s2214 + $0xa8] sm:$0xff]
      %v2237 = vld [vmem:[%s2214 + $0xb0] sm:$0xff]
      %v2238 = vld [vmem:[%s2214 + $0xb8] sm:$0xff]
      %v2239 = vld [vmem:[%s2214 + $0xc0] sm:$0xff]
      %v2240 = vld [vmem:[%s2214 + $0xc8] sm:$0xff]
      %v2241 = vld [vmem:[%s2214 + $0xd0] sm:$0xff]
      %v2242 = vld [vmem:[%s2214 + $0xd8] sm:$0xff]
      %v2243 = vld [vmem:[%s2214 + $0xe0] sm:$0xff]
      %v2244 = vld [vmem:[%s2214 + $0xe8] sm:$0xff]
      %v2245 = vld [vmem:[%s2214 + $0xf0] sm:$0xff]
      %v2246 = vld [vmem:[%s2214 + $0xf8] sm:$0xff]
      %v2247 = vld [vmem:[%s2214 + $0x100] sm:$0xff]
      %v2248 = vld [vmem:[%s2214 + $0x108] sm:$0xff]
      %v2249 = vld [vmem:[%s2214 + $0x110] sm:$0xff]
      %v2250 = vld [vmem:[%s2214 + $0x118] sm:$0xff]
      %v2251 = vld [vmem:[%s2214 + $0x120] sm:$0xff]
      %v2252 = vld [vmem:[%s2214 + $0x128] sm:$0xff]
      %v2253 = vld [vmem:[%s2214 + $0x130] sm:$0xff]
      %v2254 = vld [vmem:[%s2214 + $0x138] sm:$0xff]
      %v2255 = vld [vmem:[%s2214 + $0x140] sm:$0xff]
      %v2256 = vld [vmem:[%s2214 + $0x148] sm:$0xff]
      %v2257 = vld [vmem:[%s2214 + $0x150] sm:$0xff]
      %v2258 = vld [vmem:[%s2214 + $0x158] sm:$0xff]
      %v2259 = vld [vmem:[%s2214 + $0x160] sm:$0xff]
      %v2260 = vld [vmem:[%s2214 + $0x168] sm:$0xff]
      %v2261 = vld [vmem:[%s2214 + $0x170] sm:$0xff]
      %v2262 = vld [vmem:[%s2214 + $0x178] sm:$0xff]
      %v2263 = vld [vmem:[%s2214 + $0x180] sm:$0xff]
      %v2264 = vld [vmem:[%s2214 + $0x188] sm:$0xff]
      %v2265 = vld [vmem:[%s2214 + $0x190] sm:$0xff]
      %v2266 = vld [vmem:[%s2214 + $0x198] sm:$0xff]
      %v2267 = vld [vmem:[%s2214 + $0x1a0] sm:$0xff]
      %v2268 = vld [vmem:[%s2214 + $0x1a8] sm:$0xff]
      %v2269 = vld [vmem:[%s2214 + $0x1b0] sm:$0xff]
      %v2270 = vld [vmem:[%s2214 + $0x1b8] sm:$0xff]
      %v2271 = vld [vmem:[%s2214 + $0x1c0] sm:$0xff]
      %v2272 = vld [vmem:[%s2214 + $0x1c8] sm:$0xff]
      %v2273 = vld [vmem:[%s2214 + $0x1d0] sm:$0xff]
      %v2274 = vld [vmem:[%s2214 + $0x1d8] sm:$0xff]
      %v2275 = vld [vmem:[%s2214 + $0x1e0] sm:$0xff]
      %v2276 = vld [vmem:[%s2214 + $0x1e8] sm:$0xff]
      %v2277 = vld [vmem:[%s2214 + $0x1f0] sm:$0xff]
      %v2278 = vld [vmem:[%s2214 + $0x1f8] sm:$0xff]
      %s2279 = scalar_lea.vmem %s16, 2
      %v2280 = vld [vmem:[%s2279] sm:$0x3]
      %v2282 = vlaneseq
      %v2283 = vshrl.u32 %v2282, 7
      %v2284 = vsub.s32 0, %v2283
      %v2285 = vrot.slane %v2280, %v2284
      %v2286 = vlaneseq
      %v2287 = vshrl.u32 %v2286, 7
      %v2288 = vsub.s32 1, %v2287
      %v2289 = vrot.slane %v2280, %v2288
      %2292 = vmatprep.subr.mxu0 %v2246
      %2293 = vmatpush1.msra.mxu0 %v2245
      %2294 = vmatprep.subr.mxu0 %v2244
      %2295 = vmatpush1.msra.mxu0 %v2243
      %2296 = vmatprep.subr.mxu0 %v2242
      %2297 = vmatpush1.msra.mxu0 %v2241
      %2298 = vmatprep.subr.mxu0 %v2240
      %2299 = vmatpush1.msra.mxu0 %v2239
      %2300 = vmatprep.subr.mxu0 %v2238
      %2301 = vmatpush1.msra.mxu0 %v2237
      %2302 = vmatprep.subr.mxu0 %v2236
      %2303 = vmatpush1.msra.mxu0 %v2235
      %2304 = vmatprep.subr.mxu0 %v2234
      %2305 = vmatpush1.msra.mxu0 %v2233
      %2306 = vmatprep.subr.mxu0 %v2232
      %2307 = vmatpush1.msra.mxu0 %v2231
      %2308 = vmatprep.subr.mxu0 %v2230
      %2309 = vmatpush1.msra.mxu0 %v2229
      %2310 = vmatprep.subr.mxu0 %v2228
      %2311 = vmatpush1.msra.mxu0 %v2227
      %2312 = vmatprep.subr.mxu0 %v2226
      %2313 = vmatpush1.msra.mxu0 %v2225
      %2314 = vmatprep.subr.mxu0 %v2224
      %2315 = vmatpush1.msra.mxu0 %v2223
      %2316 = vmatprep.subr.mxu0 %v2222
      %2317 = vmatpush1.msra.mxu0 %v2221
      %2318 = vmatprep.subr.mxu0 %v2220
      %2319 = vmatpush1.msra.mxu0 %v2219
      %2320 = vmatprep.subr.mxu0 %v2218
      %2321 = vmatpush1.msra.mxu0 %v2217
      %2322 = vmatprep.subr.mxu0 %v2216
      %2323 = vmatpush1.msra.mxu0 %v2215
      %2324 = vmatprep.subr.mxu0 %v2278
      %2325 = vmatpush2.msra.mxu0 %v2277
      %2326 = vmatprep.subr.mxu0 %v2276
      %2327 = vmatpush2.msra.mxu0 %v2275
      %2328 = vmatprep.subr.mxu0 %v2274
      %2329 = vmatpush2.msra.mxu0 %v2273
      %2330 = vmatprep.subr.mxu0 %v2272
      %2331 = vmatpush2.msra.mxu0 %v2271
      %2332 = vmatprep.subr.mxu0 %v2270
      %2333 = vmatpush2.msra.mxu0 %v2269
      %2334 = vmatprep.subr.mxu0 %v2268
      %2335 = vmatpush2.msra.mxu0 %v2267
      %2336 = vmatprep.subr.mxu0 %v2266
      %2337 = vmatpush2.msra.mxu0 %v2265
      %2338 = vmatprep.subr.mxu0 %v2264
      %2339 = vmatpush2.msra.mxu0 %v2263
      %2340 = vmatprep.subr.mxu0 %v2262
      %2341 = vmatpush2.msra.mxu0 %v2261
      %2342 = vmatprep.subr.mxu0 %v2260
      %2343 = vmatpush2.msra.mxu0 %v2259
      %2344 = vmatprep.subr.mxu0 %v2258
      %2345 = vmatpush2.msra.mxu0 %v2257
      %2346 = vmatprep.subr.mxu0 %v2256
      %2347 = vmatpush2.msra.mxu0 %v2255
      %2348 = vmatprep.subr.mxu0 %v2254
      %2349 = vmatpush2.msra.mxu0 %v2253
      %2350 = vmatprep.subr.mxu0 %v2252
      %2351 = vmatpush2.msra.mxu0 %v2251
      %2352 = vmatprep.subr.mxu0 %v2250
      %2353 = vmatpush2.msra.mxu0 %v2249
      %2354 = vmatprep.subr.mxu0 %v2248
      %2355 = vmatpush2.msra.mxu0 %v2247
      %2356 = vmatprep.mubr.f32.mxu0 %v2064
      %2357 = vmatmul.mubr.f32.gmra.mxu0 %v2063
      %v2358 = vpop.f32.mrf.mxu0
      %v2359 = vadd.f32 %v2285, %v2358
      %v2360 = vpop.f32.mrf.mxu0
      %v2361 = vadd.f32 %v2289, %v2360
      %2362 = vdwg.mxu0
      %s2363 = scalar_lea.vmem %s17, 8
      %v2364 = vld [vmem:[%s2363] sm:$0xff]
      %s2365 = scalar_lea.vmem %s18, 8
      %v2366 = vld [vmem:[%s2365] sm:$0xff]
      %v2368 = vsel %vm811, %v2366, 0
      %2370 = vmatprep.subr.mxu0 0.0
      %2371 = vmatpush1.msra.mxu0 0.0
      %2372 = vmatprep.subr.mxu0 0.0
      %2373 = vmatpush1.msra.mxu0 0.0
      %2374 = vmatprep.subr.mxu0 0.0
      %2375 = vmatpush1.msra.mxu0 0.0
      %2376 = vmatprep.subr.mxu0 0.0
      %2377 = vmatpush1.msra.mxu0 0.0
      %2378 = vmatprep.subr.mxu0 0.0
      %2379 = vmatpush1.msra.mxu0 0.0
      %2380 = vmatprep.subr.mxu0 0.0
      %2381 = vmatpush1.msra.mxu0 0.0
      %2382 = vmatprep.subr.mxu0 0.0
      %2383 = vmatpush1.msra.mxu0 0.0
      %2384 = vmatprep.subr.mxu0 0.0
      %2385 = vmatpush1.msra.mxu0 0.0
      %2386 = vmatprep.subr.mxu0 0.0
      %2387 = vmatpush1.msra.mxu0 0.0
      %2388 = vmatprep.subr.mxu0 0.0
      %2389 = vmatpush1.msra.mxu0 0.0
      %2390 = vmatprep.subr.mxu0 0.0
      %2391 = vmatpush1.msra.mxu0 0.0
      %2392 = vmatprep.subr.mxu0 0.0
      %2393 = vmatpush1.msra.mxu0 0.0
      %2394 = vmatprep.subr.mxu0 0.0
      %2395 = vmatpush1.msra.mxu0 0.0
      %2396 = vmatprep.subr.mxu0 0.0
      %2397 = vmatpush1.msra.mxu0 0.0
      %2398 = vmatprep.subr.mxu0 0.0
      %2399 = vmatpush1.msra.mxu0 0.0
      %2400 = vmatprep.subr.mxu0 %v2361
      %2401 = vmatpush1.msra.mxu0 %v2359
      %2402 = vmatprep.subr.mxu0 0.0
      %2403 = vmatpush2.msra.mxu0 0.0
      %2404 = vmatprep.subr.mxu0 0.0
      %2405 = vmatpush2.msra.mxu0 0.0
      %2406 = vmatprep.subr.mxu0 0.0
      %2407 = vmatpush2.msra.mxu0 0.0
      %2408 = vmatprep.subr.mxu0 0.0
      %2409 = vmatpush2.msra.mxu0 0.0
      %2410 = vmatprep.subr.mxu0 0.0
      %2411 = vmatpush2.msra.mxu0 0.0
      %2412 = vmatprep.subr.mxu0 0.0
      %2413 = vmatpush2.msra.mxu0 0.0
      %2414 = vmatprep.subr.mxu0 0.0
      %2415 = vmatpush2.msra.mxu0 0.0
      %2416 = vmatprep.subr.mxu0 0.0
      %2417 = vmatpush2.msra.mxu0 0.0
      %2418 = vmatprep.subr.mxu0 0.0
      %2419 = vmatpush2.msra.mxu0 0.0
      %2420 = vmatprep.subr.mxu0 0.0
      %2421 = vmatpush2.msra.mxu0 0.0
      %2422 = vmatprep.subr.mxu0 0.0
      %2423 = vmatpush2.msra.mxu0 0.0
      %2424 = vmatprep.subr.mxu0 0.0
      %2425 = vmatpush2.msra.mxu0 0.0
      %2426 = vmatprep.subr.mxu0 0.0
      %2427 = vmatpush2.msra.mxu0 0.0
      %2428 = vmatprep.subr.mxu0 0.0
      %2429 = vmatpush2.msra.mxu0 0.0
      %2430 = vmatprep.subr.mxu0 0.0
      %2431 = vmatpush2.msra.mxu0 0.0
      %2432 = vmatprep.subr.mxu0 0.0
      %2433 = vmatpush2.msra.mxu0 0.0
      %2434 = vmatprep.mubr.f32.mxu0 0.0
      %2435 = vmatmul.mubr.f32.gmra.mxu0 %v2368
      %v2436 = vpop.f32.mrf.mxu0
      %v2437 = vadd.f32 0.0, %v2436
      %v2438 = vpop.f32.mrf.mxu0
      %v2439 = vadd.f32 0.0, %v2438
      %2440 = vdwg.mxu0
      %v2442 = vsel %vm811, %v2364, 0
      %2444 = vmatprep.subr.mxu0 0.0
      %2445 = vmatpush1.msra.mxu0 0.0
      %2446 = vmatprep.subr.mxu0 0.0
      %2447 = vmatpush1.msra.mxu0 0.0
      %2448 = vmatprep.subr.mxu0 0.0
      %2449 = vmatpush1.msra.mxu0 0.0
      %2450 = vmatprep.subr.mxu0 0.0
      %2451 = vmatpush1.msra.mxu0 0.0
      %2452 = vmatprep.subr.mxu0 0.0
      %2453 = vmatpush1.msra.mxu0 0.0
      %2454 = vmatprep.subr.mxu0 0.0
      %2455 = vmatpush1.msra.mxu0 0.0
      %2456 = vmatprep.subr.mxu0 0.0
      %2457 = vmatpush1.msra.mxu0 0.0
      %2458 = vmatprep.subr.mxu0 0.0
      %2459 = vmatpush1.msra.mxu0 0.0
      %2460 = vmatprep.subr.mxu0 0.0
      %2461 = vmatpush1.msra.mxu0 0.0
      %2462 = vmatprep.subr.mxu0 0.0
      %2463 = vmatpush1.msra.mxu0 0.0
      %2464 = vmatprep.subr.mxu0 0.0
      %2465 = vmatpush1.msra.mxu0 0.0
      %2466 = vmatprep.subr.mxu0 0.0
      %2467 = vmatpush1.msra.mxu0 0.0
      %2468 = vmatprep.subr.mxu0 0.0
      %2469 = vmatpush1.msra.mxu0 0.0
      %2470 = vmatprep.subr.mxu0 0.0
      %2471 = vmatpush1.msra.mxu0 0.0
      %2472 = vmatprep.subr.mxu0 0.0
      %2473 = vmatpush1.msra.mxu0 0.0
      %2474 = vmatprep.subr.mxu0 %v2212
      %2475 = vmatpush1.msra.mxu0 %v2210
      %2476 = vmatprep.subr.mxu0 0.0
      %2477 = vmatpush2.msra.mxu0 0.0
      %2478 = vmatprep.subr.mxu0 0.0
      %2479 = vmatpush2.msra.mxu0 0.0
      %2480 = vmatprep.subr.mxu0 0.0
      %2481 = vmatpush2.msra.mxu0 0.0
      %2482 = vmatprep.subr.mxu0 0.0
      %2483 = vmatpush2.msra.mxu0 0.0
      %2484 = vmatprep.subr.mxu0 0.0
      %2485 = vmatpush2.msra.mxu0 0.0
      %2486 = vmatprep.subr.mxu0 0.0
      %2487 = vmatpush2.msra.mxu0 0.0
      %2488 = vmatprep.subr.mxu0 0.0
      %2489 = vmatpush2.msra.mxu0 0.0
      %2490 = vmatprep.subr.mxu0 0.0
      %2491 = vmatpush2.msra.mxu0 0.0
      %2492 = vmatprep.subr.mxu0 0.0
      %2493 = vmatpush2.msra.mxu0 0.0
      %2494 = vmatprep.subr.mxu0 0.0
      %2495 = vmatpush2.msra.mxu0 0.0
      %2496 = vmatprep.subr.mxu0 0.0
      %2497 = vmatpush2.msra.mxu0 0.0
      %2498 = vmatprep.subr.mxu0 0.0
      %2499 = vmatpush2.msra.mxu0 0.0
      %2500 = vmatprep.subr.mxu0 0.0
      %2501 = vmatpush2.msra.mxu0 0.0
      %2502 = vmatprep.subr.mxu0 0.0
      %2503 = vmatpush2.msra.mxu0 0.0
      %2504 = vmatprep.subr.mxu0 0.0
      %2505 = vmatpush2.msra.mxu0 0.0
      %2506 = vmatprep.subr.mxu0 0.0
      %2507 = vmatpush2.msra.mxu0 0.0
      %2508 = vmatprep.mubr.f32.mxu0 0.0
      %2509 = vmatmul.mubr.f32.gmra.mxu0 %v2442
      %v2510 = vpop.f32.mrf.mxu0
      %v2511 = vadd.f32 %v2437, %v2510
      %v2512 = vpop.f32.mrf.mxu0
      %v2513 = vadd.f32 %v2439, %v2512
      %2514 = vdwg.mxu0
      %s2515 = scalar_lea.vmem %s19, 8
      %v2516 = vld [vmem:[%s2515] sm:$0xff]
      %2518 = vset.pattern.permute.xlu0 0
      %2519 = vperm.xlu0 %2518, %v2516
      %v2520 = vpop.permute.xlu0 %2519
      %v2522 = vadd.f32 %v2511, %v2520
      %v2523 = vadd.f32 %v2513, %v2520
      %v2524 = vmul.f32 %v938, %v2522
      %v2525 = vmul.f32 %v939, %v2523
      %v2526 = vmul.f32 %v1105, %v1808
      %v2527 = vmul.f32 %v1106, %v1809
      %v2528 = vadd.f32 %v2524, %v2526
      %v2529 = vadd.f32 %v2525, %v2527
      %v2530 = vmul.f32 %v651, 2.0
      %2532 = vset.pattern.permute.xlu0 0
      %2533 = vperm.xlu0 %2532, %v2530
      %v2534 = vpop.permute.xlu0 %2533
      %2536 = vmatprep.subr.mxu0 0.0
      %2537 = vmatpush1.msra.mxu0 0.0
      %2538 = vmatprep.subr.mxu0 0.0
      %2539 = vmatpush1.msra.mxu0 0.0
      %2540 = vmatprep.subr.mxu0 0.0
      %2541 = vmatpush1.msra.mxu0 0.0
      %2542 = vmatprep.subr.mxu0 0.0
      %2543 = vmatpush1.msra.mxu0 0.0
      %2544 = vmatprep.subr.mxu0 0.0
      %2545 = vmatpush1.msra.mxu0 0.0
      %2546 = vmatprep.subr.mxu0 0.0
      %2547 = vmatpush1.msra.mxu0 0.0
      %2548 = vmatprep.subr.mxu0 0.0
      %2549 = vmatpush1.msra.mxu0 0.0
      %2550 = vmatprep.subr.mxu0 0.0
      %2551 = vmatpush1.msra.mxu0 0.0
      %2552 = vmatprep.subr.mxu0 0.0
      %2553 = vmatpush1.msra.mxu0 0.0
      %2554 = vmatprep.subr.mxu0 0.0
      %2555 = vmatpush1.msra.mxu0 0.0
      %2556 = vmatprep.subr.mxu0 0.0
      %2557 = vmatpush1.msra.mxu0 0.0
      %2558 = vmatprep.subr.mxu0 0.0
      %2559 = vmatpush1.msra.mxu0 0.0
      %2560 = vmatprep.subr.mxu0 0.0
      %2561 = vmatpush1.msra.mxu0 0.0
      %2562 = vmatprep.subr.mxu0 0.0
      %2563 = vmatpush1.msra.mxu0 0.0
      %2564 = vmatprep.subr.mxu0 0.0
      %2565 = vmatpush1.msra.mxu0 0.0
      %2566 = vmatprep.subr.mxu0 %v2529
      %2567 = vmatpush1.msra.mxu0 %v2528
      %2568 = vmatprep.subr.mxu0 0.0
      %2569 = vmatpush2.msra.mxu0 0.0
      %2570 = vmatprep.subr.mxu0 0.0
      %2571 = vmatpush2.msra.mxu0 0.0
      %2572 = vmatprep.subr.mxu0 0.0
      %2573 = vmatpush2.msra.mxu0 0.0
      %2574 = vmatprep.subr.mxu0 0.0
      %2575 = vmatpush2.msra.mxu0 0.0
      %2576 = vmatprep.subr.mxu0 0.0
      %2577 = vmatpush2.msra.mxu0 0.0
      %2578 = vmatprep.subr.mxu0 0.0
      %2579 = vmatpush2.msra.mxu0 0.0
      %2580 = vmatprep.subr.mxu0 0.0
      %2581 = vmatpush2.msra.mxu0 0.0
      %2582 = vmatprep.subr.mxu0 0.0
      %2583 = vmatpush2.msra.mxu0 0.0
      %2584 = vmatprep.subr.mxu0 0.0
      %2585 = vmatpush2.msra.mxu0 0.0
      %2586 = vmatprep.subr.mxu0 0.0
      %2587 = vmatpush2.msra.mxu0 0.0
      %2588 = vmatprep.subr.mxu0 0.0
      %2589 = vmatpush2.msra.mxu0 0.0
      %2590 = vmatprep.subr.mxu0 0.0
      %2591 = vmatpush2.msra.mxu0 0.0
      %2592 = vmatprep.subr.mxu0 0.0
      %2593 = vmatpush2.msra.mxu0 0.0
      %2594 = vmatprep.subr.mxu0 0.0
      %2595 = vmatpush2.msra.mxu0 0.0
      %2596 = vmatprep.subr.mxu0 0.0
      %2597 = vmatpush2.msra.mxu0 0.0
      %2598 = vmatprep.subr.mxu0 0.0
      %2599 = vmatpush2.msra.mxu0 0.0
      %2600 = vmatprep.mubr.f32.mxu0 0.0
      %2601 = vmatmul.mubr.f32.gmra.mxu0 %v813
      %v2602 = vpop.f32.mrf.mxu0
      %v2603 = vadd.f32 %v2534, %v2602
      %v2604 = vpop.f32.mrf.mxu0
      %v2605 = vadd.f32 %v2534, %v2604
      %2606 = vdwg.mxu0
      %v2607 = vadd.f32 %v2603, %v762
      %v2608 = vadd.f32 %v2605, %v763
      %v2609 = vadd.f32 %v2607, %v760
      %v2610 = vadd.f32 %v2608, %v761
      %2611 = vst [vmem:[%s649] sm:$0xff] %v2609
      %2612 = vst [vmem:[%s649 + $0x8] sm:$0xff] %v2610
      %p2613 = scmp.lt.s32.totalorder %s31, 1
      %s2614 = scalar_select %p2613, %s31, 1
      %s2615 = smul.addr %s2614, 2
      %s2616 = smul.addr %s2615, 8
      %s2617 = scalar_lea.vmem %s20, %s2616
      // Predicated region
      $region101: #{cgb_forward.3} parent=99 // pred_check
        %p2618 = pneg %p479
      $region102: #{cgb_forward.3} parent=99 // pred_check_branch
        %2620 = sbr.rel (%p2618) target = $region104
      $region103: #{cgb_forward.3} parent=99 // pred_region
        _
      $region104: #{cgb_forward.3} parent=99 // pred_fallthru
        _
    $region100: #{cgb_forward.3} parent=5 // pred_fallthru
      _
    %p2621 = scmp.le.s32.totalorder 2, %s26
    // Predicated region
    $region105: #{cgb_forward.3} parent=5 // pred_check
      %p2622 = pneg %p2621
    $region106: #{cgb_forward.3} parent=5 // pred_check_branch
      %2624 = sbr.rel (%p2622) target = $region108
    $region107: #{cgb_forward.3} parent=5 // pred_region
      %s2625 = ssub.s32 %s26, 2
      // Predicated region
      $region109: #{cgb_forward.3} parent=107 // pred_check
        %p2626 = pneg %p485
      $region110: #{cgb_forward.3} parent=107 // pred_check_branch
        %2628 = sbr.rel (%p2626) target = $region112
      $region111: #{cgb_forward.3} parent=107 // pred_region
        %p2629 = scmp.lt.s32.totalorder %s32, 1
        %s2630 = scalar_select %p2629, %s32, 1
        %s2631 = smul.addr %s2630, 2
        %s2632 = smul.addr %s2631, 8
        %s2633 = scalar_lea.vmem %s20, %s2632
      $region112: #{cgb_forward.3} parent=107 // pred_fallthru
        _
    $region108: #{cgb_forward.3} parent=5 // pred_fallthru
      _
  $region6: #{cgb_forward.3} parent=0 // loop_footer
    %s30 = sadd.s32 1, %s26
  $region7: #{cgb_forward.3} parent=0 // loop_footer_branch
    %25 = sbr.rel target = $region3
  $region8: #{cgb_forward.3} parent=0 // loop_exit
    _

</llo_original>
